<compile_context>
chip_gen: v7x
topology: tpu7x:2x2x1
jax: 0.10.0
libtpu: 0.0.40
codegen_flags: <defaults>
</compile_context>

<pallas_src>
import functools

import jax
import jax.numpy as jnp
from jax.experimental import pallas as pl
from jax.experimental.pallas import tpu as pltpu


def _mha_kernel(*refs, n_heads, d_k, n_x, block_b, seq_len, hidden, compute_dtype):
    x_refs = refs[:n_x]
    (wqkv_ref, bqkv_ref, wo_ref, bo_ref,   # inputs (weights pre-packed host-side)
     o_ref,                                # output
     qkv_scr, heads_scr) = refs[n_x:]      # VMEM scratch

    H = hidden
    M = block_b * seq_len

    w_qkv = wqkv_ref[...]          # (H, 3H) compute_dtype; Wq pre-scaled by 1/sqrt(d_k)
    b_qkv = bqkv_ref[...]          # (1, 3H) f32; bq pre-scaled by 1/sqrt(d_k)

    if n_x == 1:
        # Self-attention fast path: one fused (M,H) @ (H,3H) MXU launch.
        x2 = x_refs[0][...].reshape(M, H)
        qkv = jnp.dot(x2, w_qkv, preferred_element_type=jnp.float32) + b_qkv
        qkv_scr[...] = qkv.astype(compute_dtype)
    else:
        # Distinct query/key/value: three un-transposed dots against the packed weight.
        xq = x_refs[0][...].reshape(M, H)
        xk = x_refs[1][...].reshape(M, H)
        xv = x_refs[2][...].reshape(M, H)
        q = jnp.dot(xq, w_qkv[:, :H], preferred_element_type=jnp.float32) + b_qkv[:, :H]
        k = jnp.dot(xk, w_qkv[:, H:2 * H], preferred_element_type=jnp.float32) + b_qkv[:, H:2 * H]
        v = jnp.dot(xv, w_qkv[:, 2 * H:], preferred_element_type=jnp.float32) + b_qkv[:, 2 * H:]
        qkv_scr[:, :H] = q.astype(compute_dtype)
        qkv_scr[:, H:2 * H] = k.astype(compute_dtype)
        qkv_scr[:, 2 * H:] = v.astype(compute_dtype)

    # Per-head attention; each head's output is written at lane offset h*d_k
    # into heads_scr (the "concat" is just lane-offset stores, no transpose).
    # TODO(synk): switch to lax.fori_loop over pl.ds(h*d_k, d_k) ref slices if
    # bundle dumps show vreg spills at n_heads >= 12.
    for h in range(n_heads):
        lo = h * d_k
        qh = qkv_scr[:, lo:lo + d_k].reshape(block_b, seq_len, d_k)
        kh = qkv_scr[:, H + lo:H + lo + d_k].reshape(block_b, seq_len, d_k)
        vh = qkv_scr[:, 2 * H + lo:2 * H + lo + d_k].reshape(block_b, seq_len, d_k)

        # q . k^T via contraction of the last dims of both operands (no transpose).
        # 1/sqrt(d_k) is already folded into Wq/bq on the host.
        s = jnp.einsum('bqd,bkd->bqk', qh, kh,
                       preferred_element_type=jnp.float32)              # (Bb, S, S)
        # TODO(synk): optional attention mask (additive -10000.0 bias) would go here.
        s = s - jnp.max(s, axis=-1, keepdims=True)
        p = jnp.exp(s)
        p = p * pl.reciprocal(jnp.sum(p, axis=-1, keepdims=True), approx=True)

        ho = jnp.einsum('bqk,bkd->bqd', p.astype(compute_dtype), vh,
                        preferred_element_type=jnp.float32)             # (Bb, S, d_k)
        heads_scr[:, lo:lo + d_k] = ho.reshape(M, d_k).astype(compute_dtype)

    # Single full-depth (M,H)@(H,H) output projection (K = H, not K = d_k).
    out = jnp.dot(heads_scr[...], wo_ref[...],
                  preferred_element_type=jnp.float32) + bo_ref[...]
    o_ref[...] = out.reshape(block_b, seq_len, H).astype(o_ref.dtype)


def pack_mha_params(params, *, n_heads, compute_dtype=jnp.bfloat16):
    """Host-side, call-once packing of nn.Linear-style params.

    Pre-transposes all weights (so the kernel only does x @ W), packs Wq|Wk|Wv
    into one (H, 3H) block, and folds the 1/sqrt(d_k) attention scale into the
    Q weights/bias.  Weights are stored in the MXU compute dtype; biases stay
    f32 (added after the f32-accumulated dot).
    """
    H = params["wq"].shape[0]
    d_k = H // n_heads
    scale = 1.0 / jnp.sqrt(jnp.float32(d_k))

    wq_t = (params["wq"] * scale).T        # (H, H), scale folded in
    bq = params["bq"] * scale
    w_qkv = jnp.concatenate([wq_t, params["wk"].T, params["wv"].T],
                            axis=1).astype(compute_dtype)               # (H, 3H)
    b_qkv = jnp.concatenate([bq, params["bk"], params["bv"]]
                            ).reshape(1, 3 * H).astype(jnp.float32)     # (1, 3H)
    w_o = params["wo"].T.astype(compute_dtype)                          # (H, H)
    b_o = params["bo"].reshape(1, H).astype(jnp.float32)                # (1, H)
    return {"w_qkv": w_qkv, "b_qkv": b_qkv, "w_o": w_o, "b_o": b_o}


def _device_is_v7x():
    try:
        kind = jax.devices()[0].device_kind.lower()
    except Exception:
        return True   # conservative: smaller blocks, >=2 grid steps
    return ("v7" in kind) or ("7x" in kind)


def _select_block_b(B, S, is_v7x):
    # v5e/v6e (128 MiB VMEM): bigger blocks amortize the ~0.35us/step grid
    # overhead -> M cap ~1024.  v7x (64 MiB): keep the tighter 512 cap and
    # leave >= 2 grid steps so dimension_semantics=("parallel",) can feed
    # both TensorCores.
    m_cap = 512 if is_v7x else 1024
    max_bb = B // 2 if (is_v7x and B >= 2) else B
    block_b = 1
    for cand in range(max_bb, 0, -1):
        if B % cand == 0 and cand * S <= m_cap:
            block_b = cand
            break
    return block_b


def _vmem_limit_bytes(n_x, block_b, S, H, out_itemsize):
    """Estimate of resident VMEM (blocks + weights + scratch + intermediates)."""
    M = block_b * S
    cd = 2  # bf16
    blocks = 2 * (n_x * M * H * cd + M * H * out_itemsize)        # double-buffered x / out
    weights = (3 * H * H + H * H) * cd + 4 * H * 4                # packed weights + biases
    scratch = M * 3 * H * cd + M * H * cd                         # qkv slab + head-output slab
    interm = M * 3 * H * 4 + 2 * block_b * S * S * 4 + M * H * 4  # f32 qkv, scores+probs, f32 out
    est = int((blocks + 2 * weights + scratch + interm) * 1.5)    # headroom
    return max(32 * 1024 * 1024, min(est, 64 * 1024 * 1024))


def _build_call(n_x, B, S, H, block_b, nb, n_heads, d_k, compute_dtype, out_dtype,
                vmem_limit, single_buffer_weights):
    kernel = functools.partial(
        _mha_kernel, n_heads=n_heads, d_k=d_k, n_x=n_x,
        block_b=block_b, seq_len=S, hidden=H, compute_dtype=compute_dtype)

    x_spec = pl.BlockSpec((block_b, S, H), lambda i: (i, 0, 0))

    def const_spec(shape):
        # Constant index_maps -> block is identical every grid step.
        index_map = lambda i: (0,) * len(shape)
        if single_buffer_weights:
            # Single-buffer the weights: no point double-buffering a block that
            # never changes (saves ~4.5 MiB of duplicated bf16 BERT weights).
            return pl.BlockSpec(shape, index_map, pipeline_mode=pl.Buffered(1))
        return pl.BlockSpec(shape, index_map)

    in_specs = [x_spec] * n_x + [const_spec((H, 3 * H)), const_spec((1, 3 * H)),
                                 const_spec((H, H)), const_spec((1, H))]

    return pl.pallas_call(
        kernel,
        out_shape=jax.ShapeDtypeStruct((B, S, H), out_dtype),
        grid_spec=pltpu.PrefetchScalarGridSpec(
            num_scalar_prefetch=0,
            grid=(nb,),
            in_specs=in_specs,
            out_specs=pl.BlockSpec((block_b, S, H), lambda i: (i, 0, 0)),
            scratch_shapes=[pltpu.VMEM((block_b * S, 3 * H), compute_dtype),
                            pltpu.VMEM((block_b * S, H), compute_dtype)],
        ),
        compiler_params=pltpu.CompilerParams(
            dimension_semantics=("parallel",),
            vmem_limit_bytes=vmem_limit),
    )


def multi_head_attention(query, key, value, params, *, n_heads, block_b=None,
                         compute_dtype=jnp.bfloat16, out_dtype=None,
                         self_attention=None):
    """query/key/value: [B, S, H].

    `params` is either the raw nn.Linear-style dict (wq,bq,...,wo,bo) or the
    result of pack_mha_params() (preferred: pack once, reuse every forward).
    """
    B, S, H = query.shape
    d_k = H // n_heads
    out_dtype = query.dtype if out_dtype is None else out_dtype

    if "w_qkv" not in params:
        # Convenience path; hot callers should pack once via pack_mha_params().
        params = pack_mha_params(params, n_heads=n_heads, compute_dtype=compute_dtype)

    # Self-attention fast path keyed on object identity (the BERT call pattern);
    # callers with equal-but-distinct arrays can force it via self_attention=True.
    if self_attention is None:
        self_attention = (query is key) and (key is value)

    is_v7x = _device_is_v7x()
    if block_b is None:
        block_b = _select_block_b(B, S, is_v7x)
    assert B % block_b == 0
    nb = B // block_b

    if self_attention:
        x_inputs = (query.astype(compute_dtype),)
    else:
        x_inputs = (query.astype(compute_dtype),
                    key.astype(compute_dtype),
                    value.astype(compute_dtype))

    vmem_limit = _vmem_limit_bytes(len(x_inputs), block_b, S, H,
                                   jnp.dtype(out_dtype).itemsize)

    args = (*x_inputs, params["w_qkv"], params["b_qkv"], params["w_o"], params["b_o"])
    try:
        call = _build_call(len(x_inputs), B, S, H, block_b, nb, n_heads, d_k,
                           compute_dtype, out_dtype, vmem_limit,
                           single_buffer_weights=True)
        return call(*args)
    except Exception:
        # Fallback if this JAX build rejects pipeline_mode=pl.Buffered(1);
        # identical kernel, default (double-buffered) weight blocks.
        call = _build_call(len(x_inputs), B, S, H, block_b, nb, n_heads, d_k,
                           compute_dtype, out_dtype, vmem_limit,
                           single_buffer_weights=False)
        return call(*args)


def reference_mha(query, key, value, params, *, n_heads):
    """Pure-JAX f32 reference mirroring the PyTorch forward (mask=None)."""
    B, S, H = query.shape
    d_k = H // n_heads

    def lin(x, w, b):
        return x @ w.T + b

    q = lin(query, params["wq"], params["bq"]).reshape(B, S, n_heads, d_k).transpose(0, 2, 1, 3)
    k = lin(key,   params["wk"], params["bk"]).reshape(B, S, n_heads, d_k).transpose(0, 2, 3, 1)
    v = lin(value, params["wv"], params["bv"]).reshape(B, S, n_heads, d_k).transpose(0, 2, 1, 3)

    scores = jnp.matmul(q, k) / jnp.sqrt(jnp.float32(d_k))
    attn = jax.nn.softmax(scores, axis=-1)
    y = jnp.matmul(attn, v).transpose(0, 2, 1, 3).reshape(B, S, H)
    return lin(y, params["wo"], params["bo"])


if __name__ == "__main__":
    B, S, H, NH = 2, 8, 32, 4

    key0 = jax.random.PRNGKey(0)
    keys = jax.random.split(key0, 12)
    wscale = 1.0 / jnp.sqrt(jnp.float32(H))

    params = {
        "wq": jax.random.normal(keys[0], (H, H), jnp.float32) * wscale,
        "bq": jax.random.normal(keys[1], (H,),   jnp.float32) * 0.1,
        "wk": jax.random.normal(keys[2], (H, H), jnp.float32) * wscale,
        "bk": jax.random.normal(keys[3], (H,),   jnp.float32) * 0.1,
        "wv": jax.random.normal(keys[4], (H, H), jnp.float32) * wscale,
        "bv": jax.random.normal(keys[5], (H,),   jnp.float32) * 0.1,
        "wo": jax.random.normal(keys[6], (H, H), jnp.float32) * wscale,
        "bo": jax.random.normal(keys[7], (H,),   jnp.float32) * 0.1,
    }

    query = jax.random.normal(keys[8],  (B, S, H), jnp.float32)
    key_in = jax.random.normal(keys[9],  (B, S, H), jnp.float32)
    value = jax.random.normal(keys[10], (B, S, H), jnp.float32)

    # Pack weights ONCE (hoisted out of the per-forward path).
    packed = pack_mha_params(params, n_heads=NH)

    # bf16 matmul inputs with f32 accumulation -> loosened tolerance vs. the
    # pure-f32 reference.
    ATOL = RTOL = 5e-2

    # Cross-attention path (distinct q/k/v -> three un-transposed projections).
    out = multi_head_attention(query, key_in, value, packed, n_heads=NH)
    out = jax.block_until_ready(out)
    ref = reference_mha(query, key_in, value, params, n_heads=NH)
    assert out.shape == (B, S, H)
    assert jnp.allclose(out, ref, atol=ATOL, rtol=RTOL), "cross-attn mismatch vs reference"

    # Self-attention path (q is k is v -> fused (M,H)@(H,3H) QKV matmul).
    out_sa = multi_head_attention(query, query, query, packed, n_heads=NH)
    out_sa = jax.block_until_ready(out_sa)
    ref_sa = reference_mha(query, query, query, params, n_heads=NH)
    assert jnp.allclose(out_sa, ref_sa, atol=ATOL, rtol=RTOL), "self-attn mismatch vs reference"

    print("KERNEL_OK")
</pallas_src>

<mosaic_0001>
module attributes {stable_mosaic.version = 11 : i64} {
  func.func @_mha_kernel(%arg0: i32, %arg1: memref<2x8x32xbf16, #tpu.memory_space<vmem>>, %arg2: memref<2x8x32xbf16, #tpu.memory_space<vmem>>, %arg3: memref<2x8x32xbf16, #tpu.memory_space<vmem>>, %arg4: memref<32x96xbf16, #tpu.memory_space<vmem>>, %arg5: memref<1x96xf32, #tpu.memory_space<vmem>>, %arg6: memref<32x32xbf16, #tpu.memory_space<vmem>>, %arg7: memref<1x32xf32, #tpu.memory_space<vmem>>, %arg8: memref<2x8x32xf32, #tpu.memory_space<vmem>>, %arg9: memref<16x96xbf16, #tpu.memory_space<vmem>>, %arg10: memref<16x32xbf16, #tpu.memory_space<vmem>>) attributes {dimension_semantics = [#tpu.dimension_semantics<parallel>], iteration_bounds = array<i64: 1>, scalar_prefetch = 0 : i64, scratch_operands = 2 : i64, tpu.core_type = #tpu.core_type<tc>, window_params = [{transform_indices = @transform_0, window_bounds = array<i64: 2, 8, 32>}, {transform_indices = @transform_1, window_bounds = array<i64: 2, 8, 32>}, {transform_indices = @transform_2, window_bounds = array<i64: 2, 8, 32>}, {pipeline_mode = #tpu.pipeline_mode<synchronous>, transform_indices = @transform_3, window_bounds = array<i64: 32, 96>}, {pipeline_mode = #tpu.pipeline_mode<synchronous>, transform_indices = @transform_4, window_bounds = array<i64: 1, 96>}, {pipeline_mode = #tpu.pipeline_mode<synchronous>, transform_indices = @transform_5, window_bounds = array<i64: 32, 32>}, {pipeline_mode = #tpu.pipeline_mode<synchronous>, transform_indices = @transform_6, window_bounds = array<i64: 1, 32>}, {transform_indices = @transform_7, window_bounds = array<i64: 2, 8, 32>}]} {
    %c0 = arith.constant 0 : index
    %c0_0 = arith.constant 0 : index
    %0 = vector.load %arg4[%c0, %c0_0] : memref<32x96xbf16, #tpu.memory_space<vmem>>, vector<32x96xbf16>
    %c0_1 = arith.constant 0 : index
    %c0_2 = arith.constant 0 : index
    %1 = vector.load %arg5[%c0_1, %c0_2] : memref<1x96xf32, #tpu.memory_space<vmem>>, vector<1x96xf32>
    %c0_3 = arith.constant 0 : index
    %c0_4 = arith.constant 0 : index
    %c0_5 = arith.constant 0 : index
    %2 = vector.load %arg1[%c0_3, %c0_4, %c0_5] : memref<2x8x32xbf16, #tpu.memory_space<vmem>>, vector<2x8x32xbf16>
    %3 = vector.shape_cast %2 : vector<2x8x32xbf16> to vector<16x32xbf16>
    %c0_6 = arith.constant 0 : index
    %c0_7 = arith.constant 0 : index
    %c0_8 = arith.constant 0 : index
    %4 = vector.load %arg2[%c0_6, %c0_7, %c0_8] : memref<2x8x32xbf16, #tpu.memory_space<vmem>>, vector<2x8x32xbf16>
    %5 = vector.shape_cast %4 : vector<2x8x32xbf16> to vector<16x32xbf16>
    %c0_9 = arith.constant 0 : index
    %c0_10 = arith.constant 0 : index
    %c0_11 = arith.constant 0 : index
    %6 = vector.load %arg3[%c0_9, %c0_10, %c0_11] : memref<2x8x32xbf16, #tpu.memory_space<vmem>>, vector<2x8x32xbf16>
    %7 = vector.shape_cast %6 : vector<2x8x32xbf16> to vector<16x32xbf16>
    %8 = vector.extract_strided_slice %0 {offsets = [0, 0], sizes = [32, 32], strides = [1, 1]} : vector<32x96xbf16> to vector<32x32xbf16>
    %cst = arith.constant dense<0.000000e+00> : vector<16x32xf32>
    %9 = tpu.matmul %3, %8, %cst {dimension_numbers = #tpu.dot_dimension_numbers<[1], [0], [0], [1], [0, 0, 1, 1], [], []>} : vector<16x32xbf16>, vector<32x32xbf16>, vector<16x32xf32> -> vector<16x32xf32>
    %10 = vector.extract_strided_slice %1 {offsets = [0, 0], sizes = [1, 32], strides = [1, 1]} : vector<1x96xf32> to vector<1x32xf32>
    %11 = vector.broadcast %10 : vector<1x32xf32> to vector<16x32xf32>
    %12 = arith.addf %9, %11 : vector<16x32xf32>
    %13 = vector.extract_strided_slice %0 {offsets = [0, 32], sizes = [32, 32], strides = [1, 1]} : vector<32x96xbf16> to vector<32x32xbf16>
    %cst_12 = arith.constant dense<0.000000e+00> : vector<16x32xf32>
    %14 = tpu.matmul %5, %13, %cst_12 {dimension_numbers = #tpu.dot_dimension_numbers<[1], [0], [0], [1], [0, 0, 1, 1], [], []>} : vector<16x32xbf16>, vector<32x32xbf16>, vector<16x32xf32> -> vector<16x32xf32>
    %15 = vector.extract_strided_slice %1 {offsets = [0, 32], sizes = [1, 32], strides = [1, 1]} : vector<1x96xf32> to vector<1x32xf32>
    %16 = vector.broadcast %15 : vector<1x32xf32> to vector<16x32xf32>
    %17 = arith.addf %14, %16 : vector<16x32xf32>
    %18 = vector.extract_strided_slice %0 {offsets = [0, 64], sizes = [32, 32], strides = [1, 1]} : vector<32x96xbf16> to vector<32x32xbf16>
    %cst_13 = arith.constant dense<0.000000e+00> : vector<16x32xf32>
    %19 = tpu.matmul %7, %18, %cst_13 {dimension_numbers = #tpu.dot_dimension_numbers<[1], [0], [0], [1], [0, 0, 1, 1], [], []>} : vector<16x32xbf16>, vector<32x32xbf16>, vector<16x32xf32> -> vector<16x32xf32>
    %20 = vector.extract_strided_slice %1 {offsets = [0, 64], sizes = [1, 32], strides = [1, 1]} : vector<1x96xf32> to vector<1x32xf32>
    %21 = vector.broadcast %20 : vector<1x32xf32> to vector<16x32xf32>
    %22 = arith.addf %19, %21 : vector<16x32xf32>
    %23 = arith.truncf %12 : vector<16x32xf32> to vector<16x32xbf16>
    %c0_14 = arith.constant 0 : index
    %c0_15 = arith.constant 0 : index
    %24 = vector.load %arg9[%c0_14, %c0_15] : memref<16x96xbf16, #tpu.memory_space<vmem>>, vector<16x32xbf16>
    tpu.vector_store %arg9[%c0_14, %c0_15], %23 {strides = array<i32>} : memref<16x96xbf16, #tpu.memory_space<vmem>>, vector<16x32xbf16>,
    %25 = arith.truncf %17 : vector<16x32xf32> to vector<16x32xbf16>
    %c0_16 = arith.constant 0 : index
    %c32 = arith.constant 32 : index
    %26 = vector.load %arg9[%c0_16, %c32] : memref<16x96xbf16, #tpu.memory_space<vmem>>, vector<16x32xbf16>
    tpu.vector_store %arg9[%c0_16, %c32], %25 {strides = array<i32>} : memref<16x96xbf16, #tpu.memory_space<vmem>>, vector<16x32xbf16>,
    %27 = arith.truncf %22 : vector<16x32xf32> to vector<16x32xbf16>
    %c0_17 = arith.constant 0 : index
    %c64 = arith.constant 64 : index
    %28 = vector.load %arg9[%c0_17, %c64] : memref<16x96xbf16, #tpu.memory_space<vmem>>, vector<16x32xbf16>
    tpu.vector_store %arg9[%c0_17, %c64], %27 {strides = array<i32>} : memref<16x96xbf16, #tpu.memory_space<vmem>>, vector<16x32xbf16>,
    %c0_18 = arith.constant 0 : index
    %c0_19 = arith.constant 0 : index
    %29 = vector.load %arg9[%c0_18, %c0_19] : memref<16x96xbf16, #tpu.memory_space<vmem>>, vector<16x8xbf16>
    %30 = vector.shape_cast %29 : vector<16x8xbf16> to vector<2x8x8xbf16>
    %c0_20 = arith.constant 0 : index
    %c32_21 = arith.constant 32 : index
    %31 = vector.load %arg9[%c0_20, %c32_21] : memref<16x96xbf16, #tpu.memory_space<vmem>>, vector<16x8xbf16>
    %32 = vector.shape_cast %31 : vector<16x8xbf16> to vector<2x8x8xbf16>
    %c0_22 = arith.constant 0 : index
    %c64_23 = arith.constant 64 : index
    %33 = vector.load %arg9[%c0_22, %c64_23] : memref<16x96xbf16, #tpu.memory_space<vmem>>, vector<16x8xbf16>
    %34 = vector.shape_cast %33 : vector<16x8xbf16> to vector<2x8x8xbf16>
    "tpu.trace_start"() <{level = 10 : i32, message = "bqd,bkd->bqk"}> : () -> ()
    %cst_24 = arith.constant dense<0.000000e+00> : vector<2x8x8xf32>
    %35 = tpu.matmul %30, %32, %cst_24 {dimension_numbers = #tpu.dot_dimension_numbers<[2], [2], [1], [1], [0, 0, 0, 1, 1, 1], [0], [0]>} : vector<2x8x8xbf16>, vector<2x8x8xbf16>, vector<2x8x8xf32> -> vector<2x8x8xf32>
    "tpu.trace_stop"() : () -> ()
    %cst_25 = arith.constant dense<0xFF800000> : vector<2x8xf32>
    %36 = vector.multi_reduction <maximumf>, %35, %cst_25 [2] : vector<2x8x8xf32> to vector<2x8xf32>
    %37 = vector.shape_cast %36 : vector<2x8xf32> to vector<2x8x1xf32>
    %38 = vector.broadcast %37 : vector<2x8x1xf32> to vector<2x8x8xf32>
    %39 = arith.subf %35, %38 : vector<2x8x8xf32>
    %40 = math.exp %39 : vector<2x8x8xf32>
    %cst_26 = arith.constant dense<0.000000e+00> : vector<2x8xf32>
    %41 = vector.multi_reduction <add>, %40, %cst_26 [2] : vector<2x8x8xf32> to vector<2x8xf32>
    %42 = vector.shape_cast %41 : vector<2x8xf32> to vector<2x8x1xf32>
    %43 = tpu.reciprocal %42 {approx = true} : vector<2x8x1xf32> -> vector<2x8x1xf32>
    %44 = vector.broadcast %43 : vector<2x8x1xf32> to vector<2x8x8xf32>
    %45 = arith.mulf %40, %44 : vector<2x8x8xf32>
    %46 = arith.truncf %45 : vector<2x8x8xf32> to vector<2x8x8xbf16>
    "tpu.trace_start"() <{level = 10 : i32, message = "bqk,bkd->bqd"}> : () -> ()
    %cst_27 = arith.constant dense<0.000000e+00> : vector<2x8x8xf32>
    %47 = tpu.matmul %46, %34, %cst_27 {dimension_numbers = #tpu.dot_dimension_numbers<[2], [1], [1], [2], [0, 0, 0, 1, 1, 2], [0], [0]>} : vector<2x8x8xbf16>, vector<2x8x8xbf16>, vector<2x8x8xf32> -> vector<2x8x8xf32>
    "tpu.trace_stop"() : () -> ()
    %48 = vector.shape_cast %47 : vector<2x8x8xf32> to vector<16x8xf32>
    %49 = arith.truncf %48 : vector<16x8xf32> to vector<16x8xbf16>
    %c0_28 = arith.constant 0 : index
    %c0_29 = arith.constant 0 : index
    %50 = vector.load %arg10[%c0_28, %c0_29] : memref<16x32xbf16, #tpu.memory_space<vmem>>, vector<16x8xbf16>
    tpu.vector_store %arg10[%c0_28, %c0_29], %49 {strides = array<i32>} : memref<16x32xbf16, #tpu.memory_space<vmem>>, vector<16x8xbf16>,
    %c0_30 = arith.constant 0 : index
    %c8 = arith.constant 8 : index
    %51 = vector.load %arg9[%c0_30, %c8] : memref<16x96xbf16, #tpu.memory_space<vmem>>, vector<16x8xbf16>
    %52 = vector.shape_cast %51 : vector<16x8xbf16> to vector<2x8x8xbf16>
    %c0_31 = arith.constant 0 : index
    %c40 = arith.constant 40 : index
    %53 = vector.load %arg9[%c0_31, %c40] : memref<16x96xbf16, #tpu.memory_space<vmem>>, vector<16x8xbf16>
    %54 = vector.shape_cast %53 : vector<16x8xbf16> to vector<2x8x8xbf16>
    %c0_32 = arith.constant 0 : index
    %c72 = arith.constant 72 : index
    %55 = vector.load %arg9[%c0_32, %c72] : memref<16x96xbf16, #tpu.memory_space<vmem>>, vector<16x8xbf16>
    %56 = vector.shape_cast %55 : vector<16x8xbf16> to vector<2x8x8xbf16>
    "tpu.trace_start"() <{level = 10 : i32, message = "bqd,bkd->bqk"}> : () -> ()
    %cst_33 = arith.constant dense<0.000000e+00> : vector<2x8x8xf32>
    %57 = tpu.matmul %52, %54, %cst_33 {dimension_numbers = #tpu.dot_dimension_numbers<[2], [2], [1], [1], [0, 0, 0, 1, 1, 1], [0], [0]>} : vector<2x8x8xbf16>, vector<2x8x8xbf16>, vector<2x8x8xf32> -> vector<2x8x8xf32>
    "tpu.trace_stop"() : () -> ()
    %cst_34 = arith.constant dense<0xFF800000> : vector<2x8xf32>
    %58 = vector.multi_reduction <maximumf>, %57, %cst_34 [2] : vector<2x8x8xf32> to vector<2x8xf32>
    %59 = vector.shape_cast %58 : vector<2x8xf32> to vector<2x8x1xf32>
    %60 = vector.broadcast %59 : vector<2x8x1xf32> to vector<2x8x8xf32>
    %61 = arith.subf %57, %60 : vector<2x8x8xf32>
    %62 = math.exp %61 : vector<2x8x8xf32>
    %cst_35 = arith.constant dense<0.000000e+00> : vector<2x8xf32>
    %63 = vector.multi_reduction <add>, %62, %cst_35 [2] : vector<2x8x8xf32> to vector<2x8xf32>
    %64 = vector.shape_cast %63 : vector<2x8xf32> to vector<2x8x1xf32>
    %65 = tpu.reciprocal %64 {approx = true} : vector<2x8x1xf32> -> vector<2x8x1xf32>
    %66 = vector.broadcast %65 : vector<2x8x1xf32> to vector<2x8x8xf32>
    %67 = arith.mulf %62, %66 : vector<2x8x8xf32>
    %68 = arith.truncf %67 : vector<2x8x8xf32> to vector<2x8x8xbf16>
    "tpu.trace_start"() <{level = 10 : i32, message = "bqk,bkd->bqd"}> : () -> ()
    %cst_36 = arith.constant dense<0.000000e+00> : vector<2x8x8xf32>
    %69 = tpu.matmul %68, %56, %cst_36 {dimension_numbers = #tpu.dot_dimension_numbers<[2], [1], [1], [2], [0, 0, 0, 1, 1, 2], [0], [0]>} : vector<2x8x8xbf16>, vector<2x8x8xbf16>, vector<2x8x8xf32> -> vector<2x8x8xf32>
    "tpu.trace_stop"() : () -> ()
    %70 = vector.shape_cast %69 : vector<2x8x8xf32> to vector<16x8xf32>
    %71 = arith.truncf %70 : vector<16x8xf32> to vector<16x8xbf16>
    %c0_37 = arith.constant 0 : index
    %c8_38 = arith.constant 8 : index
    %72 = vector.load %arg10[%c0_37, %c8_38] : memref<16x32xbf16, #tpu.memory_space<vmem>>, vector<16x8xbf16>
    tpu.vector_store %arg10[%c0_37, %c8_38], %71 {strides = array<i32>} : memref<16x32xbf16, #tpu.memory_space<vmem>>, vector<16x8xbf16>,
    %c0_39 = arith.constant 0 : index
    %c16 = arith.constant 16 : index
    %73 = vector.load %arg9[%c0_39, %c16] : memref<16x96xbf16, #tpu.memory_space<vmem>>, vector<16x8xbf16>
    %74 = vector.shape_cast %73 : vector<16x8xbf16> to vector<2x8x8xbf16>
    %c0_40 = arith.constant 0 : index
    %c48 = arith.constant 48 : index
    %75 = vector.load %arg9[%c0_40, %c48] : memref<16x96xbf16, #tpu.memory_space<vmem>>, vector<16x8xbf16>
    %76 = vector.shape_cast %75 : vector<16x8xbf16> to vector<2x8x8xbf16>
    %c0_41 = arith.constant 0 : index
    %c80 = arith.constant 80 : index
    %77 = vector.load %arg9[%c0_41, %c80] : memref<16x96xbf16, #tpu.memory_space<vmem>>, vector<16x8xbf16>
    %78 = vector.shape_cast %77 : vector<16x8xbf16> to vector<2x8x8xbf16>
    "tpu.trace_start"() <{level = 10 : i32, message = "bqd,bkd->bqk"}> : () -> ()
    %cst_42 = arith.constant dense<0.000000e+00> : vector<2x8x8xf32>
    %79 = tpu.matmul %74, %76, %cst_42 {dimension_numbers = #tpu.dot_dimension_numbers<[2], [2], [1], [1], [0, 0, 0, 1, 1, 1], [0], [0]>} : vector<2x8x8xbf16>, vector<2x8x8xbf16>, vector<2x8x8xf32> -> vector<2x8x8xf32>
    "tpu.trace_stop"() : () -> ()
    %cst_43 = arith.constant dense<0xFF800000> : vector<2x8xf32>
    %80 = vector.multi_reduction <maximumf>, %79, %cst_43 [2] : vector<2x8x8xf32> to vector<2x8xf32>
    %81 = vector.shape_cast %80 : vector<2x8xf32> to vector<2x8x1xf32>
    %82 = vector.broadcast %81 : vector<2x8x1xf32> to vector<2x8x8xf32>
    %83 = arith.subf %79, %82 : vector<2x8x8xf32>
    %84 = math.exp %83 : vector<2x8x8xf32>
    %cst_44 = arith.constant dense<0.000000e+00> : vector<2x8xf32>
    %85 = vector.multi_reduction <add>, %84, %cst_44 [2] : vector<2x8x8xf32> to vector<2x8xf32>
    %86 = vector.shape_cast %85 : vector<2x8xf32> to vector<2x8x1xf32>
    %87 = tpu.reciprocal %86 {approx = true} : vector<2x8x1xf32> -> vector<2x8x1xf32>
    %88 = vector.broadcast %87 : vector<2x8x1xf32> to vector<2x8x8xf32>
    %89 = arith.mulf %84, %88 : vector<2x8x8xf32>
    %90 = arith.truncf %89 : vector<2x8x8xf32> to vector<2x8x8xbf16>
    "tpu.trace_start"() <{level = 10 : i32, message = "bqk,bkd->bqd"}> : () -> ()
    %cst_45 = arith.constant dense<0.000000e+00> : vector<2x8x8xf32>
    %91 = tpu.matmul %90, %78, %cst_45 {dimension_numbers = #tpu.dot_dimension_numbers<[2], [1], [1], [2], [0, 0, 0, 1, 1, 2], [0], [0]>} : vector<2x8x8xbf16>, vector<2x8x8xbf16>, vector<2x8x8xf32> -> vector<2x8x8xf32>
    "tpu.trace_stop"() : () -> ()
    %92 = vector.shape_cast %91 : vector<2x8x8xf32> to vector<16x8xf32>
    %93 = arith.truncf %92 : vector<16x8xf32> to vector<16x8xbf16>
    %c0_46 = arith.constant 0 : index
    %c16_47 = arith.constant 16 : index
    %94 = vector.load %arg10[%c0_46, %c16_47] : memref<16x32xbf16, #tpu.memory_space<vmem>>, vector<16x8xbf16>
    tpu.vector_store %arg10[%c0_46, %c16_47], %93 {strides = array<i32>} : memref<16x32xbf16, #tpu.memory_space<vmem>>, vector<16x8xbf16>,
    %c0_48 = arith.constant 0 : index
    %c24 = arith.constant 24 : index
    %95 = vector.load %arg9[%c0_48, %c24] : memref<16x96xbf16, #tpu.memory_space<vmem>>, vector<16x8xbf16>
    %96 = vector.shape_cast %95 : vector<16x8xbf16> to vector<2x8x8xbf16>
    %c0_49 = arith.constant 0 : index
    %c56 = arith.constant 56 : index
    %97 = vector.load %arg9[%c0_49, %c56] : memref<16x96xbf16, #tpu.memory_space<vmem>>, vector<16x8xbf16>
    %98 = vector.shape_cast %97 : vector<16x8xbf16> to vector<2x8x8xbf16>
    %c0_50 = arith.constant 0 : index
    %c88 = arith.constant 88 : index
    %99 = vector.load %arg9[%c0_50, %c88] : memref<16x96xbf16, #tpu.memory_space<vmem>>, vector<16x8xbf16>
    %100 = vector.shape_cast %99 : vector<16x8xbf16> to vector<2x8x8xbf16>
    "tpu.trace_start"() <{level = 10 : i32, message = "bqd,bkd->bqk"}> : () -> ()
    %cst_51 = arith.constant dense<0.000000e+00> : vector<2x8x8xf32>
    %101 = tpu.matmul %96, %98, %cst_51 {dimension_numbers = #tpu.dot_dimension_numbers<[2], [2], [1], [1], [0, 0, 0, 1, 1, 1], [0], [0]>} : vector<2x8x8xbf16>, vector<2x8x8xbf16>, vector<2x8x8xf32> -> vector<2x8x8xf32>
    "tpu.trace_stop"() : () -> ()
    %cst_52 = arith.constant dense<0xFF800000> : vector<2x8xf32>
    %102 = vector.multi_reduction <maximumf>, %101, %cst_52 [2] : vector<2x8x8xf32> to vector<2x8xf32>
    %103 = vector.shape_cast %102 : vector<2x8xf32> to vector<2x8x1xf32>
    %104 = vector.broadcast %103 : vector<2x8x1xf32> to vector<2x8x8xf32>
    %105 = arith.subf %101, %104 : vector<2x8x8xf32>
    %106 = math.exp %105 : vector<2x8x8xf32>
    %cst_53 = arith.constant dense<0.000000e+00> : vector<2x8xf32>
    %107 = vector.multi_reduction <add>, %106, %cst_53 [2] : vector<2x8x8xf32> to vector<2x8xf32>
    %108 = vector.shape_cast %107 : vector<2x8xf32> to vector<2x8x1xf32>
    %109 = tpu.reciprocal %108 {approx = true} : vector<2x8x1xf32> -> vector<2x8x1xf32>
    %110 = vector.broadcast %109 : vector<2x8x1xf32> to vector<2x8x8xf32>
    %111 = arith.mulf %106, %110 : vector<2x8x8xf32>
    %112 = arith.truncf %111 : vector<2x8x8xf32> to vector<2x8x8xbf16>
    "tpu.trace_start"() <{level = 10 : i32, message = "bqk,bkd->bqd"}> : () -> ()
    %cst_54 = arith.constant dense<0.000000e+00> : vector<2x8x8xf32>
    %113 = tpu.matmul %112, %100, %cst_54 {dimension_numbers = #tpu.dot_dimension_numbers<[2], [1], [1], [2], [0, 0, 0, 1, 1, 2], [0], [0]>} : vector<2x8x8xbf16>, vector<2x8x8xbf16>, vector<2x8x8xf32> -> vector<2x8x8xf32>
    "tpu.trace_stop"() : () -> ()
    %114 = vector.shape_cast %113 : vector<2x8x8xf32> to vector<16x8xf32>
    %115 = arith.truncf %114 : vector<16x8xf32> to vector<16x8xbf16>
    %c0_55 = arith.constant 0 : index
    %c24_56 = arith.constant 24 : index
    %116 = vector.load %arg10[%c0_55, %c24_56] : memref<16x32xbf16, #tpu.memory_space<vmem>>, vector<16x8xbf16>
    tpu.vector_store %arg10[%c0_55, %c24_56], %115 {strides = array<i32>} : memref<16x32xbf16, #tpu.memory_space<vmem>>, vector<16x8xbf16>,
    %c0_57 = arith.constant 0 : index
    %c0_58 = arith.constant 0 : index
    %117 = vector.load %arg10[%c0_57, %c0_58] : memref<16x32xbf16, #tpu.memory_space<vmem>>, vector<16x32xbf16>
    %c0_59 = arith.constant 0 : index
    %c0_60 = arith.constant 0 : index
    %118 = vector.load %arg6[%c0_59, %c0_60] : memref<32x32xbf16, #tpu.memory_space<vmem>>, vector<32x32xbf16>
    %cst_61 = arith.constant dense<0.000000e+00> : vector<16x32xf32>
    %119 = tpu.matmul %117, %118, %cst_61 {dimension_numbers = #tpu.dot_dimension_numbers<[1], [0], [0], [1], [0, 0, 1, 1], [], []>} : vector<16x32xbf16>, vector<32x32xbf16>, vector<16x32xf32> -> vector<16x32xf32>
    %c0_62 = arith.constant 0 : index
    %c0_63 = arith.constant 0 : index
    %120 = vector.load %arg7[%c0_62, %c0_63] : memref<1x32xf32, #tpu.memory_space<vmem>>, vector<1x32xf32>
    %121 = vector.broadcast %120 : vector<1x32xf32> to vector<16x32xf32>
    %122 = arith.addf %119, %121 : vector<16x32xf32>
    %123 = vector.shape_cast %122 : vector<16x32xf32> to vector<2x8x32xf32>
    %c0_64 = arith.constant 0 : index
    %c0_65 = arith.constant 0 : index
    %c0_66 = arith.constant 0 : index
    %124 = vector.load %arg8[%c0_64, %c0_65, %c0_66] : memref<2x8x32xf32, #tpu.memory_space<vmem>>, vector<2x8x32xf32>
    tpu.vector_store %arg8[%c0_64, %c0_65, %c0_66], %123 {strides = array<i32>} : memref<2x8x32xf32, #tpu.memory_space<vmem>>, vector<2x8x32xf32>,
    return
  }
  func.func @transform_0(%arg0: i32) -> (i32, i32, i32) {
    %c0_i32 = arith.constant 0 : i32
    %c0_i32_0 = arith.constant 0 : i32
    %c0_i32_1 = arith.constant 0 : i32
    return %arg0, %c0_i32, %c0_i32_0 : i32, i32, i32
  }
  func.func @transform_1(%arg0: i32) -> (i32, i32, i32) {
    %c0_i32 = arith.constant 0 : i32
    %c0_i32_0 = arith.constant 0 : i32
    %c0_i32_1 = arith.constant 0 : i32
    return %arg0, %c0_i32, %c0_i32_0 : i32, i32, i32
  }
  func.func @transform_2(%arg0: i32) -> (i32, i32, i32) {
    %c0_i32 = arith.constant 0 : i32
    %c0_i32_0 = arith.constant 0 : i32
    %c0_i32_1 = arith.constant 0 : i32
    return %arg0, %c0_i32, %c0_i32_0 : i32, i32, i32
  }
  func.func @transform_3(%arg0: i32) -> (i32, i32) {
    %c0_i32 = arith.constant 0 : i32
    %c0_i32_0 = arith.constant 0 : i32
    %c0_i32_1 = arith.constant 0 : i32
    return %c0_i32, %c0_i32_0 : i32, i32
  }
  func.func @transform_4(%arg0: i32) -> (i32, i32) {
    %c0_i32 = arith.constant 0 : i32
    %c0_i32_0 = arith.constant 0 : i32
    %c0_i32_1 = arith.constant 0 : i32
    return %c0_i32, %c0_i32_0 : i32, i32
  }
  func.func @transform_5(%arg0: i32) -> (i32, i32) {
    %c0_i32 = arith.constant 0 : i32
    %c0_i32_0 = arith.constant 0 : i32
    %c0_i32_1 = arith.constant 0 : i32
    return %c0_i32, %c0_i32_0 : i32, i32
  }
  func.func @transform_6(%arg0: i32) -> (i32, i32) {
    %c0_i32 = arith.constant 0 : i32
    %c0_i32_0 = arith.constant 0 : i32
    %c0_i32_1 = arith.constant 0 : i32
    return %c0_i32, %c0_i32_0 : i32, i32
  }
  func.func @transform_7(%arg0: i32) -> (i32, i32, i32) {
    %c0_i32 = arith.constant 0 : i32
    %c0_i32_0 = arith.constant 0 : i32
    %c0_i32_1 = arith.constant 0 : i32
    return %arg0, %c0_i32, %c0_i32_0 : i32, i32, i32
  }
}

module attributes {stable_mosaic.version = 11 : i64} {
  func.func @_mha_kernel(%arg0: i32, %arg1: memref<2x8x32xbf16, #tpu.memory_space<vmem>>, %arg2: memref<2x8x32xbf16, #tpu.memory_space<vmem>>, %arg3: memref<2x8x32xbf16, #tpu.memory_space<vmem>>, %arg4: memref<32x96xbf16, #tpu.memory_space<vmem>>, %arg5: memref<1x96xf32, #tpu.memory_space<vmem>>, %arg6: memref<32x32xbf16, #tpu.memory_space<vmem>>, %arg7: memref<1x32xf32, #tpu.memory_space<vmem>>, %arg8: memref<2x8x32xf32, #tpu.memory_space<vmem>>, %arg9: memref<16x96xbf16, #tpu.memory_space<vmem>>, %arg10: memref<16x32xbf16, #tpu.memory_space<vmem>>) attributes {dimension_semantics = [#tpu.dimension_semantics<parallel>], iteration_bounds = array<i64: 1>, scalar_prefetch = 0 : i64, scratch_operands = 2 : i64, tpu.core_type = #tpu.core_type<tc>, window_params = [{transform_indices = @transform_0, window_bounds = array<i64: 2, 8, 32>}, {transform_indices = @transform_1, window_bounds = array<i64: 2, 8, 32>}, {transform_indices = @transform_2, window_bounds = array<i64: 2, 8, 32>}, {pipeline_mode = #tpu.pipeline_mode<synchronous>, transform_indices = @transform_3, window_bounds = array<i64: 32, 96>}, {pipeline_mode = #tpu.pipeline_mode<synchronous>, transform_indices = @transform_4, window_bounds = array<i64: 1, 96>}, {pipeline_mode = #tpu.pipeline_mode<synchronous>, transform_indices = @transform_5, window_bounds = array<i64: 32, 32>}, {pipeline_mode = #tpu.pipeline_mode<synchronous>, transform_indices = @transform_6, window_bounds = array<i64: 1, 32>}, {transform_indices = @transform_7, window_bounds = array<i64: 2, 8, 32>}]} {
    %c0 = arith.constant 0 : index
    %c0_0 = arith.constant 0 : index
    %0 = vector.load %arg4[%c0, %c0_0] : memref<32x96xbf16, #tpu.memory_space<vmem>>, vector<32x96xbf16>
    %c0_1 = arith.constant 0 : index
    %c0_2 = arith.constant 0 : index
    %1 = vector.load %arg5[%c0_1, %c0_2] : memref<1x96xf32, #tpu.memory_space<vmem>>, vector<1x96xf32>
    %c0_3 = arith.constant 0 : index
    %c0_4 = arith.constant 0 : index
    %c0_5 = arith.constant 0 : index
    %2 = vector.load %arg1[%c0_3, %c0_4, %c0_5] : memref<2x8x32xbf16, #tpu.memory_space<vmem>>, vector<2x8x32xbf16>
    %3 = vector.shape_cast %2 : vector<2x8x32xbf16> to vector<16x32xbf16>
    %c0_6 = arith.constant 0 : index
    %c0_7 = arith.constant 0 : index
    %c0_8 = arith.constant 0 : index
    %4 = vector.load %arg2[%c0_6, %c0_7, %c0_8] : memref<2x8x32xbf16, #tpu.memory_space<vmem>>, vector<2x8x32xbf16>
    %5 = vector.shape_cast %4 : vector<2x8x32xbf16> to vector<16x32xbf16>
    %c0_9 = arith.constant 0 : index
    %c0_10 = arith.constant 0 : index
    %c0_11 = arith.constant 0 : index
    %6 = vector.load %arg3[%c0_9, %c0_10, %c0_11] : memref<2x8x32xbf16, #tpu.memory_space<vmem>>, vector<2x8x32xbf16>
    %7 = vector.shape_cast %6 : vector<2x8x32xbf16> to vector<16x32xbf16>
    %8 = vector.extract_strided_slice %0 {offsets = [0, 0], sizes = [32, 32], strides = [1, 1]} : vector<32x96xbf16> to vector<32x32xbf16>
    %cst = arith.constant dense<0.000000e+00> : vector<16x32xf32>
    %9 = tpu.matmul %3, %8, %cst {dimension_numbers = #tpu.dot_dimension_numbers<[1], [0], [0], [1], [0, 0, 1, 1], [], []>} : vector<16x32xbf16>, vector<32x32xbf16>, vector<16x32xf32> -> vector<16x32xf32>
    %10 = vector.extract_strided_slice %1 {offsets = [0, 0], sizes = [1, 32], strides = [1, 1]} : vector<1x96xf32> to vector<1x32xf32>
    %11 = vector.broadcast %10 : vector<1x32xf32> to vector<16x32xf32>
    %12 = arith.addf %9, %11 : vector<16x32xf32>
    %13 = vector.extract_strided_slice %0 {offsets = [0, 32], sizes = [32, 32], strides = [1, 1]} : vector<32x96xbf16> to vector<32x32xbf16>
    %cst_12 = arith.constant dense<0.000000e+00> : vector<16x32xf32>
    %14 = tpu.matmul %5, %13, %cst_12 {dimension_numbers = #tpu.dot_dimension_numbers<[1], [0], [0], [1], [0, 0, 1, 1], [], []>} : vector<16x32xbf16>, vector<32x32xbf16>, vector<16x32xf32> -> vector<16x32xf32>
    %15 = vector.extract_strided_slice %1 {offsets = [0, 32], sizes = [1, 32], strides = [1, 1]} : vector<1x96xf32> to vector<1x32xf32>
    %16 = vector.broadcast %15 : vector<1x32xf32> to vector<16x32xf32>
    %17 = arith.addf %14, %16 : vector<16x32xf32>
    %18 = vector.extract_strided_slice %0 {offsets = [0, 64], sizes = [32, 32], strides = [1, 1]} : vector<32x96xbf16> to vector<32x32xbf16>
    %cst_13 = arith.constant dense<0.000000e+00> : vector<16x32xf32>
    %19 = tpu.matmul %7, %18, %cst_13 {dimension_numbers = #tpu.dot_dimension_numbers<[1], [0], [0], [1], [0, 0, 1, 1], [], []>} : vector<16x32xbf16>, vector<32x32xbf16>, vector<16x32xf32> -> vector<16x32xf32>
    %20 = vector.extract_strided_slice %1 {offsets = [0, 64], sizes = [1, 32], strides = [1, 1]} : vector<1x96xf32> to vector<1x32xf32>
    %21 = vector.broadcast %20 : vector<1x32xf32> to vector<16x32xf32>
    %22 = arith.addf %19, %21 : vector<16x32xf32>
    %23 = arith.truncf %12 : vector<16x32xf32> to vector<16x32xbf16>
    %c0_14 = arith.constant 0 : index
    %c0_15 = arith.constant 0 : index
    %24 = vector.load %arg9[%c0_14, %c0_15] : memref<16x96xbf16, #tpu.memory_space<vmem>>, vector<16x32xbf16>
    tpu.vector_store %arg9[%c0_14, %c0_15], %23 {strides = array<i32>} : memref<16x96xbf16, #tpu.memory_space<vmem>>, vector<16x32xbf16>,
    %25 = arith.truncf %17 : vector<16x32xf32> to vector<16x32xbf16>
    %c0_16 = arith.constant 0 : index
    %c32 = arith.constant 32 : index
    %26 = vector.load %arg9[%c0_16, %c32] : memref<16x96xbf16, #tpu.memory_space<vmem>>, vector<16x32xbf16>
    tpu.vector_store %arg9[%c0_16, %c32], %25 {strides = array<i32>} : memref<16x96xbf16, #tpu.memory_space<vmem>>, vector<16x32xbf16>,
    %27 = arith.truncf %22 : vector<16x32xf32> to vector<16x32xbf16>
    %c0_17 = arith.constant 0 : index
    %c64 = arith.constant 64 : index
    %28 = vector.load %arg9[%c0_17, %c64] : memref<16x96xbf16, #tpu.memory_space<vmem>>, vector<16x32xbf16>
    tpu.vector_store %arg9[%c0_17, %c64], %27 {strides = array<i32>} : memref<16x96xbf16, #tpu.memory_space<vmem>>, vector<16x32xbf16>,
    %c0_18 = arith.constant 0 : index
    %c0_19 = arith.constant 0 : index
    %29 = vector.load %arg9[%c0_18, %c0_19] : memref<16x96xbf16, #tpu.memory_space<vmem>>, vector<16x8xbf16>
    %30 = vector.shape_cast %29 : vector<16x8xbf16> to vector<2x8x8xbf16>
    %c0_20 = arith.constant 0 : index
    %c32_21 = arith.constant 32 : index
    %31 = vector.load %arg9[%c0_20, %c32_21] : memref<16x96xbf16, #tpu.memory_space<vmem>>, vector<16x8xbf16>
    %32 = vector.shape_cast %31 : vector<16x8xbf16> to vector<2x8x8xbf16>
    %c0_22 = arith.constant 0 : index
    %c64_23 = arith.constant 64 : index
    %33 = vector.load %arg9[%c0_22, %c64_23] : memref<16x96xbf16, #tpu.memory_space<vmem>>, vector<16x8xbf16>
    %34 = vector.shape_cast %33 : vector<16x8xbf16> to vector<2x8x8xbf16>
    "tpu.trace_start"() <{level = 10 : i32, message = "bqd,bkd->bqk"}> : () -> ()
    %cst_24 = arith.constant dense<0.000000e+00> : vector<2x8x8xf32>
    %35 = tpu.matmul %30, %32, %cst_24 {dimension_numbers = #tpu.dot_dimension_numbers<[2], [2], [1], [1], [0, 0, 0, 1, 1, 1], [0], [0]>} : vector<2x8x8xbf16>, vector<2x8x8xbf16>, vector<2x8x8xf32> -> vector<2x8x8xf32>
    "tpu.trace_stop"() : () -> ()
    %cst_25 = arith.constant dense<0xFF800000> : vector<2x8xf32>
    %36 = vector.multi_reduction <maximumf>, %35, %cst_25 [2] : vector<2x8x8xf32> to vector<2x8xf32>
    %37 = vector.shape_cast %36 : vector<2x8xf32> to vector<2x8x1xf32>
    %38 = vector.broadcast %37 : vector<2x8x1xf32> to vector<2x8x8xf32>
    %39 = arith.subf %35, %38 : vector<2x8x8xf32>
    %40 = math.exp %39 : vector<2x8x8xf32>
    %cst_26 = arith.constant dense<0.000000e+00> : vector<2x8xf32>
    %41 = vector.multi_reduction <add>, %40, %cst_26 [2] : vector<2x8x8xf32> to vector<2x8xf32>
    %42 = vector.shape_cast %41 : vector<2x8xf32> to vector<2x8x1xf32>
    %43 = tpu.reciprocal %42 {approx = true} : vector<2x8x1xf32> -> vector<2x8x1xf32>
    %44 = vector.broadcast %43 : vector<2x8x1xf32> to vector<2x8x8xf32>
    %45 = arith.mulf %40, %44 : vector<2x8x8xf32>
    %46 = arith.truncf %45 : vector<2x8x8xf32> to vector<2x8x8xbf16>
    "tpu.trace_start"() <{level = 10 : i32, message = "bqk,bkd->bqd"}> : () -> ()
    %cst_27 = arith.constant dense<0.000000e+00> : vector<2x8x8xf32>
    %47 = tpu.matmul %46, %34, %cst_27 {dimension_numbers = #tpu.dot_dimension_numbers<[2], [1], [1], [2], [0, 0, 0, 1, 1, 2], [0], [0]>} : vector<2x8x8xbf16>, vector<2x8x8xbf16>, vector<2x8x8xf32> -> vector<2x8x8xf32>
    "tpu.trace_stop"() : () -> ()
    %48 = vector.shape_cast %47 : vector<2x8x8xf32> to vector<16x8xf32>
    %49 = arith.truncf %48 : vector<16x8xf32> to vector<16x8xbf16>
    %c0_28 = arith.constant 0 : index
    %c0_29 = arith.constant 0 : index
    %50 = vector.load %arg10[%c0_28, %c0_29] : memref<16x32xbf16, #tpu.memory_space<vmem>>, vector<16x8xbf16>
    tpu.vector_store %arg10[%c0_28, %c0_29], %49 {strides = array<i32>} : memref<16x32xbf16, #tpu.memory_space<vmem>>, vector<16x8xbf16>,
    %c0_30 = arith.constant 0 : index
    %c8 = arith.constant 8 : index
    %51 = vector.load %arg9[%c0_30, %c8] : memref<16x96xbf16, #tpu.memory_space<vmem>>, vector<16x8xbf16>
    %52 = vector.shape_cast %51 : vector<16x8xbf16> to vector<2x8x8xbf16>
    %c0_31 = arith.constant 0 : index
    %c40 = arith.constant 40 : index
    %53 = vector.load %arg9[%c0_31, %c40] : memref<16x96xbf16, #tpu.memory_space<vmem>>, vector<16x8xbf16>
    %54 = vector.shape_cast %53 : vector<16x8xbf16> to vector<2x8x8xbf16>
    %c0_32 = arith.constant 0 : index
    %c72 = arith.constant 72 : index
    %55 = vector.load %arg9[%c0_32, %c72] : memref<16x96xbf16, #tpu.memory_space<vmem>>, vector<16x8xbf16>
    %56 = vector.shape_cast %55 : vector<16x8xbf16> to vector<2x8x8xbf16>
    "tpu.trace_start"() <{level = 10 : i32, message = "bqd,bkd->bqk"}> : () -> ()
    %cst_33 = arith.constant dense<0.000000e+00> : vector<2x8x8xf32>
    %57 = tpu.matmul %52, %54, %cst_33 {dimension_numbers = #tpu.dot_dimension_numbers<[2], [2], [1], [1], [0, 0, 0, 1, 1, 1], [0], [0]>} : vector<2x8x8xbf16>, vector<2x8x8xbf16>, vector<2x8x8xf32> -> vector<2x8x8xf32>
    "tpu.trace_stop"() : () -> ()
    %cst_34 = arith.constant dense<0xFF800000> : vector<2x8xf32>
    %58 = vector.multi_reduction <maximumf>, %57, %cst_34 [2] : vector<2x8x8xf32> to vector<2x8xf32>
    %59 = vector.shape_cast %58 : vector<2x8xf32> to vector<2x8x1xf32>
    %60 = vector.broadcast %59 : vector<2x8x1xf32> to vector<2x8x8xf32>
    %61 = arith.subf %57, %60 : vector<2x8x8xf32>
    %62 = math.exp %61 : vector<2x8x8xf32>
    %cst_35 = arith.constant dense<0.000000e+00> : vector<2x8xf32>
    %63 = vector.multi_reduction <add>, %62, %cst_35 [2] : vector<2x8x8xf32> to vector<2x8xf32>
    %64 = vector.shape_cast %63 : vector<2x8xf32> to vector<2x8x1xf32>
    %65 = tpu.reciprocal %64 {approx = true} : vector<2x8x1xf32> -> vector<2x8x1xf32>
    %66 = vector.broadcast %65 : vector<2x8x1xf32> to vector<2x8x8xf32>
    %67 = arith.mulf %62, %66 : vector<2x8x8xf32>
    %68 = arith.truncf %67 : vector<2x8x8xf32> to vector<2x8x8xbf16>
    "tpu.trace_start"() <{level = 10 : i32, message = "bqk,bkd->bqd"}> : () -> ()
    %cst_36 = arith.constant dense<0.000000e+00> : vector<2x8x8xf32>
    %69 = tpu.matmul %68, %56, %cst_36 {dimension_numbers = #tpu.dot_dimension_numbers<[2], [1], [1], [2], [0, 0, 0, 1, 1, 2], [0], [0]>} : vector<2x8x8xbf16>, vector<2x8x8xbf16>, vector<2x8x8xf32> -> vector<2x8x8xf32>
    "tpu.trace_stop"() : () -> ()
    %70 = vector.shape_cast %69 : vector<2x8x8xf32> to vector<16x8xf32>
    %71 = arith.truncf %70 : vector<16x8xf32> to vector<16x8xbf16>
    %c0_37 = arith.constant 0 : index
    %c8_38 = arith.constant 8 : index
    %72 = vector.load %arg10[%c0_37, %c8_38] : memref<16x32xbf16, #tpu.memory_space<vmem>>, vector<16x8xbf16>
    tpu.vector_store %arg10[%c0_37, %c8_38], %71 {strides = array<i32>} : memref<16x32xbf16, #tpu.memory_space<vmem>>, vector<16x8xbf16>,
    %c0_39 = arith.constant 0 : index
    %c16 = arith.constant 16 : index
    %73 = vector.load %arg9[%c0_39, %c16] : memref<16x96xbf16, #tpu.memory_space<vmem>>, vector<16x8xbf16>
    %74 = vector.shape_cast %73 : vector<16x8xbf16> to vector<2x8x8xbf16>
    %c0_40 = arith.constant 0 : index
    %c48 = arith.constant 48 : index
    %75 = vector.load %arg9[%c0_40, %c48] : memref<16x96xbf16, #tpu.memory_space<vmem>>, vector<16x8xbf16>
    %76 = vector.shape_cast %75 : vector<16x8xbf16> to vector<2x8x8xbf16>
    %c0_41 = arith.constant 0 : index
    %c80 = arith.constant 80 : index
    %77 = vector.load %arg9[%c0_41, %c80] : memref<16x96xbf16, #tpu.memory_space<vmem>>, vector<16x8xbf16>
    %78 = vector.shape_cast %77 : vector<16x8xbf16> to vector<2x8x8xbf16>
    "tpu.trace_start"() <{level = 10 : i32, message = "bqd,bkd->bqk"}> : () -> ()
    %cst_42 = arith.constant dense<0.000000e+00> : vector<2x8x8xf32>
    %79 = tpu.matmul %74, %76, %cst_42 {dimension_numbers = #tpu.dot_dimension_numbers<[2], [2], [1], [1], [0, 0, 0, 1, 1, 1], [0], [0]>} : vector<2x8x8xbf16>, vector<2x8x8xbf16>, vector<2x8x8xf32> -> vector<2x8x8xf32>
    "tpu.trace_stop"() : () -> ()
    %cst_43 = arith.constant dense<0xFF800000> : vector<2x8xf32>
    %80 = vector.multi_reduction <maximumf>, %79, %cst_43 [2] : vector<2x8x8xf32> to vector<2x8xf32>
    %81 = vector.shape_cast %80 : vector<2x8xf32> to vector<2x8x1xf32>
    %82 = vector.broadcast %81 : vector<2x8x1xf32> to vector<2x8x8xf32>
    %83 = arith.subf %79, %82 : vector<2x8x8xf32>
    %84 = math.exp %83 : vector<2x8x8xf32>
    %cst_44 = arith.constant dense<0.000000e+00> : vector<2x8xf32>
    %85 = vector.multi_reduction <add>, %84, %cst_44 [2] : vector<2x8x8xf32> to vector<2x8xf32>
    %86 = vector.shape_cast %85 : vector<2x8xf32> to vector<2x8x1xf32>
    %87 = tpu.reciprocal %86 {approx = true} : vector<2x8x1xf32> -> vector<2x8x1xf32>
    %88 = vector.broadcast %87 : vector<2x8x1xf32> to vector<2x8x8xf32>
    %89 = arith.mulf %84, %88 : vector<2x8x8xf32>
    %90 = arith.truncf %89 : vector<2x8x8xf32> to vector<2x8x8xbf16>
    "tpu.trace_start"() <{level = 10 : i32, message = "bqk,bkd->bqd"}> : () -> ()
    %cst_45 = arith.constant dense<0.000000e+00> : vector<2x8x8xf32>
    %91 = tpu.matmul %90, %78, %cst_45 {dimension_numbers = #tpu.dot_dimension_numbers<[2], [1], [1], [2], [0, 0, 0, 1, 1, 2], [0], [0]>} : vector<2x8x8xbf16>, vector<2x8x8xbf16>, vector<2x8x8xf32> -> vector<2x8x8xf32>
    "tpu.trace_stop"() : () -> ()
    %92 = vector.shape_cast %91 : vector<2x8x8xf32> to vector<16x8xf32>
    %93 = arith.truncf %92 : vector<16x8xf32> to vector<16x8xbf16>
    %c0_46 = arith.constant 0 : index
    %c16_47 = arith.constant 16 : index
    %94 = vector.load %arg10[%c0_46, %c16_47] : memref<16x32xbf16, #tpu.memory_space<vmem>>, vector<16x8xbf16>
    tpu.vector_store %arg10[%c0_46, %c16_47], %93 {strides = array<i32>} : memref<16x32xbf16, #tpu.memory_space<vmem>>, vector<16x8xbf16>,
    %c0_48 = arith.constant 0 : index
    %c24 = arith.constant 24 : index
    %95 = vector.load %arg9[%c0_48, %c24] : memref<16x96xbf16, #tpu.memory_space<vmem>>, vector<16x8xbf16>
    %96 = vector.shape_cast %95 : vector<16x8xbf16> to vector<2x8x8xbf16>
    %c0_49 = arith.constant 0 : index
    %c56 = arith.constant 56 : index
    %97 = vector.load %arg9[%c0_49, %c56] : memref<16x96xbf16, #tpu.memory_space<vmem>>, vector<16x8xbf16>
    %98 = vector.shape_cast %97 : vector<16x8xbf16> to vector<2x8x8xbf16>
    %c0_50 = arith.constant 0 : index
    %c88 = arith.constant 88 : index
    %99 = vector.load %arg9[%c0_50, %c88] : memref<16x96xbf16, #tpu.memory_space<vmem>>, vector<16x8xbf16>
    %100 = vector.shape_cast %99 : vector<16x8xbf16> to vector<2x8x8xbf16>
    "tpu.trace_start"() <{level = 10 : i32, message = "bqd,bkd->bqk"}> : () -> ()
    %cst_51 = arith.constant dense<0.000000e+00> : vector<2x8x8xf32>
    %101 = tpu.matmul %96, %98, %cst_51 {dimension_numbers = #tpu.dot_dimension_numbers<[2], [2], [1], [1], [0, 0, 0, 1, 1, 1], [0], [0]>} : vector<2x8x8xbf16>, vector<2x8x8xbf16>, vector<2x8x8xf32> -> vector<2x8x8xf32>
    "tpu.trace_stop"() : () -> ()
    %cst_52 = arith.constant dense<0xFF800000> : vector<2x8xf32>
    %102 = vector.multi_reduction <maximumf>, %101, %cst_52 [2] : vector<2x8x8xf32> to vector<2x8xf32>
    %103 = vector.shape_cast %102 : vector<2x8xf32> to vector<2x8x1xf32>
    %104 = vector.broadcast %103 : vector<2x8x1xf32> to vector<2x8x8xf32>
    %105 = arith.subf %101, %104 : vector<2x8x8xf32>
    %106 = math.exp %105 : vector<2x8x8xf32>
    %cst_53 = arith.constant dense<0.000000e+00> : vector<2x8xf32>
    %107 = vector.multi_reduction <add>, %106, %cst_53 [2] : vector<2x8x8xf32> to vector<2x8xf32>
    %108 = vector.shape_cast %107 : vector<2x8xf32> to vector<2x8x1xf32>
    %109 = tpu.reciprocal %108 {approx = true} : vector<2x8x1xf32> -> vector<2x8x1xf32>
    %110 = vector.broadcast %109 : vector<2x8x1xf32> to vector<2x8x8xf32>
    %111 = arith.mulf %106, %110 : vector<2x8x8xf32>
    %112 = arith.truncf %111 : vector<2x8x8xf32> to vector<2x8x8xbf16>
    "tpu.trace_start"() <{level = 10 : i32, message = "bqk,bkd->bqd"}> : () -> ()
    %cst_54 = arith.constant dense<0.000000e+00> : vector<2x8x8xf32>
    %113 = tpu.matmul %112, %100, %cst_54 {dimension_numbers = #tpu.dot_dimension_numbers<[2], [1], [1], [2], [0, 0, 0, 1, 1, 2], [0], [0]>} : vector<2x8x8xbf16>, vector<2x8x8xbf16>, vector<2x8x8xf32> -> vector<2x8x8xf32>
    "tpu.trace_stop"() : () -> ()
    %114 = vector.shape_cast %113 : vector<2x8x8xf32> to vector<16x8xf32>
    %115 = arith.truncf %114 : vector<16x8xf32> to vector<16x8xbf16>
    %c0_55 = arith.constant 0 : index
    %c24_56 = arith.constant 24 : index
    %116 = vector.load %arg10[%c0_55, %c24_56] : memref<16x32xbf16, #tpu.memory_space<vmem>>, vector<16x8xbf16>
    tpu.vector_store %arg10[%c0_55, %c24_56], %115 {strides = array<i32>} : memref<16x32xbf16, #tpu.memory_space<vmem>>, vector<16x8xbf16>,
    %c0_57 = arith.constant 0 : index
    %c0_58 = arith.constant 0 : index
    %117 = vector.load %arg10[%c0_57, %c0_58] : memref<16x32xbf16, #tpu.memory_space<vmem>>, vector<16x32xbf16>
    %c0_59 = arith.constant 0 : index
    %c0_60 = arith.constant 0 : index
    %118 = vector.load %arg6[%c0_59, %c0_60] : memref<32x32xbf16, #tpu.memory_space<vmem>>, vector<32x32xbf16>
    %cst_61 = arith.constant dense<0.000000e+00> : vector<16x32xf32>
    %119 = tpu.matmul %117, %118, %cst_61 {dimension_numbers = #tpu.dot_dimension_numbers<[1], [0], [0], [1], [0, 0, 1, 1], [], []>} : vector<16x32xbf16>, vector<32x32xbf16>, vector<16x32xf32> -> vector<16x32xf32>
    %c0_62 = arith.constant 0 : index
    %c0_63 = arith.constant 0 : index
    %120 = vector.load %arg7[%c0_62, %c0_63] : memref<1x32xf32, #tpu.memory_space<vmem>>, vector<1x32xf32>
    %121 = vector.broadcast %120 : vector<1x32xf32> to vector<16x32xf32>
    %122 = arith.addf %119, %121 : vector<16x32xf32>
    %123 = vector.shape_cast %122 : vector<16x32xf32> to vector<2x8x32xf32>
    %c0_64 = arith.constant 0 : index
    %c0_65 = arith.constant 0 : index
    %c0_66 = arith.constant 0 : index
    %124 = vector.load %arg8[%c0_64, %c0_65, %c0_66] : memref<2x8x32xf32, #tpu.memory_space<vmem>>, vector<2x8x32xf32>
    tpu.vector_store %arg8[%c0_64, %c0_65, %c0_66], %123 {strides = array<i32>} : memref<2x8x32xf32, #tpu.memory_space<vmem>>, vector<2x8x32xf32>,
    return
  }
  func.func @transform_0(%arg0: i32) -> (i32, i32, i32) {
    %c0_i32 = arith.constant 0 : i32
    %c0_i32_0 = arith.constant 0 : i32
    %c0_i32_1 = arith.constant 0 : i32
    return %arg0, %c0_i32, %c0_i32_0 : i32, i32, i32
  }
  func.func @transform_1(%arg0: i32) -> (i32, i32, i32) {
    %c0_i32 = arith.constant 0 : i32
    %c0_i32_0 = arith.constant 0 : i32
    %c0_i32_1 = arith.constant 0 : i32
    return %arg0, %c0_i32, %c0_i32_0 : i32, i32, i32
  }
  func.func @transform_2(%arg0: i32) -> (i32, i32, i32) {
    %c0_i32 = arith.constant 0 : i32
    %c0_i32_0 = arith.constant 0 : i32
    %c0_i32_1 = arith.constant 0 : i32
    return %arg0, %c0_i32, %c0_i32_0 : i32, i32, i32
  }
  func.func @transform_3(%arg0: i32) -> (i32, i32) {
    %c0_i32 = arith.constant 0 : i32
    %c0_i32_0 = arith.constant 0 : i32
    %c0_i32_1 = arith.constant 0 : i32
    return %c0_i32, %c0_i32_0 : i32, i32
  }
  func.func @transform_4(%arg0: i32) -> (i32, i32) {
    %c0_i32 = arith.constant 0 : i32
    %c0_i32_0 = arith.constant 0 : i32
    %c0_i32_1 = arith.constant 0 : i32
    return %c0_i32, %c0_i32_0 : i32, i32
  }
  func.func @transform_5(%arg0: i32) -> (i32, i32) {
    %c0_i32 = arith.constant 0 : i32
    %c0_i32_0 = arith.constant 0 : i32
    %c0_i32_1 = arith.constant 0 : i32
    return %c0_i32, %c0_i32_0 : i32, i32
  }
  func.func @transform_6(%arg0: i32) -> (i32, i32) {
    %c0_i32 = arith.constant 0 : i32
    %c0_i32_0 = arith.constant 0 : i32
    %c0_i32_1 = arith.constant 0 : i32
    return %c0_i32, %c0_i32_0 : i32, i32
  }
  func.func @transform_7(%arg0: i32) -> (i32, i32, i32) {
    %c0_i32 = arith.constant 0 : i32
    %c0_i32_0 = arith.constant 0 : i32
    %c0_i32_1 = arith.constant 0 : i32
    return %arg0, %c0_i32, %c0_i32_0 : i32, i32, i32
  }
}

</mosaic_0001>

<llo_original>
// kernel: tpu_custom_call.1
$region0: #{tpu_custom_call.1}
  #allocation0 [shape = 'u32[]', space=smem, size = 0x4, offset = 0x4, fixed_abs, tag = 'smem constant byte address 0x4 - core index']
  #allocation1 [shape = 'u32[144,128]{1,0:T(1,128)}', space=vmem, size = 0x12000, scoped, tag = 'internal scratch']
  #allocation2 [shape = 'bf16[16,96]{1,0:T(16,128)(2,1)}', space=vmem, size = 0x1000, scoped, tag = 'scratch operand']
  #allocation3 [shape = 'bf16[16,32]{1,0:T(16,128)(2,1)}', space=vmem, size = 0x1000, scoped, tag = 'scratch operand']
  %s0 = inlined_call_operand.hbm [shape: bf16[2,8,32], index: 0, kind: input, shape index: {}]
  %s1 = inlined_call_operand.hbm [shape: bf16[2,8,32], index: 1, kind: input, shape index: {}]
  %s2 = inlined_call_operand.hbm [shape: bf16[2,8,32], index: 2, kind: input, shape index: {}]
  %s3 = inlined_call_operand.hbm [shape: bf16[32,96], index: 3, kind: input, shape index: {}]
  %s4 = inlined_call_operand.vmem [shape: f32[1,96], index: 4, kind: input, shape index: {}]
  %s5 = inlined_call_operand.vmem [shape: bf16[32,32], index: 5, kind: input, shape index: {}]
  %s6 = inlined_call_operand.vmem [shape: f32[1,32], index: 6, kind: input, shape index: {}]
  %s7 = inlined_call_operand.hbm [shape: f32[2,8,32], index: 7, kind: output, shape index: {}]
  %s8 = sld [smem:[#allocation0]]
  $region54: #{tpu_custom_call.1} parent=0
    _
  %s10 = ssub.s32 1, %s8
  %s11 = scalar_select 0, %s10, %s8
  $region1: #{tpu_custom_call.1} parent=0
    #allocation4 [shape = 'u8[4096]{0}', space=vmem, size = 0x1000, scoped, tag = 'input window, operand 0, single buffered']
    #allocation5 [shape = 's32[1]{0}', space=sflag, size = 0x4, scoped, tag = 'scoped memory for tpu_custom_call.1']
    #allocation6 [shape = 's32[1]{0}', space=sflag, size = 0x4, scoped, tag = 'scoped memory for tpu_custom_call.1']
    #allocation7 [shape = 'u8[4096]{0}', space=vmem, size = 0x1000, scoped, tag = 'input window, operand 1, single buffered']
    #allocation8 [shape = 's32[1]{0}', space=sflag, size = 0x4, scoped, tag = 'scoped memory for tpu_custom_call.1']
    #allocation9 [shape = 'u8[4096]{0}', space=vmem, size = 0x1000, scoped, tag = 'input window, operand 2, single buffered']
    #allocation10 [shape = 'u8[8192]{0}', space=vmem, size = 0x2000, scoped, tag = 'input window, operand 3, single buffered']
    #allocation11 [shape = 's32[1]{0}', space=sflag, size = 0x4, scoped, tag = 'scoped memory for tpu_custom_call.1']
    #allocation12 [shape = 'u8[8192]{0}', space=vmem, size = 0x2000, scoped, tag = 'output window, operand 0, single buffered']
    %12 = vsyncpa [#allocation5], 0
    %13 = vsyncpa [#allocation8], 0
    %14 = vsyncpa [#allocation11], 0
    %15 = vsyncpa [#allocation6], 0
    // Predicated region
    $region2: #{tpu_custom_call.1} parent=1 // pred_check
      _
    $region3: #{tpu_custom_call.1} parent=1 // pred_check_branch
      %17 = sbr.rel (0) target = $region5
    $region4: #{tpu_custom_call.1} parent=1 // pred_region
      %s19 = ssub.s32 128, 128
      %20 = vsyncadd [#allocation5], %s19
      %s21 = sshll.u32 [#allocation4], 4
      %s22 = int_to_ptr.vmem [resolvable:$true] %s21
      %27 = dma.hbm_to_vmem [thread:$0]  %s0, 128, %s22, [#allocation5], 64, 64, 4
    $region5: #{tpu_custom_call.1} parent=1 // pred_fallthru
      _
    // Predicated region
    $region6: #{tpu_custom_call.1} parent=1 // pred_check
      _
    $region7: #{tpu_custom_call.1} parent=1 // pred_check_branch
      %29 = sbr.rel (0) target = $region9
    $region8: #{tpu_custom_call.1} parent=1 // pred_region
      %s31 = ssub.s32 128, 128
      %32 = vsyncadd [#allocation8], %s31
      %s33 = sshll.u32 [#allocation7], 4
      %s34 = int_to_ptr.vmem [resolvable:$true] %s33
      %39 = dma.hbm_to_vmem [thread:$0]  %s1, 128, %s34, [#allocation8], 64, 64, 4
    $region9: #{tpu_custom_call.1} parent=1 // pred_fallthru
      _
    // Predicated region
    $region10: #{tpu_custom_call.1} parent=1 // pred_check
      _
    $region11: #{tpu_custom_call.1} parent=1 // pred_check_branch
      %41 = sbr.rel (0) target = $region13
    $region12: #{tpu_custom_call.1} parent=1 // pred_region
      %s43 = ssub.s32 128, 128
      %44 = vsyncadd [#allocation8], %s43
      %s45 = sshll.u32 [#allocation9], 4
      %s46 = int_to_ptr.vmem [resolvable:$true] %s45
      %51 = dma.hbm_to_vmem [thread:$0]  %s2, 128, %s46, [#allocation8], 64, 64, 4
    $region13: #{tpu_custom_call.1} parent=1 // pred_fallthru
      _
    // Predicated region
    $region14: #{tpu_custom_call.1} parent=1 // pred_check
      _
    $region15: #{tpu_custom_call.1} parent=1 // pred_check_branch
      %53 = sbr.rel (0) target = $region17
    $region16: #{tpu_custom_call.1} parent=1 // pred_region
      %s55 = ssub.s32 256, 256
      %56 = vsyncadd [#allocation11], %s55
      %s57 = sshll.u32 [#allocation10], 4
      %s58 = int_to_ptr.vmem [resolvable:$true] %s57
      %63 = dma.hbm_to_vmem [thread:$0]  %s3, 256, %s58, [#allocation11], 64, 64, 4
    $region17: #{tpu_custom_call.1} parent=1 // pred_fallthru
      _
    // Predicated region
    $region18: #{tpu_custom_call.1} parent=1 // pred_check
      _
    $region19: #{tpu_custom_call.1} parent=1 // pred_check_branch
      %65 = sbr.rel (0) target = $region21
    $region20: #{tpu_custom_call.1} parent=1 // pred_region
      _
    $region21: #{tpu_custom_call.1} parent=1 // pred_fallthru
      _
    // Predicated region
    $region22: #{tpu_custom_call.1} parent=1 // pred_check
      _
    $region23: #{tpu_custom_call.1} parent=1 // pred_check_branch
      %67 = sbr.rel (0) target = $region25
    $region24: #{tpu_custom_call.1} parent=1 // pred_region
      _
    $region25: #{tpu_custom_call.1} parent=1 // pred_fallthru
      _
    // Predicated region
    $region26: #{tpu_custom_call.1} parent=1 // pred_check
      _
    $region27: #{tpu_custom_call.1} parent=1 // pred_check_branch
      %69 = sbr.rel (0) target = $region29
    $region28: #{tpu_custom_call.1} parent=1 // pred_region
      _
    $region29: #{tpu_custom_call.1} parent=1 // pred_fallthru
      _
    // Predicated region
    $region30: #{tpu_custom_call.1} parent=1 // pred_check
      _
    $region31: #{tpu_custom_call.1} parent=1 // pred_check_branch
      %71 = sbr.rel (0) target = $region33
    $region32: #{tpu_custom_call.1} parent=1 // pred_region
      %72 = dma.done [#allocation5], 128
    $region33: #{tpu_custom_call.1} parent=1 // pred_fallthru
      _
    // Predicated region
    $region34: #{tpu_custom_call.1} parent=1 // pred_check
      _
    $region35: #{tpu_custom_call.1} parent=1 // pred_check_branch
      %74 = sbr.rel (0) target = $region37
    $region36: #{tpu_custom_call.1} parent=1 // pred_region
      %75 = dma.done [#allocation8], 128
    $region37: #{tpu_custom_call.1} parent=1 // pred_fallthru
      _
    // Predicated region
    $region38: #{tpu_custom_call.1} parent=1 // pred_check
      _
    $region39: #{tpu_custom_call.1} parent=1 // pred_check_branch
      %77 = sbr.rel (0) target = $region41
    $region40: #{tpu_custom_call.1} parent=1 // pred_region
      %78 = dma.done [#allocation8], 128
    $region41: #{tpu_custom_call.1} parent=1 // pred_fallthru
      _
    // Predicated region
    $region42: #{tpu_custom_call.1} parent=1 // pred_check
      _
    $region43: #{tpu_custom_call.1} parent=1 // pred_check_branch
      %80 = sbr.rel (0) target = $region45
    $region44: #{tpu_custom_call.1} parent=1 // pred_region
      %81 = dma.done [#allocation11], 256
    $region45: #{tpu_custom_call.1} parent=1 // pred_fallthru
      _
    %v83 = vld [vmem:[#allocation10] sm:$0xf]
    %v84 = vld [vmem:[#allocation10 + $0x4] sm:$0xf]
    %v85 = vld [vmem:[#allocation10 + $0x8] sm:$0xf]
    %v86 = vld [vmem:[#allocation10 + $0xc] sm:$0xf]
    %v87 = vld [vmem:[%s4] sm:$0x1]
    %v88 = vld [vmem:[#allocation4] sm:$0xf]
    %v89 = vld [vmem:[#allocation4 + $0x4] sm:$0xf]
    %v90 = vld [vmem:[#allocation7] sm:$0xf]
    %v91 = vld [vmem:[#allocation7 + $0x4] sm:$0xf]
    %v92 = vld [vmem:[#allocation9] sm:$0xf]
    %v93 = vld [vmem:[#allocation9 + $0x4] sm:$0xf]
    %v95 = vlaneseq
    %v96 = vshrl.u32 %v95, 7
    %v97 = vsub.s32 0, %v96
    %v98 = vrot.slane %v87, %v97
    %v102 = vunpack.c.l.b16 %v88
    %v103 = vunpack.c.l.b16 %v89
    %v104 = vpack.c.b16 %v103, %v102
    %v109 = vunpack.c.l.b16 %v83
    %v110 = vunpack.c.l.b16 %v84
    %v111 = vunpack.c.l.b16 %v85
    %v112 = vunpack.c.l.b16 %v86
    %v113 = vpack.c.b16 %v110, %v109
    %v114 = vpack.c.b16 %v112, %v111
    %vm117 = vcmask 261120
    %v119 = vsel %vm117, %v104, 0
    %121 = vmatprep.subr.bf16.mxu0 0
    %122 = vmatpush1.bf16.msra.mxu0 %v113
    %123 = vmatprep.subr.bf16.mxu0 0
    %124 = vmatpush1.bf16.msra.mxu0 %v114
    %125 = vmatprep.subr.bf16.mxu0 0
    %126 = vmatpush1.bf16.msra.mxu0 0
    %127 = vmatprep.subr.bf16.mxu0 0
    %128 = vmatpush1.bf16.msra.mxu0 0
    %129 = vmatprep.subr.bf16.mxu0 0
    %130 = vmatpush1.bf16.msra.mxu0 0
    %131 = vmatprep.subr.bf16.mxu0 0
    %132 = vmatpush1.bf16.msra.mxu0 0
    %133 = vmatprep.subr.bf16.mxu0 0
    %134 = vmatpush1.bf16.msra.mxu0 0
    %135 = vmatprep.subr.bf16.mxu0 0
    %136 = vmatpush1.bf16.msra.mxu0 0
    %137 = vmatprep.subr.bf16.mxu0 0
    %138 = vmatpush1.bf16.msra.mxu0 0
    %139 = vmatprep.subr.bf16.mxu0 0
    %140 = vmatpush1.bf16.msra.mxu0 0
    %141 = vmatprep.subr.bf16.mxu0 0
    %142 = vmatpush1.bf16.msra.mxu0 0
    %143 = vmatprep.subr.bf16.mxu0 0
    %144 = vmatpush1.bf16.msra.mxu0 0
    %145 = vmatprep.subr.bf16.mxu0 0
    %146 = vmatpush1.bf16.msra.mxu0 0
    %147 = vmatprep.subr.bf16.mxu0 0
    %148 = vmatpush1.bf16.msra.mxu0 0
    %149 = vmatprep.subr.bf16.mxu0 0
    %150 = vmatpush1.bf16.msra.mxu0 0
    %151 = vmatprep.subr.bf16.mxu0 0
    %152 = vmatpush1.bf16.msra.mxu0 0
    %153 = vmatprep.mubr.bf16.mxu0 0
    %154 = vmatmul.mubr.bf16.gmra.mrb[0].mxu0 %v119
    %v155 = vpop.f32.mrb[0].mxu0
    %v156 = vadd.f32 %v98, %v155
    %v157 = vpop.f32.mrb[0].mxu0
    %v158 = vpop.f32.mrb[0].mxu0
    %v159 = vadd.f32 %v98, %v158
    %v160 = vpop.f32.mrb[0].mxu0
    %161 = vdwg.mxu0
    %v164 = vunpack.c.l.b16 %v90
    %v165 = vunpack.c.l.b16 %v91
    %v166 = vpack.c.b16 %v165, %v164
    %167 = vrot.lane.b32.xlu0 %v113, 96
    %v168 = vpop.permute.xlu0 %167
    %169 = vrot.lane.b32.xlu0 %v114, 96
    %v170 = vpop.permute.xlu0 %169
    %173 = vrot.lane.b32.xlu0 %v98, 96
    %v174 = vpop.permute.xlu0 %173
    %v177 = vsel %vm117, %v166, 0
    %179 = vmatprep.subr.bf16.mxu0 0
    %180 = vmatpush1.bf16.msra.mxu0 %v168
    %181 = vmatprep.subr.bf16.mxu0 0
    %182 = vmatpush1.bf16.msra.mxu0 %v170
    %183 = vmatprep.subr.bf16.mxu0 0
    %184 = vmatpush1.bf16.msra.mxu0 0
    %185 = vmatprep.subr.bf16.mxu0 0
    %186 = vmatpush1.bf16.msra.mxu0 0
    %187 = vmatprep.subr.bf16.mxu0 0
    %188 = vmatpush1.bf16.msra.mxu0 0
    %189 = vmatprep.subr.bf16.mxu0 0
    %190 = vmatpush1.bf16.msra.mxu0 0
    %191 = vmatprep.subr.bf16.mxu0 0
    %192 = vmatpush1.bf16.msra.mxu0 0
    %193 = vmatprep.subr.bf16.mxu0 0
    %194 = vmatpush1.bf16.msra.mxu0 0
    %195 = vmatprep.subr.bf16.mxu0 0
    %196 = vmatpush1.bf16.msra.mxu0 0
    %197 = vmatprep.subr.bf16.mxu0 0
    %198 = vmatpush1.bf16.msra.mxu0 0
    %199 = vmatprep.subr.bf16.mxu0 0
    %200 = vmatpush1.bf16.msra.mxu0 0
    %201 = vmatprep.subr.bf16.mxu0 0
    %202 = vmatpush1.bf16.msra.mxu0 0
    %203 = vmatprep.subr.bf16.mxu0 0
    %204 = vmatpush1.bf16.msra.mxu0 0
    %205 = vmatprep.subr.bf16.mxu0 0
    %206 = vmatpush1.bf16.msra.mxu0 0
    %207 = vmatprep.subr.bf16.mxu0 0
    %208 = vmatpush1.bf16.msra.mxu0 0
    %209 = vmatprep.subr.bf16.mxu0 0
    %210 = vmatpush1.bf16.msra.mxu0 0
    %211 = vmatprep.mubr.bf16.mxu0 0
    %212 = vmatmul.mubr.bf16.gmra.mrb[0].mxu0 %v177
    %v213 = vpop.f32.mrb[0].mxu0
    %v214 = vadd.f32 %v174, %v213
    %v215 = vpop.f32.mrb[0].mxu0
    %v216 = vpop.f32.mrb[0].mxu0
    %v217 = vadd.f32 %v174, %v216
    %v218 = vpop.f32.mrb[0].mxu0
    %219 = vdwg.mxu0
    %v222 = vunpack.c.l.b16 %v92
    %v223 = vunpack.c.l.b16 %v93
    %v224 = vpack.c.b16 %v223, %v222
    %225 = vrot.lane.b32.xlu0 %v113, 64
    %v226 = vpop.permute.xlu0 %225
    %227 = vrot.lane.b32.xlu0 %v114, 64
    %v228 = vpop.permute.xlu0 %227
    %231 = vrot.lane.b32.xlu0 %v98, 64
    %v232 = vpop.permute.xlu0 %231
    %v235 = vsel %vm117, %v224, 0
    %237 = vmatprep.subr.bf16.mxu0 0
    %238 = vmatpush1.bf16.msra.mxu0 %v226
    %239 = vmatprep.subr.bf16.mxu0 0
    %240 = vmatpush1.bf16.msra.mxu0 %v228
    %241 = vmatprep.subr.bf16.mxu0 0
    %242 = vmatpush1.bf16.msra.mxu0 0
    %243 = vmatprep.subr.bf16.mxu0 0
    %244 = vmatpush1.bf16.msra.mxu0 0
    %245 = vmatprep.subr.bf16.mxu0 0
    %246 = vmatpush1.bf16.msra.mxu0 0
    %247 = vmatprep.subr.bf16.mxu0 0
    %248 = vmatpush1.bf16.msra.mxu0 0
    %249 = vmatprep.subr.bf16.mxu0 0
    %250 = vmatpush1.bf16.msra.mxu0 0
    %251 = vmatprep.subr.bf16.mxu0 0
    %252 = vmatpush1.bf16.msra.mxu0 0
    %253 = vmatprep.subr.bf16.mxu0 0
    %254 = vmatpush1.bf16.msra.mxu0 0
    %255 = vmatprep.subr.bf16.mxu0 0
    %256 = vmatpush1.bf16.msra.mxu0 0
    %257 = vmatprep.subr.bf16.mxu0 0
    %258 = vmatpush1.bf16.msra.mxu0 0
    %259 = vmatprep.subr.bf16.mxu0 0
    %260 = vmatpush1.bf16.msra.mxu0 0
    %261 = vmatprep.subr.bf16.mxu0 0
    %262 = vmatpush1.bf16.msra.mxu0 0
    %263 = vmatprep.subr.bf16.mxu0 0
    %264 = vmatpush1.bf16.msra.mxu0 0
    %265 = vmatprep.subr.bf16.mxu0 0
    %266 = vmatpush1.bf16.msra.mxu0 0
    %267 = vmatprep.subr.bf16.mxu0 0
    %268 = vmatpush1.bf16.msra.mxu0 0
    %269 = vmatprep.mubr.bf16.mxu0 0
    %270 = vmatmul.mubr.bf16.gmra.mrb[0].mxu0 %v235
    %v271 = vpop.f32.mrb[0].mxu0
    %v272 = vadd.f32 %v232, %v271
    %v273 = vpop.f32.mrb[0].mxu0
    %v274 = vpop.f32.mrb[0].mxu0
    %v275 = vadd.f32 %v232, %v274
    %v276 = vpop.f32.mrb[0].mxu0
    %277 = vdwg.mxu0
    %v278 = vpack.c.bf16 %v159, %v156
    %279 = vst.msk [vmem:[#allocation2] sm:$0xff] %vm117, %v278
    %v280 = vpack.c.bf16 %v217, %v214
    %282 = vrot.lane.b32.xlu0 %v280, 32
    %v283 = vpop.permute.xlu0 %282
    %vm285 = vcmask 523520
    %286 = vst.msk [vmem:[#allocation2] sm:$0xff] %vm285, %v283
    %v287 = vpack.c.bf16 %v275, %v272
    %289 = vrot.lane.b32.xlu0 %v287, 64
    %v290 = vpop.permute.xlu0 %289
    %vm292 = vcmask 785920
    %293 = vst.msk [vmem:[#allocation2] sm:$0xff] %vm292, %v290
    %v294 = vld [vmem:[#allocation2] sm:$0xff]
    %v296 = vunpack.c.l.b16 %v294
    %v297 = vunpack.c.h.b16 %v294
    %v298 = vpack.c.b16 %v296, %v296
    %v299 = vpack.c.b16 %v297, %v297
    %300 = vrot.lane.b32.xlu0 %v298, 96
    %v301 = vpop.permute.xlu0 %300
    %vm302 = vcmask 64512
    %v304 = vsel %vm302, %v298, 0
    %v307 = vsel %vm302, %v301, 0
    %309 = vmatprep.subr.bf16.mxu0 0
    %310 = vmatpush1.bf16.xpose.msra.mxu0 %v307
    %311 = vmatprep.subr.bf16.mxu0 0
    %312 = vmatpush1.bf16.xpose.msra.mxu0 0
    %313 = vmatprep.subr.bf16.mxu0 0
    %314 = vmatpush1.bf16.xpose.msra.mxu0 0
    %315 = vmatprep.subr.bf16.mxu0 0
    %316 = vmatpush1.bf16.xpose.msra.mxu0 0
    %317 = vmatprep.subr.bf16.mxu0 0
    %318 = vmatpush1.bf16.xpose.msra.mxu0 0
    %319 = vmatprep.subr.bf16.mxu0 0
    %320 = vmatpush1.bf16.xpose.msra.mxu0 0
    %321 = vmatprep.subr.bf16.mxu0 0
    %322 = vmatpush1.bf16.xpose.msra.mxu0 0
    %323 = vmatprep.subr.bf16.mxu0 0
    %324 = vmatpush1.bf16.xpose.msra.mxu0 0
    %325 = vmatprep.subr.bf16.mxu0 0
    %326 = vmatpush1.bf16.xpose.msra.mxu0 0
    %327 = vmatprep.subr.bf16.mxu0 0
    %328 = vmatpush1.bf16.xpose.msra.mxu0 0
    %329 = vmatprep.subr.bf16.mxu0 0
    %330 = vmatpush1.bf16.xpose.msra.mxu0 0
    %331 = vmatprep.subr.bf16.mxu0 0
    %332 = vmatpush1.bf16.xpose.msra.mxu0 0
    %333 = vmatprep.subr.bf16.mxu0 0
    %334 = vmatpush1.bf16.xpose.msra.mxu0 0
    %335 = vmatprep.subr.bf16.mxu0 0
    %336 = vmatpush1.bf16.xpose.msra.mxu0 0
    %337 = vmatprep.subr.bf16.mxu0 0
    %338 = vmatpush1.bf16.xpose.msra.mxu0 0
    %339 = vmatprep.subr.bf16.mxu0 0
    %340 = vmatpush1.bf16.xpose.msra.mxu0 0
    %341 = vmatprep.mubr.bf16.mxu0 0
    %342 = vmatmul.mubr.bf16.gmra.mrb[0].mxu0 %v304
    %v343 = vpop.f32.mrb[0].mxu0
    %v344 = vadd.f32 0.0, %v343
    %v345 = vpop.f32.mrb[0].mxu0
    %v346 = vpop.f32.mrb[0].mxu0
    %v347 = vpop.f32.mrb[0].mxu0
    %348 = vdwg.mxu0
    %349 = vrot.lane.b32.xlu0 %v299, 96
    %v350 = vpop.permute.xlu0 %349
    %v352 = vsel %vm302, %v299, 0
    %v355 = vsel %vm302, %v350, 0
    %357 = vmatprep.subr.bf16.mxu0 0
    %358 = vmatpush1.bf16.xpose.msra.mxu0 %v355
    %359 = vmatprep.subr.bf16.mxu0 0
    %360 = vmatpush1.bf16.xpose.msra.mxu0 0
    %361 = vmatprep.subr.bf16.mxu0 0
    %362 = vmatpush1.bf16.xpose.msra.mxu0 0
    %363 = vmatprep.subr.bf16.mxu0 0
    %364 = vmatpush1.bf16.xpose.msra.mxu0 0
    %365 = vmatprep.subr.bf16.mxu0 0
    %366 = vmatpush1.bf16.xpose.msra.mxu0 0
    %367 = vmatprep.subr.bf16.mxu0 0
    %368 = vmatpush1.bf16.xpose.msra.mxu0 0
    %369 = vmatprep.subr.bf16.mxu0 0
    %370 = vmatpush1.bf16.xpose.msra.mxu0 0
    %371 = vmatprep.subr.bf16.mxu0 0
    %372 = vmatpush1.bf16.xpose.msra.mxu0 0
    %373 = vmatprep.subr.bf16.mxu0 0
    %374 = vmatpush1.bf16.xpose.msra.mxu0 0
    %375 = vmatprep.subr.bf16.mxu0 0
    %376 = vmatpush1.bf16.xpose.msra.mxu0 0
    %377 = vmatprep.subr.bf16.mxu0 0
    %378 = vmatpush1.bf16.xpose.msra.mxu0 0
    %379 = vmatprep.subr.bf16.mxu0 0
    %380 = vmatpush1.bf16.xpose.msra.mxu0 0
    %381 = vmatprep.subr.bf16.mxu0 0
    %382 = vmatpush1.bf16.xpose.msra.mxu0 0
    %383 = vmatprep.subr.bf16.mxu0 0
    %384 = vmatpush1.bf16.xpose.msra.mxu0 0
    %385 = vmatprep.subr.bf16.mxu0 0
    %386 = vmatpush1.bf16.xpose.msra.mxu0 0
    %387 = vmatprep.subr.bf16.mxu0 0
    %388 = vmatpush1.bf16.xpose.msra.mxu0 0
    %389 = vmatprep.mubr.bf16.mxu0 0
    %390 = vmatmul.mubr.bf16.gmra.mrb[0].mxu0 %v352
    %v391 = vpop.f32.mrb[0].mxu0
    %v392 = vadd.f32 0.0, %v391
    %v393 = vpop.f32.mrb[0].mxu0
    %v394 = vpop.f32.mrb[0].mxu0
    %v395 = vpop.f32.mrb[0].mxu0
    %396 = vdwg.mxu0
    %v397 = vsel %vm302, %v344, -inf
    %398 = vmax.xlane.f32.xlu0 %v397
    %v399 = vpop.xlane.xlu0 %398
    %v400 = vsel %vm302, %v392, -inf
    %401 = vmax.xlane.f32.xlu0 %v400
    %v402 = vpop.xlane.xlu0 %401
    %v403 = vsub.f32 %v344, %v399
    %v404 = vsub.f32 %v392, %v402
    %v405 = vmul.f32 %v403, 1.442695
    %v406 = vpow.pop %v405
    %v407 = vmul.f32 %v404, 1.442695
    %v408 = vpow.pop %v407
    %v409 = vsel %vm302, %v406, 0.0
    %410 = vadd.xlane.f32.xlu0 %v409
    %v411 = vpop.xlane.xlu0 %410
    %v412 = vsel %vm302, %v408, 0.0
    %413 = vadd.xlane.f32.xlu0 %v412
    %v414 = vpop.xlane.xlu0 %413
    %v415 = vrcp.pop %v411
    %v416 = vrcp.pop %v414
    %v417 = vmul.f32 %v406, %v415
    %v418 = vmul.f32 %v408, %v416
    %v419 = vpack.c.bf16 %v417, %v417
    %v420 = vpack.c.bf16 %v418, %v418
    %421 = vrot.lane.b32.xlu0 %v298, 64
    %v422 = vpop.permute.xlu0 %421
    %v424 = vsel %vm302, %v419, 0
    %vm426 = vcmask 1043456
    %v428 = vsel %vm426, %v422, 0
    %430 = vmatprep.subr.bf16.mxu0 0
    %431 = vmatpush1.bf16.msra.mxu0 %v428
    %432 = vmatprep.subr.bf16.mxu0 0
    %433 = vmatpush1.bf16.msra.mxu0 0
    %434 = vmatprep.subr.bf16.mxu0 0
    %435 = vmatpush1.bf16.msra.mxu0 0
    %436 = vmatprep.subr.bf16.mxu0 0
    %437 = vmatpush1.bf16.msra.mxu0 0
    %438 = vmatprep.subr.bf16.mxu0 0
    %439 = vmatpush1.bf16.msra.mxu0 0
    %440 = vmatprep.subr.bf16.mxu0 0
    %441 = vmatpush1.bf16.msra.mxu0 0
    %442 = vmatprep.subr.bf16.mxu0 0
    %443 = vmatpush1.bf16.msra.mxu0 0
    %444 = vmatprep.subr.bf16.mxu0 0
    %445 = vmatpush1.bf16.msra.mxu0 0
    %446 = vmatprep.subr.bf16.mxu0 0
    %447 = vmatpush1.bf16.msra.mxu0 0
    %448 = vmatprep.subr.bf16.mxu0 0
    %449 = vmatpush1.bf16.msra.mxu0 0
    %450 = vmatprep.subr.bf16.mxu0 0
    %451 = vmatpush1.bf16.msra.mxu0 0
    %452 = vmatprep.subr.bf16.mxu0 0
    %453 = vmatpush1.bf16.msra.mxu0 0
    %454 = vmatprep.subr.bf16.mxu0 0
    %455 = vmatpush1.bf16.msra.mxu0 0
    %456 = vmatprep.subr.bf16.mxu0 0
    %457 = vmatpush1.bf16.msra.mxu0 0
    %458 = vmatprep.subr.bf16.mxu0 0
    %459 = vmatpush1.bf16.msra.mxu0 0
    %460 = vmatprep.subr.bf16.mxu0 0
    %461 = vmatpush1.bf16.msra.mxu0 0
    %462 = vmatprep.mubr.bf16.mxu0 0
    %463 = vmatmul.mubr.bf16.gmra.mrb[0].mxu0 %v424
    %v464 = vpop.f32.mrb[0].mxu0
    %v465 = vadd.f32 0.0, %v464
    %v466 = vpop.f32.mrb[0].mxu0
    %v467 = vpop.f32.mrb[0].mxu0
    %v468 = vpop.f32.mrb[0].mxu0
    %469 = vdwg.mxu0
    %470 = vrot.lane.b32.xlu0 %v299, 64
    %v471 = vpop.permute.xlu0 %470
    %v473 = vsel %vm302, %v420, 0
    %v476 = vsel %vm426, %v471, 0
    %478 = vmatprep.subr.bf16.mxu0 0
    %479 = vmatpush1.bf16.msra.mxu0 %v476
    %480 = vmatprep.subr.bf16.mxu0 0
    %481 = vmatpush1.bf16.msra.mxu0 0
    %482 = vmatprep.subr.bf16.mxu0 0
    %483 = vmatpush1.bf16.msra.mxu0 0
    %484 = vmatprep.subr.bf16.mxu0 0
    %485 = vmatpush1.bf16.msra.mxu0 0
    %486 = vmatprep.subr.bf16.mxu0 0
    %487 = vmatpush1.bf16.msra.mxu0 0
    %488 = vmatprep.subr.bf16.mxu0 0
    %489 = vmatpush1.bf16.msra.mxu0 0
    %490 = vmatprep.subr.bf16.mxu0 0
    %491 = vmatpush1.bf16.msra.mxu0 0
    %492 = vmatprep.subr.bf16.mxu0 0
    %493 = vmatpush1.bf16.msra.mxu0 0
    %494 = vmatprep.subr.bf16.mxu0 0
    %495 = vmatpush1.bf16.msra.mxu0 0
    %496 = vmatprep.subr.bf16.mxu0 0
    %497 = vmatpush1.bf16.msra.mxu0 0
    %498 = vmatprep.subr.bf16.mxu0 0
    %499 = vmatpush1.bf16.msra.mxu0 0
    %500 = vmatprep.subr.bf16.mxu0 0
    %501 = vmatpush1.bf16.msra.mxu0 0
    %502 = vmatprep.subr.bf16.mxu0 0
    %503 = vmatpush1.bf16.msra.mxu0 0
    %504 = vmatprep.subr.bf16.mxu0 0
    %505 = vmatpush1.bf16.msra.mxu0 0
    %506 = vmatprep.subr.bf16.mxu0 0
    %507 = vmatpush1.bf16.msra.mxu0 0
    %508 = vmatprep.subr.bf16.mxu0 0
    %509 = vmatpush1.bf16.msra.mxu0 0
    %510 = vmatprep.mubr.bf16.mxu0 0
    %511 = vmatmul.mubr.bf16.gmra.mrb[0].mxu0 %v473
    %v512 = vpop.f32.mrb[0].mxu0
    %v513 = vadd.f32 0.0, %v512
    %v514 = vpop.f32.mrb[0].mxu0
    %v515 = vpop.f32.mrb[0].mxu0
    %v516 = vpop.f32.mrb[0].mxu0
    %517 = vdwg.mxu0
    %v518 = vpack.c.bf16 %v513, %v465
    %519 = vst.msk [vmem:[#allocation3] sm:$0xff] %vm302, %v518
    %v520 = vld [vmem:[#allocation2] sm:$0xff]
    %v522 = vunpack.c.l.b16 %v520
    %v523 = vunpack.c.h.b16 %v520
    %v524 = vpack.c.b16 %v522, %v522
    %525 = vrot.lane.b32.xlu0 %v524, 120
    %v526 = vpop.permute.xlu0 %525
    %527 = vrot.lane.b32.xlu0 %v524, 88
    %v528 = vpop.permute.xlu0 %527
    %v530 = vsel %vm302, %v526, 0
    %v533 = vsel %vm302, %v528, 0
    %535 = vmatprep.subr.bf16.mxu0 0
    %536 = vmatpush1.bf16.xpose.msra.mxu0 %v533
    %537 = vmatprep.subr.bf16.mxu0 0
    %538 = vmatpush1.bf16.xpose.msra.mxu0 0
    %539 = vmatprep.subr.bf16.mxu0 0
    %540 = vmatpush1.bf16.xpose.msra.mxu0 0
    %541 = vmatprep.subr.bf16.mxu0 0
    %542 = vmatpush1.bf16.xpose.msra.mxu0 0
    %543 = vmatprep.subr.bf16.mxu0 0
    %544 = vmatpush1.bf16.xpose.msra.mxu0 0
    %545 = vmatprep.subr.bf16.mxu0 0
    %546 = vmatpush1.bf16.xpose.msra.mxu0 0
    %547 = vmatprep.subr.bf16.mxu0 0
    %548 = vmatpush1.bf16.xpose.msra.mxu0 0
    %549 = vmatprep.subr.bf16.mxu0 0
    %550 = vmatpush1.bf16.xpose.msra.mxu0 0
    %551 = vmatprep.subr.bf16.mxu0 0
    %552 = vmatpush1.bf16.xpose.msra.mxu0 0
    %553 = vmatprep.subr.bf16.mxu0 0
    %554 = vmatpush1.bf16.xpose.msra.mxu0 0
    %555 = vmatprep.subr.bf16.mxu0 0
    %556 = vmatpush1.bf16.xpose.msra.mxu0 0
    %557 = vmatprep.subr.bf16.mxu0 0
    %558 = vmatpush1.bf16.xpose.msra.mxu0 0
    %559 = vmatprep.subr.bf16.mxu0 0
    %560 = vmatpush1.bf16.xpose.msra.mxu0 0
    %561 = vmatprep.subr.bf16.mxu0 0
    %562 = vmatpush1.bf16.xpose.msra.mxu0 0
    %563 = vmatprep.subr.bf16.mxu0 0
    %564 = vmatpush1.bf16.xpose.msra.mxu0 0
    %565 = vmatprep.subr.bf16.mxu0 0
    %566 = vmatpush1.bf16.xpose.msra.mxu0 0
    %567 = vmatprep.mubr.bf16.mxu0 0
    %568 = vmatmul.mubr.bf16.gmra.mrb[0].mxu0 %v530
    %v569 = vpop.f32.mrb[0].mxu0
    %v570 = vadd.f32 0.0, %v569
    %v571 = vpop.f32.mrb[0].mxu0
    %v572 = vpop.f32.mrb[0].mxu0
    %v573 = vpop.f32.mrb[0].mxu0
    %574 = vdwg.mxu0
    %v575 = vpack.c.b16 %v523, %v523
    %576 = vrot.lane.b32.xlu0 %v575, 120
    %v577 = vpop.permute.xlu0 %576
    %578 = vrot.lane.b32.xlu0 %v575, 88
    %v579 = vpop.permute.xlu0 %578
    %v581 = vsel %vm302, %v577, 0
    %v584 = vsel %vm302, %v579, 0
    %586 = vmatprep.subr.bf16.mxu0 0
    %587 = vmatpush1.bf16.xpose.msra.mxu0 %v584
    %588 = vmatprep.subr.bf16.mxu0 0
    %589 = vmatpush1.bf16.xpose.msra.mxu0 0
    %590 = vmatprep.subr.bf16.mxu0 0
    %591 = vmatpush1.bf16.xpose.msra.mxu0 0
    %592 = vmatprep.subr.bf16.mxu0 0
    %593 = vmatpush1.bf16.xpose.msra.mxu0 0
    %594 = vmatprep.subr.bf16.mxu0 0
    %595 = vmatpush1.bf16.xpose.msra.mxu0 0
    %596 = vmatprep.subr.bf16.mxu0 0
    %597 = vmatpush1.bf16.xpose.msra.mxu0 0
    %598 = vmatprep.subr.bf16.mxu0 0
    %599 = vmatpush1.bf16.xpose.msra.mxu0 0
    %600 = vmatprep.subr.bf16.mxu0 0
    %601 = vmatpush1.bf16.xpose.msra.mxu0 0
    %602 = vmatprep.subr.bf16.mxu0 0
    %603 = vmatpush1.bf16.xpose.msra.mxu0 0
    %604 = vmatprep.subr.bf16.mxu0 0
    %605 = vmatpush1.bf16.xpose.msra.mxu0 0
    %606 = vmatprep.subr.bf16.mxu0 0
    %607 = vmatpush1.bf16.xpose.msra.mxu0 0
    %608 = vmatprep.subr.bf16.mxu0 0
    %609 = vmatpush1.bf16.xpose.msra.mxu0 0
    %610 = vmatprep.subr.bf16.mxu0 0
    %611 = vmatpush1.bf16.xpose.msra.mxu0 0
    %612 = vmatprep.subr.bf16.mxu0 0
    %613 = vmatpush1.bf16.xpose.msra.mxu0 0
    %614 = vmatprep.subr.bf16.mxu0 0
    %615 = vmatpush1.bf16.xpose.msra.mxu0 0
    %616 = vmatprep.subr.bf16.mxu0 0
    %617 = vmatpush1.bf16.xpose.msra.mxu0 0
    %618 = vmatprep.mubr.bf16.mxu0 0
    %619 = vmatmul.mubr.bf16.gmra.mrb[0].mxu0 %v581
    %v620 = vpop.f32.mrb[0].mxu0
    %v621 = vadd.f32 0.0, %v620
    %v622 = vpop.f32.mrb[0].mxu0
    %v623 = vpop.f32.mrb[0].mxu0
    %v624 = vpop.f32.mrb[0].mxu0
    %625 = vdwg.mxu0
    %v626 = vsel %vm302, %v570, -inf
    %627 = vmax.xlane.f32.xlu0 %v626
    %v628 = vpop.xlane.xlu0 %627
    %v629 = vsel %vm302, %v621, -inf
    %630 = vmax.xlane.f32.xlu0 %v629
    %v631 = vpop.xlane.xlu0 %630
    %v632 = vsub.f32 %v570, %v628
    %v633 = vsub.f32 %v621, %v631
    %v634 = vmul.f32 %v632, 1.442695
    %v635 = vpow.pop %v634
    %v636 = vmul.f32 %v633, 1.442695
    %v637 = vpow.pop %v636
    %v638 = vsel %vm302, %v635, 0.0
    %639 = vadd.xlane.f32.xlu0 %v638
    %v640 = vpop.xlane.xlu0 %639
    %v641 = vsel %vm302, %v637, 0.0
    %642 = vadd.xlane.f32.xlu0 %v641
    %v643 = vpop.xlane.xlu0 %642
    %v644 = vrcp.pop %v640
    %v645 = vrcp.pop %v643
    %v646 = vmul.f32 %v635, %v644
    %v647 = vmul.f32 %v637, %v645
    %v648 = vpack.c.bf16 %v646, %v646
    %v649 = vpack.c.bf16 %v647, %v647
    %650 = vrot.lane.b32.xlu0 %v524, 56
    %v651 = vpop.permute.xlu0 %650
    %v653 = vsel %vm302, %v648, 0
    %v656 = vsel %vm426, %v651, 0
    %658 = vmatprep.subr.bf16.mxu0 0
    %659 = vmatpush1.bf16.msra.mxu0 %v656
    %660 = vmatprep.subr.bf16.mxu0 0
    %661 = vmatpush1.bf16.msra.mxu0 0
    %662 = vmatprep.subr.bf16.mxu0 0
    %663 = vmatpush1.bf16.msra.mxu0 0
    %664 = vmatprep.subr.bf16.mxu0 0
    %665 = vmatpush1.bf16.msra.mxu0 0
    %666 = vmatprep.subr.bf16.mxu0 0
    %667 = vmatpush1.bf16.msra.mxu0 0
    %668 = vmatprep.subr.bf16.mxu0 0
    %669 = vmatpush1.bf16.msra.mxu0 0
    %670 = vmatprep.subr.bf16.mxu0 0
    %671 = vmatpush1.bf16.msra.mxu0 0
    %672 = vmatprep.subr.bf16.mxu0 0
    %673 = vmatpush1.bf16.msra.mxu0 0
    %674 = vmatprep.subr.bf16.mxu0 0
    %675 = vmatpush1.bf16.msra.mxu0 0
    %676 = vmatprep.subr.bf16.mxu0 0
    %677 = vmatpush1.bf16.msra.mxu0 0
    %678 = vmatprep.subr.bf16.mxu0 0
    %679 = vmatpush1.bf16.msra.mxu0 0
    %680 = vmatprep.subr.bf16.mxu0 0
    %681 = vmatpush1.bf16.msra.mxu0 0
    %682 = vmatprep.subr.bf16.mxu0 0
    %683 = vmatpush1.bf16.msra.mxu0 0
    %684 = vmatprep.subr.bf16.mxu0 0
    %685 = vmatpush1.bf16.msra.mxu0 0
    %686 = vmatprep.subr.bf16.mxu0 0
    %687 = vmatpush1.bf16.msra.mxu0 0
    %688 = vmatprep.subr.bf16.mxu0 0
    %689 = vmatpush1.bf16.msra.mxu0 0
    %690 = vmatprep.mubr.bf16.mxu0 0
    %691 = vmatmul.mubr.bf16.gmra.mrb[0].mxu0 %v653
    %v692 = vpop.f32.mrb[0].mxu0
    %v693 = vadd.f32 0.0, %v692
    %v694 = vpop.f32.mrb[0].mxu0
    %v695 = vpop.f32.mrb[0].mxu0
    %v696 = vpop.f32.mrb[0].mxu0
    %697 = vdwg.mxu0
    %698 = vrot.lane.b32.xlu0 %v575, 56
    %v699 = vpop.permute.xlu0 %698
    %v701 = vsel %vm302, %v649, 0
    %v704 = vsel %vm426, %v699, 0
    %706 = vmatprep.subr.bf16.mxu0 0
    %707 = vmatpush1.bf16.msra.mxu0 %v704
    %708 = vmatprep.subr.bf16.mxu0 0
    %709 = vmatpush1.bf16.msra.mxu0 0
    %710 = vmatprep.subr.bf16.mxu0 0
    %711 = vmatpush1.bf16.msra.mxu0 0
    %712 = vmatprep.subr.bf16.mxu0 0
    %713 = vmatpush1.bf16.msra.mxu0 0
    %714 = vmatprep.subr.bf16.mxu0 0
    %715 = vmatpush1.bf16.msra.mxu0 0
    %716 = vmatprep.subr.bf16.mxu0 0
    %717 = vmatpush1.bf16.msra.mxu0 0
    %718 = vmatprep.subr.bf16.mxu0 0
    %719 = vmatpush1.bf16.msra.mxu0 0
    %720 = vmatprep.subr.bf16.mxu0 0
    %721 = vmatpush1.bf16.msra.mxu0 0
    %722 = vmatprep.subr.bf16.mxu0 0
    %723 = vmatpush1.bf16.msra.mxu0 0
    %724 = vmatprep.subr.bf16.mxu0 0
    %725 = vmatpush1.bf16.msra.mxu0 0
    %726 = vmatprep.subr.bf16.mxu0 0
    %727 = vmatpush1.bf16.msra.mxu0 0
    %728 = vmatprep.subr.bf16.mxu0 0
    %729 = vmatpush1.bf16.msra.mxu0 0
    %730 = vmatprep.subr.bf16.mxu0 0
    %731 = vmatpush1.bf16.msra.mxu0 0
    %732 = vmatprep.subr.bf16.mxu0 0
    %733 = vmatpush1.bf16.msra.mxu0 0
    %734 = vmatprep.subr.bf16.mxu0 0
    %735 = vmatpush1.bf16.msra.mxu0 0
    %736 = vmatprep.subr.bf16.mxu0 0
    %737 = vmatpush1.bf16.msra.mxu0 0
    %738 = vmatprep.mubr.bf16.mxu0 0
    %739 = vmatmul.mubr.bf16.gmra.mrb[0].mxu0 %v701
    %v740 = vpop.f32.mrb[0].mxu0
    %v741 = vadd.f32 0.0, %v740
    %v742 = vpop.f32.mrb[0].mxu0
    %v743 = vpop.f32.mrb[0].mxu0
    %v744 = vpop.f32.mrb[0].mxu0
    %745 = vdwg.mxu0
    %v746 = vpack.c.bf16 %v741, %v693
    %748 = vrot.lane.b32.xlu0 %v746, 8
    %v749 = vpop.permute.xlu0 %748
    %vm751 = vcmask 130112
    %752 = vst.msk [vmem:[#allocation3] sm:$0xff] %vm751, %v749
    %v753 = vld [vmem:[#allocation2] sm:$0xff]
    %v755 = vunpack.c.l.b16 %v753
    %v756 = vunpack.c.h.b16 %v753
    %v757 = vpack.c.b16 %v755, %v755
    %758 = vrot.lane.b32.xlu0 %v757, 112
    %v759 = vpop.permute.xlu0 %758
    %760 = vrot.lane.b32.xlu0 %v757, 80
    %v761 = vpop.permute.xlu0 %760
    %v763 = vsel %vm302, %v759, 0
    %v766 = vsel %vm302, %v761, 0
    %768 = vmatprep.subr.bf16.mxu0 0
    %769 = vmatpush1.bf16.xpose.msra.mxu0 %v766
    %770 = vmatprep.subr.bf16.mxu0 0
    %771 = vmatpush1.bf16.xpose.msra.mxu0 0
    %772 = vmatprep.subr.bf16.mxu0 0
    %773 = vmatpush1.bf16.xpose.msra.mxu0 0
    %774 = vmatprep.subr.bf16.mxu0 0
    %775 = vmatpush1.bf16.xpose.msra.mxu0 0
    %776 = vmatprep.subr.bf16.mxu0 0
    %777 = vmatpush1.bf16.xpose.msra.mxu0 0
    %778 = vmatprep.subr.bf16.mxu0 0
    %779 = vmatpush1.bf16.xpose.msra.mxu0 0
    %780 = vmatprep.subr.bf16.mxu0 0
    %781 = vmatpush1.bf16.xpose.msra.mxu0 0
    %782 = vmatprep.subr.bf16.mxu0 0
    %783 = vmatpush1.bf16.xpose.msra.mxu0 0
    %784 = vmatprep.subr.bf16.mxu0 0
    %785 = vmatpush1.bf16.xpose.msra.mxu0 0
    %786 = vmatprep.subr.bf16.mxu0 0
    %787 = vmatpush1.bf16.xpose.msra.mxu0 0
    %788 = vmatprep.subr.bf16.mxu0 0
    %789 = vmatpush1.bf16.xpose.msra.mxu0 0
    %790 = vmatprep.subr.bf16.mxu0 0
    %791 = vmatpush1.bf16.xpose.msra.mxu0 0
    %792 = vmatprep.subr.bf16.mxu0 0
    %793 = vmatpush1.bf16.xpose.msra.mxu0 0
    %794 = vmatprep.subr.bf16.mxu0 0
    %795 = vmatpush1.bf16.xpose.msra.mxu0 0
    %796 = vmatprep.subr.bf16.mxu0 0
    %797 = vmatpush1.bf16.xpose.msra.mxu0 0
    %798 = vmatprep.subr.bf16.mxu0 0
    %799 = vmatpush1.bf16.xpose.msra.mxu0 0
    %800 = vmatprep.mubr.bf16.mxu0 0
    %801 = vmatmul.mubr.bf16.gmra.mrb[0].mxu0 %v763
    %v802 = vpop.f32.mrb[0].mxu0
    %v803 = vadd.f32 0.0, %v802
    %v804 = vpop.f32.mrb[0].mxu0
    %v805 = vpop.f32.mrb[0].mxu0
    %v806 = vpop.f32.mrb[0].mxu0
    %807 = vdwg.mxu0
    %v808 = vpack.c.b16 %v756, %v756
    %809 = vrot.lane.b32.xlu0 %v808, 112
    %v810 = vpop.permute.xlu0 %809
    %811 = vrot.lane.b32.xlu0 %v808, 80
    %v812 = vpop.permute.xlu0 %811
    %v814 = vsel %vm302, %v810, 0
    %v817 = vsel %vm302, %v812, 0
    %819 = vmatprep.subr.bf16.mxu0 0
    %820 = vmatpush1.bf16.xpose.msra.mxu0 %v817
    %821 = vmatprep.subr.bf16.mxu0 0
    %822 = vmatpush1.bf16.xpose.msra.mxu0 0
    %823 = vmatprep.subr.bf16.mxu0 0
    %824 = vmatpush1.bf16.xpose.msra.mxu0 0
    %825 = vmatprep.subr.bf16.mxu0 0
    %826 = vmatpush1.bf16.xpose.msra.mxu0 0
    %827 = vmatprep.subr.bf16.mxu0 0
    %828 = vmatpush1.bf16.xpose.msra.mxu0 0
    %829 = vmatprep.subr.bf16.mxu0 0
    %830 = vmatpush1.bf16.xpose.msra.mxu0 0
    %831 = vmatprep.subr.bf16.mxu0 0
    %832 = vmatpush1.bf16.xpose.msra.mxu0 0
    %833 = vmatprep.subr.bf16.mxu0 0
    %834 = vmatpush1.bf16.xpose.msra.mxu0 0
    %835 = vmatprep.subr.bf16.mxu0 0
    %836 = vmatpush1.bf16.xpose.msra.mxu0 0
    %837 = vmatprep.subr.bf16.mxu0 0
    %838 = vmatpush1.bf16.xpose.msra.mxu0 0
    %839 = vmatprep.subr.bf16.mxu0 0
    %840 = vmatpush1.bf16.xpose.msra.mxu0 0
    %841 = vmatprep.subr.bf16.mxu0 0
    %842 = vmatpush1.bf16.xpose.msra.mxu0 0
    %843 = vmatprep.subr.bf16.mxu0 0
    %844 = vmatpush1.bf16.xpose.msra.mxu0 0
    %845 = vmatprep.subr.bf16.mxu0 0
    %846 = vmatpush1.bf16.xpose.msra.mxu0 0
    %847 = vmatprep.subr.bf16.mxu0 0
    %848 = vmatpush1.bf16.xpose.msra.mxu0 0
    %849 = vmatprep.subr.bf16.mxu0 0
    %850 = vmatpush1.bf16.xpose.msra.mxu0 0
    %851 = vmatprep.mubr.bf16.mxu0 0
    %852 = vmatmul.mubr.bf16.gmra.mrb[0].mxu0 %v814
    %v853 = vpop.f32.mrb[0].mxu0
    %v854 = vadd.f32 0.0, %v853
    %v855 = vpop.f32.mrb[0].mxu0
    %v856 = vpop.f32.mrb[0].mxu0
    %v857 = vpop.f32.mrb[0].mxu0
    %858 = vdwg.mxu0
    %v859 = vsel %vm302, %v803, -inf
    %860 = vmax.xlane.f32.xlu0 %v859
    %v861 = vpop.xlane.xlu0 %860
    %v862 = vsel %vm302, %v854, -inf
    %863 = vmax.xlane.f32.xlu0 %v862
    %v864 = vpop.xlane.xlu0 %863
    %v865 = vsub.f32 %v803, %v861
    %v866 = vsub.f32 %v854, %v864
    %v867 = vmul.f32 %v865, 1.442695
    %v868 = vpow.pop %v867
    %v869 = vmul.f32 %v866, 1.442695
    %v870 = vpow.pop %v869
    %v871 = vsel %vm302, %v868, 0.0
    %872 = vadd.xlane.f32.xlu0 %v871
    %v873 = vpop.xlane.xlu0 %872
    %v874 = vsel %vm302, %v870, 0.0
    %875 = vadd.xlane.f32.xlu0 %v874
    %v876 = vpop.xlane.xlu0 %875
    %v877 = vrcp.pop %v873
    %v878 = vrcp.pop %v876
    %v879 = vmul.f32 %v868, %v877
    %v880 = vmul.f32 %v870, %v878
    %v881 = vpack.c.bf16 %v879, %v879
    %v882 = vpack.c.bf16 %v880, %v880
    %883 = vrot.lane.b32.xlu0 %v757, 48
    %v884 = vpop.permute.xlu0 %883
    %v886 = vsel %vm302, %v881, 0
    %v889 = vsel %vm426, %v884, 0
    %891 = vmatprep.subr.bf16.mxu0 0
    %892 = vmatpush1.bf16.msra.mxu0 %v889
    %893 = vmatprep.subr.bf16.mxu0 0
    %894 = vmatpush1.bf16.msra.mxu0 0
    %895 = vmatprep.subr.bf16.mxu0 0
    %896 = vmatpush1.bf16.msra.mxu0 0
    %897 = vmatprep.subr.bf16.mxu0 0
    %898 = vmatpush1.bf16.msra.mxu0 0
    %899 = vmatprep.subr.bf16.mxu0 0
    %900 = vmatpush1.bf16.msra.mxu0 0
    %901 = vmatprep.subr.bf16.mxu0 0
    %902 = vmatpush1.bf16.msra.mxu0 0
    %903 = vmatprep.subr.bf16.mxu0 0
    %904 = vmatpush1.bf16.msra.mxu0 0
    %905 = vmatprep.subr.bf16.mxu0 0
    %906 = vmatpush1.bf16.msra.mxu0 0
    %907 = vmatprep.subr.bf16.mxu0 0
    %908 = vmatpush1.bf16.msra.mxu0 0
    %909 = vmatprep.subr.bf16.mxu0 0
    %910 = vmatpush1.bf16.msra.mxu0 0
    %911 = vmatprep.subr.bf16.mxu0 0
    %912 = vmatpush1.bf16.msra.mxu0 0
    %913 = vmatprep.subr.bf16.mxu0 0
    %914 = vmatpush1.bf16.msra.mxu0 0
    %915 = vmatprep.subr.bf16.mxu0 0
    %916 = vmatpush1.bf16.msra.mxu0 0
    %917 = vmatprep.subr.bf16.mxu0 0
    %918 = vmatpush1.bf16.msra.mxu0 0
    %919 = vmatprep.subr.bf16.mxu0 0
    %920 = vmatpush1.bf16.msra.mxu0 0
    %921 = vmatprep.subr.bf16.mxu0 0
    %922 = vmatpush1.bf16.msra.mxu0 0
    %923 = vmatprep.mubr.bf16.mxu0 0
    %924 = vmatmul.mubr.bf16.gmra.mrb[0].mxu0 %v886
    %v925 = vpop.f32.mrb[0].mxu0
    %v926 = vadd.f32 0.0, %v925
    %v927 = vpop.f32.mrb[0].mxu0
    %v928 = vpop.f32.mrb[0].mxu0
    %v929 = vpop.f32.mrb[0].mxu0
    %930 = vdwg.mxu0
    %931 = vrot.lane.b32.xlu0 %v808, 48
    %v932 = vpop.permute.xlu0 %931
    %v934 = vsel %vm302, %v882, 0
    %v937 = vsel %vm426, %v932, 0
    %939 = vmatprep.subr.bf16.mxu0 0
    %940 = vmatpush1.bf16.msra.mxu0 %v937
    %941 = vmatprep.subr.bf16.mxu0 0
    %942 = vmatpush1.bf16.msra.mxu0 0
    %943 = vmatprep.subr.bf16.mxu0 0
    %944 = vmatpush1.bf16.msra.mxu0 0
    %945 = vmatprep.subr.bf16.mxu0 0
    %946 = vmatpush1.bf16.msra.mxu0 0
    %947 = vmatprep.subr.bf16.mxu0 0
    %948 = vmatpush1.bf16.msra.mxu0 0
    %949 = vmatprep.subr.bf16.mxu0 0
    %950 = vmatpush1.bf16.msra.mxu0 0
    %951 = vmatprep.subr.bf16.mxu0 0
    %952 = vmatpush1.bf16.msra.mxu0 0
    %953 = vmatprep.subr.bf16.mxu0 0
    %954 = vmatpush1.bf16.msra.mxu0 0
    %955 = vmatprep.subr.bf16.mxu0 0
    %956 = vmatpush1.bf16.msra.mxu0 0
    %957 = vmatprep.subr.bf16.mxu0 0
    %958 = vmatpush1.bf16.msra.mxu0 0
    %959 = vmatprep.subr.bf16.mxu0 0
    %960 = vmatpush1.bf16.msra.mxu0 0
    %961 = vmatprep.subr.bf16.mxu0 0
    %962 = vmatpush1.bf16.msra.mxu0 0
    %963 = vmatprep.subr.bf16.mxu0 0
    %964 = vmatpush1.bf16.msra.mxu0 0
    %965 = vmatprep.subr.bf16.mxu0 0
    %966 = vmatpush1.bf16.msra.mxu0 0
    %967 = vmatprep.subr.bf16.mxu0 0
    %968 = vmatpush1.bf16.msra.mxu0 0
    %969 = vmatprep.subr.bf16.mxu0 0
    %970 = vmatpush1.bf16.msra.mxu0 0
    %971 = vmatprep.mubr.bf16.mxu0 0
    %972 = vmatmul.mubr.bf16.gmra.mrb[0].mxu0 %v934
    %v973 = vpop.f32.mrb[0].mxu0
    %v974 = vadd.f32 0.0, %v973
    %v975 = vpop.f32.mrb[0].mxu0
    %v976 = vpop.f32.mrb[0].mxu0
    %v977 = vpop.f32.mrb[0].mxu0
    %978 = vdwg.mxu0
    %v979 = vpack.c.bf16 %v974, %v926
    %981 = vrot.lane.b32.xlu0 %v979, 16
    %v982 = vpop.permute.xlu0 %981
    %vm984 = vcmask 195712
    %985 = vst.msk [vmem:[#allocation3] sm:$0xff] %vm984, %v982
    %v986 = vld [vmem:[#allocation2] sm:$0xff]
    %v988 = vunpack.c.l.b16 %v986
    %v989 = vunpack.c.h.b16 %v986
    %v990 = vpack.c.b16 %v988, %v988
    %991 = vrot.lane.b32.xlu0 %v990, 104
    %v992 = vpop.permute.xlu0 %991
    %993 = vrot.lane.b32.xlu0 %v990, 72
    %v994 = vpop.permute.xlu0 %993
    %v996 = vsel %vm302, %v992, 0
    %v999 = vsel %vm302, %v994, 0
    %1001 = vmatprep.subr.bf16.mxu0 0
    %1002 = vmatpush1.bf16.xpose.msra.mxu0 %v999
    %1003 = vmatprep.subr.bf16.mxu0 0
    %1004 = vmatpush1.bf16.xpose.msra.mxu0 0
    %1005 = vmatprep.subr.bf16.mxu0 0
    %1006 = vmatpush1.bf16.xpose.msra.mxu0 0
    %1007 = vmatprep.subr.bf16.mxu0 0
    %1008 = vmatpush1.bf16.xpose.msra.mxu0 0
    %1009 = vmatprep.subr.bf16.mxu0 0
    %1010 = vmatpush1.bf16.xpose.msra.mxu0 0
    %1011 = vmatprep.subr.bf16.mxu0 0
    %1012 = vmatpush1.bf16.xpose.msra.mxu0 0
    %1013 = vmatprep.subr.bf16.mxu0 0
    %1014 = vmatpush1.bf16.xpose.msra.mxu0 0
    %1015 = vmatprep.subr.bf16.mxu0 0
    %1016 = vmatpush1.bf16.xpose.msra.mxu0 0
    %1017 = vmatprep.subr.bf16.mxu0 0
    %1018 = vmatpush1.bf16.xpose.msra.mxu0 0
    %1019 = vmatprep.subr.bf16.mxu0 0
    %1020 = vmatpush1.bf16.xpose.msra.mxu0 0
    %1021 = vmatprep.subr.bf16.mxu0 0
    %1022 = vmatpush1.bf16.xpose.msra.mxu0 0
    %1023 = vmatprep.subr.bf16.mxu0 0
    %1024 = vmatpush1.bf16.xpose.msra.mxu0 0
    %1025 = vmatprep.subr.bf16.mxu0 0
    %1026 = vmatpush1.bf16.xpose.msra.mxu0 0
    %1027 = vmatprep.subr.bf16.mxu0 0
    %1028 = vmatpush1.bf16.xpose.msra.mxu0 0
    %1029 = vmatprep.subr.bf16.mxu0 0
    %1030 = vmatpush1.bf16.xpose.msra.mxu0 0
    %1031 = vmatprep.subr.bf16.mxu0 0
    %1032 = vmatpush1.bf16.xpose.msra.mxu0 0
    %1033 = vmatprep.mubr.bf16.mxu0 0
    %1034 = vmatmul.mubr.bf16.gmra.mrb[0].mxu0 %v996
    %v1035 = vpop.f32.mrb[0].mxu0
    %v1036 = vadd.f32 0.0, %v1035
    %v1037 = vpop.f32.mrb[0].mxu0
    %v1038 = vpop.f32.mrb[0].mxu0
    %v1039 = vpop.f32.mrb[0].mxu0
    %1040 = vdwg.mxu0
    %v1041 = vpack.c.b16 %v989, %v989
    %1042 = vrot.lane.b32.xlu0 %v1041, 104
    %v1043 = vpop.permute.xlu0 %1042
    %1044 = vrot.lane.b32.xlu0 %v1041, 72
    %v1045 = vpop.permute.xlu0 %1044
    %v1047 = vsel %vm302, %v1043, 0
    %v1050 = vsel %vm302, %v1045, 0
    %1052 = vmatprep.subr.bf16.mxu0 0
    %1053 = vmatpush1.bf16.xpose.msra.mxu0 %v1050
    %1054 = vmatprep.subr.bf16.mxu0 0
    %1055 = vmatpush1.bf16.xpose.msra.mxu0 0
    %1056 = vmatprep.subr.bf16.mxu0 0
    %1057 = vmatpush1.bf16.xpose.msra.mxu0 0
    %1058 = vmatprep.subr.bf16.mxu0 0
    %1059 = vmatpush1.bf16.xpose.msra.mxu0 0
    %1060 = vmatprep.subr.bf16.mxu0 0
    %1061 = vmatpush1.bf16.xpose.msra.mxu0 0
    %1062 = vmatprep.subr.bf16.mxu0 0
    %1063 = vmatpush1.bf16.xpose.msra.mxu0 0
    %1064 = vmatprep.subr.bf16.mxu0 0
    %1065 = vmatpush1.bf16.xpose.msra.mxu0 0
    %1066 = vmatprep.subr.bf16.mxu0 0
    %1067 = vmatpush1.bf16.xpose.msra.mxu0 0
    %1068 = vmatprep.subr.bf16.mxu0 0
    %1069 = vmatpush1.bf16.xpose.msra.mxu0 0
    %1070 = vmatprep.subr.bf16.mxu0 0
    %1071 = vmatpush1.bf16.xpose.msra.mxu0 0
    %1072 = vmatprep.subr.bf16.mxu0 0
    %1073 = vmatpush1.bf16.xpose.msra.mxu0 0
    %1074 = vmatprep.subr.bf16.mxu0 0
    %1075 = vmatpush1.bf16.xpose.msra.mxu0 0
    %1076 = vmatprep.subr.bf16.mxu0 0
    %1077 = vmatpush1.bf16.xpose.msra.mxu0 0
    %1078 = vmatprep.subr.bf16.mxu0 0
    %1079 = vmatpush1.bf16.xpose.msra.mxu0 0
    %1080 = vmatprep.subr.bf16.mxu0 0
    %1081 = vmatpush1.bf16.xpose.msra.mxu0 0
    %1082 = vmatprep.subr.bf16.mxu0 0
    %1083 = vmatpush1.bf16.xpose.msra.mxu0 0
    %1084 = vmatprep.mubr.bf16.mxu0 0
    %1085 = vmatmul.mubr.bf16.gmra.mrb[0].mxu0 %v1047
    %v1086 = vpop.f32.mrb[0].mxu0
    %v1087 = vadd.f32 0.0, %v1086
    %v1088 = vpop.f32.mrb[0].mxu0
    %v1089 = vpop.f32.mrb[0].mxu0
    %v1090 = vpop.f32.mrb[0].mxu0
    %1091 = vdwg.mxu0
    %v1092 = vsel %vm302, %v1036, -inf
    %1093 = vmax.xlane.f32.xlu0 %v1092
    %v1094 = vpop.xlane.xlu0 %1093
    %v1095 = vsel %vm302, %v1087, -inf
    %1096 = vmax.xlane.f32.xlu0 %v1095
    %v1097 = vpop.xlane.xlu0 %1096
    %v1098 = vsub.f32 %v1036, %v1094
    %v1099 = vsub.f32 %v1087, %v1097
    %v1100 = vmul.f32 %v1098, 1.442695
    %v1101 = vpow.pop %v1100
    %v1102 = vmul.f32 %v1099, 1.442695
    %v1103 = vpow.pop %v1102
    %v1104 = vsel %vm302, %v1101, 0.0
    %1105 = vadd.xlane.f32.xlu0 %v1104
    %v1106 = vpop.xlane.xlu0 %1105
    %v1107 = vsel %vm302, %v1103, 0.0
    %1108 = vadd.xlane.f32.xlu0 %v1107
    %v1109 = vpop.xlane.xlu0 %1108
    %v1110 = vrcp.pop %v1106
    %v1111 = vrcp.pop %v1109
    %v1112 = vmul.f32 %v1101, %v1110
    %v1113 = vmul.f32 %v1103, %v1111
    %v1114 = vpack.c.bf16 %v1112, %v1112
    %v1115 = vpack.c.bf16 %v1113, %v1113
    %1116 = vrot.lane.b32.xlu0 %v990, 40
    %v1117 = vpop.permute.xlu0 %1116
    %v1119 = vsel %vm302, %v1114, 0
    %v1122 = vsel %vm426, %v1117, 0
    %1124 = vmatprep.subr.bf16.mxu0 0
    %1125 = vmatpush1.bf16.msra.mxu0 %v1122
    %1126 = vmatprep.subr.bf16.mxu0 0
    %1127 = vmatpush1.bf16.msra.mxu0 0
    %1128 = vmatprep.subr.bf16.mxu0 0
    %1129 = vmatpush1.bf16.msra.mxu0 0
    %1130 = vmatprep.subr.bf16.mxu0 0
    %1131 = vmatpush1.bf16.msra.mxu0 0
    %1132 = vmatprep.subr.bf16.mxu0 0
    %1133 = vmatpush1.bf16.msra.mxu0 0
    %1134 = vmatprep.subr.bf16.mxu0 0
    %1135 = vmatpush1.bf16.msra.mxu0 0
    %1136 = vmatprep.subr.bf16.mxu0 0
    %1137 = vmatpush1.bf16.msra.mxu0 0
    %1138 = vmatprep.subr.bf16.mxu0 0
    %1139 = vmatpush1.bf16.msra.mxu0 0
    %1140 = vmatprep.subr.bf16.mxu0 0
    %1141 = vmatpush1.bf16.msra.mxu0 0
    %1142 = vmatprep.subr.bf16.mxu0 0
    %1143 = vmatpush1.bf16.msra.mxu0 0
    %1144 = vmatprep.subr.bf16.mxu0 0
    %1145 = vmatpush1.bf16.msra.mxu0 0
    %1146 = vmatprep.subr.bf16.mxu0 0
    %1147 = vmatpush1.bf16.msra.mxu0 0
    %1148 = vmatprep.subr.bf16.mxu0 0
    %1149 = vmatpush1.bf16.msra.mxu0 0
    %1150 = vmatprep.subr.bf16.mxu0 0
    %1151 = vmatpush1.bf16.msra.mxu0 0
    %1152 = vmatprep.subr.bf16.mxu0 0
    %1153 = vmatpush1.bf16.msra.mxu0 0
    %1154 = vmatprep.subr.bf16.mxu0 0
    %1155 = vmatpush1.bf16.msra.mxu0 0
    %1156 = vmatprep.mubr.bf16.mxu0 0
    %1157 = vmatmul.mubr.bf16.gmra.mrb[0].mxu0 %v1119
    %v1158 = vpop.f32.mrb[0].mxu0
    %v1159 = vadd.f32 0.0, %v1158
    %v1160 = vpop.f32.mrb[0].mxu0
    %v1161 = vpop.f32.mrb[0].mxu0
    %v1162 = vpop.f32.mrb[0].mxu0
    %1163 = vdwg.mxu0
    %1164 = vrot.lane.b32.xlu0 %v1041, 40
    %v1165 = vpop.permute.xlu0 %1164
    %v1167 = vsel %vm302, %v1115, 0
    %v1170 = vsel %vm426, %v1165, 0
    %1172 = vmatprep.subr.bf16.mxu0 0
    %1173 = vmatpush1.bf16.msra.mxu0 %v1170
    %1174 = vmatprep.subr.bf16.mxu0 0
    %1175 = vmatpush1.bf16.msra.mxu0 0
    %1176 = vmatprep.subr.bf16.mxu0 0
    %1177 = vmatpush1.bf16.msra.mxu0 0
    %1178 = vmatprep.subr.bf16.mxu0 0
    %1179 = vmatpush1.bf16.msra.mxu0 0
    %1180 = vmatprep.subr.bf16.mxu0 0
    %1181 = vmatpush1.bf16.msra.mxu0 0
    %1182 = vmatprep.subr.bf16.mxu0 0
    %1183 = vmatpush1.bf16.msra.mxu0 0
    %1184 = vmatprep.subr.bf16.mxu0 0
    %1185 = vmatpush1.bf16.msra.mxu0 0
    %1186 = vmatprep.subr.bf16.mxu0 0
    %1187 = vmatpush1.bf16.msra.mxu0 0
    %1188 = vmatprep.subr.bf16.mxu0 0
    %1189 = vmatpush1.bf16.msra.mxu0 0
    %1190 = vmatprep.subr.bf16.mxu0 0
    %1191 = vmatpush1.bf16.msra.mxu0 0
    %1192 = vmatprep.subr.bf16.mxu0 0
    %1193 = vmatpush1.bf16.msra.mxu0 0
    %1194 = vmatprep.subr.bf16.mxu0 0
    %1195 = vmatpush1.bf16.msra.mxu0 0
    %1196 = vmatprep.subr.bf16.mxu0 0
    %1197 = vmatpush1.bf16.msra.mxu0 0
    %1198 = vmatprep.subr.bf16.mxu0 0
    %1199 = vmatpush1.bf16.msra.mxu0 0
    %1200 = vmatprep.subr.bf16.mxu0 0
    %1201 = vmatpush1.bf16.msra.mxu0 0
    %1202 = vmatprep.subr.bf16.mxu0 0
    %1203 = vmatpush1.bf16.msra.mxu0 0
    %1204 = vmatprep.mubr.bf16.mxu0 0
    %1205 = vmatmul.mubr.bf16.gmra.mrb[0].mxu0 %v1167
    %v1206 = vpop.f32.mrb[0].mxu0
    %v1207 = vadd.f32 0.0, %v1206
    %v1208 = vpop.f32.mrb[0].mxu0
    %v1209 = vpop.f32.mrb[0].mxu0
    %v1210 = vpop.f32.mrb[0].mxu0
    %1211 = vdwg.mxu0
    %v1212 = vpack.c.bf16 %v1207, %v1159
    %1214 = vrot.lane.b32.xlu0 %v1212, 24
    %v1215 = vpop.permute.xlu0 %1214
    %vm1217 = vcmask 261312
    %1218 = vst.msk [vmem:[#allocation3] sm:$0xff] %vm1217, %v1215
    %v1219 = vld [vmem:[#allocation3] sm:$0xff]
    %v1220 = vld [vmem:[%s5] sm:$0xf]
    %v1221 = vld [vmem:[%s5 + $0x4] sm:$0xf]
    %v1222 = vld [vmem:[%s5 + $0x8] sm:$0xf]
    %v1223 = vld [vmem:[%s5 + $0xc] sm:$0xf]
    %v1224 = vld [vmem:[%s6] sm:$0x1]
    %v1226 = vlaneseq
    %v1227 = vshrl.u32 %v1226, 7
    %v1228 = vsub.s32 0, %v1227
    %v1229 = vrot.slane %v1224, %v1228
    %v1235 = vunpack.c.l.b16 %v1220
    %v1236 = vunpack.c.l.b16 %v1221
    %v1237 = vunpack.c.l.b16 %v1222
    %v1238 = vunpack.c.l.b16 %v1223
    %v1239 = vpack.c.b16 %v1236, %v1235
    %v1240 = vpack.c.b16 %v1238, %v1237
    %v1244 = vsel %vm117, %v1219, 0
    %1246 = vmatprep.subr.bf16.mxu0 0
    %1247 = vmatpush1.bf16.msra.mxu0 %v1239
    %1248 = vmatprep.subr.bf16.mxu0 0
    %1249 = vmatpush1.bf16.msra.mxu0 %v1240
    %1250 = vmatprep.subr.bf16.mxu0 0
    %1251 = vmatpush1.bf16.msra.mxu0 0
    %1252 = vmatprep.subr.bf16.mxu0 0
    %1253 = vmatpush1.bf16.msra.mxu0 0
    %1254 = vmatprep.subr.bf16.mxu0 0
    %1255 = vmatpush1.bf16.msra.mxu0 0
    %1256 = vmatprep.subr.bf16.mxu0 0
    %1257 = vmatpush1.bf16.msra.mxu0 0
    %1258 = vmatprep.subr.bf16.mxu0 0
    %1259 = vmatpush1.bf16.msra.mxu0 0
    %1260 = vmatprep.subr.bf16.mxu0 0
    %1261 = vmatpush1.bf16.msra.mxu0 0
    %1262 = vmatprep.subr.bf16.mxu0 0
    %1263 = vmatpush1.bf16.msra.mxu0 0
    %1264 = vmatprep.subr.bf16.mxu0 0
    %1265 = vmatpush1.bf16.msra.mxu0 0
    %1266 = vmatprep.subr.bf16.mxu0 0
    %1267 = vmatpush1.bf16.msra.mxu0 0
    %1268 = vmatprep.subr.bf16.mxu0 0
    %1269 = vmatpush1.bf16.msra.mxu0 0
    %1270 = vmatprep.subr.bf16.mxu0 0
    %1271 = vmatpush1.bf16.msra.mxu0 0
    %1272 = vmatprep.subr.bf16.mxu0 0
    %1273 = vmatpush1.bf16.msra.mxu0 0
    %1274 = vmatprep.subr.bf16.mxu0 0
    %1275 = vmatpush1.bf16.msra.mxu0 0
    %1276 = vmatprep.subr.bf16.mxu0 0
    %1277 = vmatpush1.bf16.msra.mxu0 0
    %1278 = vmatprep.mubr.bf16.mxu0 0
    %1279 = vmatmul.mubr.bf16.gmra.mrb[0].mxu0 %v1244
    %v1280 = vpop.f32.mrb[0].mxu0
    %v1281 = vadd.f32 %v1229, %v1280
    %v1282 = vpop.f32.mrb[0].mxu0
    %v1283 = vpop.f32.mrb[0].mxu0
    %v1284 = vadd.f32 %v1229, %v1283
    %v1285 = vpop.f32.mrb[0].mxu0
    %1286 = vdwg.mxu0
    %1287 = vst.msk [vmem:[#allocation12] sm:$0xff] %vm117, %v1281
    %1288 = vst.msk [vmem:[#allocation12 + $0x8] sm:$0xff] %vm117, %v1284
    // Predicated region
    $region46: #{tpu_custom_call.1} parent=1 // pred_check
      _
    $region47: #{tpu_custom_call.1} parent=1 // pred_check_branch
      %1290 = sbr.rel (0) target = $region49
    $region48: #{tpu_custom_call.1} parent=1 // pred_region
      %s1292 = ssub.s32 256, 256
      %1293 = vsyncadd [#allocation6], %s1292
      %s1294 = sshll.u32 [#allocation12], 4
      %s1295 = int_to_ptr.vmem [resolvable:$true] %s1294
      %1300 = dma.vmem_to_hbm [thread:$0]  %s1295, 256, %s7, [#allocation6], 128, 128, 8
    $region49: #{tpu_custom_call.1} parent=1 // pred_fallthru
      _
    // Predicated region
    $region50: #{tpu_custom_call.1} parent=1 // pred_check
      _
    $region51: #{tpu_custom_call.1} parent=1 // pred_check_branch
      %1302 = sbr.rel (0) target = $region53
    $region52: #{tpu_custom_call.1} parent=1 // pred_region
      %1303 = dma.done [#allocation6], 256
    $region53: #{tpu_custom_call.1} parent=1 // pred_fallthru
      _
    %1304 = vsyncpa [#allocation5], 1
    %1305 = vsyncpa [#allocation8], 1
    %1306 = vsyncpa [#allocation11], 1
    %1307 = vsyncpa [#allocation6], 1

// kernel: tpu_custom_call.1
$region0: #{tpu_custom_call.1}
  #allocation0 [shape = 'u32[]', space=smem, size = 0x4, offset = 0x4, fixed_abs, tag = 'smem constant byte address 0x4 - core index']
  #allocation1 [shape = 'u32[144,128]{1,0:T(1,128)}', space=vmem, size = 0x12000, scoped, tag = 'internal scratch']
  #allocation2 [shape = 'bf16[16,96]{1,0:T(16,128)(2,1)}', space=vmem, size = 0x1000, scoped, tag = 'scratch operand']
  #allocation3 [shape = 'bf16[16,32]{1,0:T(16,128)(2,1)}', space=vmem, size = 0x1000, scoped, tag = 'scratch operand']
  %s0 = inlined_call_operand.hbm [shape: bf16[2,8,32], index: 0, kind: input, shape index: {}]
  %s1 = inlined_call_operand.hbm [shape: bf16[2,8,32], index: 1, kind: input, shape index: {}]
  %s2 = inlined_call_operand.hbm [shape: bf16[2,8,32], index: 2, kind: input, shape index: {}]
  %s3 = inlined_call_operand.hbm [shape: bf16[32,96], index: 3, kind: input, shape index: {}]
  %s4 = inlined_call_operand.vmem [shape: f32[1,96], index: 4, kind: input, shape index: {}]
  %s5 = inlined_call_operand.vmem [shape: bf16[32,32], index: 5, kind: input, shape index: {}]
  %s6 = inlined_call_operand.vmem [shape: f32[1,32], index: 6, kind: input, shape index: {}]
  %s7 = inlined_call_operand.hbm [shape: f32[2,8,32], index: 7, kind: output, shape index: {}]
  %s8 = sld [smem:[#allocation0]]
  $region54: #{tpu_custom_call.1} parent=0
    _
  %s10 = ssub.s32 1, %s8
  %s11 = scalar_select 0, %s10, %s8
  $region1: #{tpu_custom_call.1} parent=0
    #allocation4 [shape = 'u8[4096]{0}', space=vmem, size = 0x1000, scoped, tag = 'input window, operand 0, single buffered']
    #allocation5 [shape = 's32[1]{0}', space=sflag, size = 0x4, scoped, tag = 'scoped memory for tpu_custom_call.1']
    #allocation6 [shape = 's32[1]{0}', space=sflag, size = 0x4, scoped, tag = 'scoped memory for tpu_custom_call.1']
    #allocation7 [shape = 'u8[4096]{0}', space=vmem, size = 0x1000, scoped, tag = 'input window, operand 1, single buffered']
    #allocation8 [shape = 's32[1]{0}', space=sflag, size = 0x4, scoped, tag = 'scoped memory for tpu_custom_call.1']
    #allocation9 [shape = 'u8[4096]{0}', space=vmem, size = 0x1000, scoped, tag = 'input window, operand 2, single buffered']
    #allocation10 [shape = 'u8[8192]{0}', space=vmem, size = 0x2000, scoped, tag = 'input window, operand 3, single buffered']
    #allocation11 [shape = 's32[1]{0}', space=sflag, size = 0x4, scoped, tag = 'scoped memory for tpu_custom_call.1']
    #allocation12 [shape = 'u8[8192]{0}', space=vmem, size = 0x2000, scoped, tag = 'output window, operand 0, single buffered']
    %12 = vsyncpa [#allocation5], 0
    %13 = vsyncpa [#allocation8], 0
    %14 = vsyncpa [#allocation11], 0
    %15 = vsyncpa [#allocation6], 0
    // Predicated region
    $region2: #{tpu_custom_call.1} parent=1 // pred_check
      _
    $region3: #{tpu_custom_call.1} parent=1 // pred_check_branch
      %17 = sbr.rel (0) target = $region5
    $region4: #{tpu_custom_call.1} parent=1 // pred_region
      %s19 = ssub.s32 128, 128
      %20 = vsyncadd [#allocation5], %s19
      %s21 = sshll.u32 [#allocation4], 4
      %s22 = int_to_ptr.vmem [resolvable:$true] %s21
      %27 = dma.hbm_to_vmem [thread:$0]  %s0, 128, %s22, [#allocation5], 64, 64, 4
    $region5: #{tpu_custom_call.1} parent=1 // pred_fallthru
      _
    // Predicated region
    $region6: #{tpu_custom_call.1} parent=1 // pred_check
      _
    $region7: #{tpu_custom_call.1} parent=1 // pred_check_branch
      %29 = sbr.rel (0) target = $region9
    $region8: #{tpu_custom_call.1} parent=1 // pred_region
      %s31 = ssub.s32 128, 128
      %32 = vsyncadd [#allocation8], %s31
      %s33 = sshll.u32 [#allocation7], 4
      %s34 = int_to_ptr.vmem [resolvable:$true] %s33
      %39 = dma.hbm_to_vmem [thread:$0]  %s1, 128, %s34, [#allocation8], 64, 64, 4
    $region9: #{tpu_custom_call.1} parent=1 // pred_fallthru
      _
    // Predicated region
    $region10: #{tpu_custom_call.1} parent=1 // pred_check
      _
    $region11: #{tpu_custom_call.1} parent=1 // pred_check_branch
      %41 = sbr.rel (0) target = $region13
    $region12: #{tpu_custom_call.1} parent=1 // pred_region
      %s43 = ssub.s32 128, 128
      %44 = vsyncadd [#allocation8], %s43
      %s45 = sshll.u32 [#allocation9], 4
      %s46 = int_to_ptr.vmem [resolvable:$true] %s45
      %51 = dma.hbm_to_vmem [thread:$0]  %s2, 128, %s46, [#allocation8], 64, 64, 4
    $region13: #{tpu_custom_call.1} parent=1 // pred_fallthru
      _
    // Predicated region
    $region14: #{tpu_custom_call.1} parent=1 // pred_check
      _
    $region15: #{tpu_custom_call.1} parent=1 // pred_check_branch
      %53 = sbr.rel (0) target = $region17
    $region16: #{tpu_custom_call.1} parent=1 // pred_region
      %s55 = ssub.s32 256, 256
      %56 = vsyncadd [#allocation11], %s55
      %s57 = sshll.u32 [#allocation10], 4
      %s58 = int_to_ptr.vmem [resolvable:$true] %s57
      %63 = dma.hbm_to_vmem [thread:$0]  %s3, 256, %s58, [#allocation11], 64, 64, 4
    $region17: #{tpu_custom_call.1} parent=1 // pred_fallthru
      _
    // Predicated region
    $region18: #{tpu_custom_call.1} parent=1 // pred_check
      _
    $region19: #{tpu_custom_call.1} parent=1 // pred_check_branch
      %65 = sbr.rel (0) target = $region21
    $region20: #{tpu_custom_call.1} parent=1 // pred_region
      _
    $region21: #{tpu_custom_call.1} parent=1 // pred_fallthru
      _
    // Predicated region
    $region22: #{tpu_custom_call.1} parent=1 // pred_check
      _
    $region23: #{tpu_custom_call.1} parent=1 // pred_check_branch
      %67 = sbr.rel (0) target = $region25
    $region24: #{tpu_custom_call.1} parent=1 // pred_region
      _
    $region25: #{tpu_custom_call.1} parent=1 // pred_fallthru
      _
    // Predicated region
    $region26: #{tpu_custom_call.1} parent=1 // pred_check
      _
    $region27: #{tpu_custom_call.1} parent=1 // pred_check_branch
      %69 = sbr.rel (0) target = $region29
    $region28: #{tpu_custom_call.1} parent=1 // pred_region
      _
    $region29: #{tpu_custom_call.1} parent=1 // pred_fallthru
      _
    // Predicated region
    $region30: #{tpu_custom_call.1} parent=1 // pred_check
      _
    $region31: #{tpu_custom_call.1} parent=1 // pred_check_branch
      %71 = sbr.rel (0) target = $region33
    $region32: #{tpu_custom_call.1} parent=1 // pred_region
      %72 = dma.done [#allocation5], 128
    $region33: #{tpu_custom_call.1} parent=1 // pred_fallthru
      _
    // Predicated region
    $region34: #{tpu_custom_call.1} parent=1 // pred_check
      _
    $region35: #{tpu_custom_call.1} parent=1 // pred_check_branch
      %74 = sbr.rel (0) target = $region37
    $region36: #{tpu_custom_call.1} parent=1 // pred_region
      %75 = dma.done [#allocation8], 128
    $region37: #{tpu_custom_call.1} parent=1 // pred_fallthru
      _
    // Predicated region
    $region38: #{tpu_custom_call.1} parent=1 // pred_check
      _
    $region39: #{tpu_custom_call.1} parent=1 // pred_check_branch
      %77 = sbr.rel (0) target = $region41
    $region40: #{tpu_custom_call.1} parent=1 // pred_region
      %78 = dma.done [#allocation8], 128
    $region41: #{tpu_custom_call.1} parent=1 // pred_fallthru
      _
    // Predicated region
    $region42: #{tpu_custom_call.1} parent=1 // pred_check
      _
    $region43: #{tpu_custom_call.1} parent=1 // pred_check_branch
      %80 = sbr.rel (0) target = $region45
    $region44: #{tpu_custom_call.1} parent=1 // pred_region
      %81 = dma.done [#allocation11], 256
    $region45: #{tpu_custom_call.1} parent=1 // pred_fallthru
      _
    %v83 = vld [vmem:[#allocation10] sm:$0xf]
    %v84 = vld [vmem:[#allocation10 + $0x4] sm:$0xf]
    %v85 = vld [vmem:[#allocation10 + $0x8] sm:$0xf]
    %v86 = vld [vmem:[#allocation10 + $0xc] sm:$0xf]
    %v87 = vld [vmem:[%s4] sm:$0x1]
    %v88 = vld [vmem:[#allocation4] sm:$0xf]
    %v89 = vld [vmem:[#allocation4 + $0x4] sm:$0xf]
    %v90 = vld [vmem:[#allocation7] sm:$0xf]
    %v91 = vld [vmem:[#allocation7 + $0x4] sm:$0xf]
    %v92 = vld [vmem:[#allocation9] sm:$0xf]
    %v93 = vld [vmem:[#allocation9 + $0x4] sm:$0xf]
    %v95 = vlaneseq
    %v96 = vshrl.u32 %v95, 7
    %v97 = vsub.s32 0, %v96
    %v98 = vrot.slane %v87, %v97
    %v102 = vunpack.c.l.b16 %v88
    %v103 = vunpack.c.l.b16 %v89
    %v104 = vpack.c.b16 %v103, %v102
    %v109 = vunpack.c.l.b16 %v83
    %v110 = vunpack.c.l.b16 %v84
    %v111 = vunpack.c.l.b16 %v85
    %v112 = vunpack.c.l.b16 %v86
    %v113 = vpack.c.b16 %v110, %v109
    %v114 = vpack.c.b16 %v112, %v111
    %vm117 = vcmask 261120
    %v119 = vsel %vm117, %v104, 0
    %121 = vmatprep.subr.bf16.mxu0 0
    %122 = vmatpush1.bf16.msra.mxu0 %v113
    %123 = vmatprep.subr.bf16.mxu0 0
    %124 = vmatpush1.bf16.msra.mxu0 %v114
    %125 = vmatprep.subr.bf16.mxu0 0
    %126 = vmatpush1.bf16.msra.mxu0 0
    %127 = vmatprep.subr.bf16.mxu0 0
    %128 = vmatpush1.bf16.msra.mxu0 0
    %129 = vmatprep.subr.bf16.mxu0 0
    %130 = vmatpush1.bf16.msra.mxu0 0
    %131 = vmatprep.subr.bf16.mxu0 0
    %132 = vmatpush1.bf16.msra.mxu0 0
    %133 = vmatprep.subr.bf16.mxu0 0
    %134 = vmatpush1.bf16.msra.mxu0 0
    %135 = vmatprep.subr.bf16.mxu0 0
    %136 = vmatpush1.bf16.msra.mxu0 0
    %137 = vmatprep.subr.bf16.mxu0 0
    %138 = vmatpush1.bf16.msra.mxu0 0
    %139 = vmatprep.subr.bf16.mxu0 0
    %140 = vmatpush1.bf16.msra.mxu0 0
    %141 = vmatprep.subr.bf16.mxu0 0
    %142 = vmatpush1.bf16.msra.mxu0 0
    %143 = vmatprep.subr.bf16.mxu0 0
    %144 = vmatpush1.bf16.msra.mxu0 0
    %145 = vmatprep.subr.bf16.mxu0 0
    %146 = vmatpush1.bf16.msra.mxu0 0
    %147 = vmatprep.subr.bf16.mxu0 0
    %148 = vmatpush1.bf16.msra.mxu0 0
    %149 = vmatprep.subr.bf16.mxu0 0
    %150 = vmatpush1.bf16.msra.mxu0 0
    %151 = vmatprep.subr.bf16.mxu0 0
    %152 = vmatpush1.bf16.msra.mxu0 0
    %153 = vmatprep.mubr.bf16.mxu0 0
    %154 = vmatmul.mubr.bf16.gmra.mrb[0].mxu0 %v119
    %v155 = vpop.f32.mrb[0].mxu0
    %v156 = vadd.f32 %v98, %v155
    %v157 = vpop.f32.mrb[0].mxu0
    %v158 = vpop.f32.mrb[0].mxu0
    %v159 = vadd.f32 %v98, %v158
    %v160 = vpop.f32.mrb[0].mxu0
    %161 = vdwg.mxu0
    %v164 = vunpack.c.l.b16 %v90
    %v165 = vunpack.c.l.b16 %v91
    %v166 = vpack.c.b16 %v165, %v164
    %167 = vrot.lane.b32.xlu0 %v113, 96
    %v168 = vpop.permute.xlu0 %167
    %169 = vrot.lane.b32.xlu0 %v114, 96
    %v170 = vpop.permute.xlu0 %169
    %173 = vrot.lane.b32.xlu0 %v98, 96
    %v174 = vpop.permute.xlu0 %173
    %v177 = vsel %vm117, %v166, 0
    %179 = vmatprep.subr.bf16.mxu0 0
    %180 = vmatpush1.bf16.msra.mxu0 %v168
    %181 = vmatprep.subr.bf16.mxu0 0
    %182 = vmatpush1.bf16.msra.mxu0 %v170
    %183 = vmatprep.subr.bf16.mxu0 0
    %184 = vmatpush1.bf16.msra.mxu0 0
    %185 = vmatprep.subr.bf16.mxu0 0
    %186 = vmatpush1.bf16.msra.mxu0 0
    %187 = vmatprep.subr.bf16.mxu0 0
    %188 = vmatpush1.bf16.msra.mxu0 0
    %189 = vmatprep.subr.bf16.mxu0 0
    %190 = vmatpush1.bf16.msra.mxu0 0
    %191 = vmatprep.subr.bf16.mxu0 0
    %192 = vmatpush1.bf16.msra.mxu0 0
    %193 = vmatprep.subr.bf16.mxu0 0
    %194 = vmatpush1.bf16.msra.mxu0 0
    %195 = vmatprep.subr.bf16.mxu0 0
    %196 = vmatpush1.bf16.msra.mxu0 0
    %197 = vmatprep.subr.bf16.mxu0 0
    %198 = vmatpush1.bf16.msra.mxu0 0
    %199 = vmatprep.subr.bf16.mxu0 0
    %200 = vmatpush1.bf16.msra.mxu0 0
    %201 = vmatprep.subr.bf16.mxu0 0
    %202 = vmatpush1.bf16.msra.mxu0 0
    %203 = vmatprep.subr.bf16.mxu0 0
    %204 = vmatpush1.bf16.msra.mxu0 0
    %205 = vmatprep.subr.bf16.mxu0 0
    %206 = vmatpush1.bf16.msra.mxu0 0
    %207 = vmatprep.subr.bf16.mxu0 0
    %208 = vmatpush1.bf16.msra.mxu0 0
    %209 = vmatprep.subr.bf16.mxu0 0
    %210 = vmatpush1.bf16.msra.mxu0 0
    %211 = vmatprep.mubr.bf16.mxu0 0
    %212 = vmatmul.mubr.bf16.gmra.mrb[0].mxu0 %v177
    %v213 = vpop.f32.mrb[0].mxu0
    %v214 = vadd.f32 %v174, %v213
    %v215 = vpop.f32.mrb[0].mxu0
    %v216 = vpop.f32.mrb[0].mxu0
    %v217 = vadd.f32 %v174, %v216
    %v218 = vpop.f32.mrb[0].mxu0
    %219 = vdwg.mxu0
    %v222 = vunpack.c.l.b16 %v92
    %v223 = vunpack.c.l.b16 %v93
    %v224 = vpack.c.b16 %v223, %v222
    %225 = vrot.lane.b32.xlu0 %v113, 64
    %v226 = vpop.permute.xlu0 %225
    %227 = vrot.lane.b32.xlu0 %v114, 64
    %v228 = vpop.permute.xlu0 %227
    %231 = vrot.lane.b32.xlu0 %v98, 64
    %v232 = vpop.permute.xlu0 %231
    %v235 = vsel %vm117, %v224, 0
    %237 = vmatprep.subr.bf16.mxu0 0
    %238 = vmatpush1.bf16.msra.mxu0 %v226
    %239 = vmatprep.subr.bf16.mxu0 0
    %240 = vmatpush1.bf16.msra.mxu0 %v228
    %241 = vmatprep.subr.bf16.mxu0 0
    %242 = vmatpush1.bf16.msra.mxu0 0
    %243 = vmatprep.subr.bf16.mxu0 0
    %244 = vmatpush1.bf16.msra.mxu0 0
    %245 = vmatprep.subr.bf16.mxu0 0
    %246 = vmatpush1.bf16.msra.mxu0 0
    %247 = vmatprep.subr.bf16.mxu0 0
    %248 = vmatpush1.bf16.msra.mxu0 0
    %249 = vmatprep.subr.bf16.mxu0 0
    %250 = vmatpush1.bf16.msra.mxu0 0
    %251 = vmatprep.subr.bf16.mxu0 0
    %252 = vmatpush1.bf16.msra.mxu0 0
    %253 = vmatprep.subr.bf16.mxu0 0
    %254 = vmatpush1.bf16.msra.mxu0 0
    %255 = vmatprep.subr.bf16.mxu0 0
    %256 = vmatpush1.bf16.msra.mxu0 0
    %257 = vmatprep.subr.bf16.mxu0 0
    %258 = vmatpush1.bf16.msra.mxu0 0
    %259 = vmatprep.subr.bf16.mxu0 0
    %260 = vmatpush1.bf16.msra.mxu0 0
    %261 = vmatprep.subr.bf16.mxu0 0
    %262 = vmatpush1.bf16.msra.mxu0 0
    %263 = vmatprep.subr.bf16.mxu0 0
    %264 = vmatpush1.bf16.msra.mxu0 0
    %265 = vmatprep.subr.bf16.mxu0 0
    %266 = vmatpush1.bf16.msra.mxu0 0
    %267 = vmatprep.subr.bf16.mxu0 0
    %268 = vmatpush1.bf16.msra.mxu0 0
    %269 = vmatprep.mubr.bf16.mxu0 0
    %270 = vmatmul.mubr.bf16.gmra.mrb[0].mxu0 %v235
    %v271 = vpop.f32.mrb[0].mxu0
    %v272 = vadd.f32 %v232, %v271
    %v273 = vpop.f32.mrb[0].mxu0
    %v274 = vpop.f32.mrb[0].mxu0
    %v275 = vadd.f32 %v232, %v274
    %v276 = vpop.f32.mrb[0].mxu0
    %277 = vdwg.mxu0
    %v278 = vpack.c.bf16 %v159, %v156
    %279 = vst.msk [vmem:[#allocation2] sm:$0xff] %vm117, %v278
    %v280 = vpack.c.bf16 %v217, %v214
    %282 = vrot.lane.b32.xlu0 %v280, 32
    %v283 = vpop.permute.xlu0 %282
    %vm285 = vcmask 523520
    %286 = vst.msk [vmem:[#allocation2] sm:$0xff] %vm285, %v283
    %v287 = vpack.c.bf16 %v275, %v272
    %289 = vrot.lane.b32.xlu0 %v287, 64
    %v290 = vpop.permute.xlu0 %289
    %vm292 = vcmask 785920
    %293 = vst.msk [vmem:[#allocation2] sm:$0xff] %vm292, %v290
    %v294 = vld [vmem:[#allocation2] sm:$0xff]
    %v296 = vunpack.c.l.b16 %v294
    %v297 = vunpack.c.h.b16 %v294
    %v298 = vpack.c.b16 %v296, %v296
    %v299 = vpack.c.b16 %v297, %v297
    %300 = vrot.lane.b32.xlu0 %v298, 96
    %v301 = vpop.permute.xlu0 %300
    %vm302 = vcmask 64512
    %v304 = vsel %vm302, %v298, 0
    %v307 = vsel %vm302, %v301, 0
    %309 = vmatprep.subr.bf16.mxu0 0
    %310 = vmatpush1.bf16.xpose.msra.mxu0 %v307
    %311 = vmatprep.subr.bf16.mxu0 0
    %312 = vmatpush1.bf16.xpose.msra.mxu0 0
    %313 = vmatprep.subr.bf16.mxu0 0
    %314 = vmatpush1.bf16.xpose.msra.mxu0 0
    %315 = vmatprep.subr.bf16.mxu0 0
    %316 = vmatpush1.bf16.xpose.msra.mxu0 0
    %317 = vmatprep.subr.bf16.mxu0 0
    %318 = vmatpush1.bf16.xpose.msra.mxu0 0
    %319 = vmatprep.subr.bf16.mxu0 0
    %320 = vmatpush1.bf16.xpose.msra.mxu0 0
    %321 = vmatprep.subr.bf16.mxu0 0
    %322 = vmatpush1.bf16.xpose.msra.mxu0 0
    %323 = vmatprep.subr.bf16.mxu0 0
    %324 = vmatpush1.bf16.xpose.msra.mxu0 0
    %325 = vmatprep.subr.bf16.mxu0 0
    %326 = vmatpush1.bf16.xpose.msra.mxu0 0
    %327 = vmatprep.subr.bf16.mxu0 0
    %328 = vmatpush1.bf16.xpose.msra.mxu0 0
    %329 = vmatprep.subr.bf16.mxu0 0
    %330 = vmatpush1.bf16.xpose.msra.mxu0 0
    %331 = vmatprep.subr.bf16.mxu0 0
    %332 = vmatpush1.bf16.xpose.msra.mxu0 0
    %333 = vmatprep.subr.bf16.mxu0 0
    %334 = vmatpush1.bf16.xpose.msra.mxu0 0
    %335 = vmatprep.subr.bf16.mxu0 0
    %336 = vmatpush1.bf16.xpose.msra.mxu0 0
    %337 = vmatprep.subr.bf16.mxu0 0
    %338 = vmatpush1.bf16.xpose.msra.mxu0 0
    %339 = vmatprep.subr.bf16.mxu0 0
    %340 = vmatpush1.bf16.xpose.msra.mxu0 0
    %341 = vmatprep.mubr.bf16.mxu0 0
    %342 = vmatmul.mubr.bf16.gmra.mrb[0].mxu0 %v304
    %v343 = vpop.f32.mrb[0].mxu0
    %v344 = vadd.f32 0.0, %v343
    %v345 = vpop.f32.mrb[0].mxu0
    %v346 = vpop.f32.mrb[0].mxu0
    %v347 = vpop.f32.mrb[0].mxu0
    %348 = vdwg.mxu0
    %349 = vrot.lane.b32.xlu0 %v299, 96
    %v350 = vpop.permute.xlu0 %349
    %v352 = vsel %vm302, %v299, 0
    %v355 = vsel %vm302, %v350, 0
    %357 = vmatprep.subr.bf16.mxu0 0
    %358 = vmatpush1.bf16.xpose.msra.mxu0 %v355
    %359 = vmatprep.subr.bf16.mxu0 0
    %360 = vmatpush1.bf16.xpose.msra.mxu0 0
    %361 = vmatprep.subr.bf16.mxu0 0
    %362 = vmatpush1.bf16.xpose.msra.mxu0 0
    %363 = vmatprep.subr.bf16.mxu0 0
    %364 = vmatpush1.bf16.xpose.msra.mxu0 0
    %365 = vmatprep.subr.bf16.mxu0 0
    %366 = vmatpush1.bf16.xpose.msra.mxu0 0
    %367 = vmatprep.subr.bf16.mxu0 0
    %368 = vmatpush1.bf16.xpose.msra.mxu0 0
    %369 = vmatprep.subr.bf16.mxu0 0
    %370 = vmatpush1.bf16.xpose.msra.mxu0 0
    %371 = vmatprep.subr.bf16.mxu0 0
    %372 = vmatpush1.bf16.xpose.msra.mxu0 0
    %373 = vmatprep.subr.bf16.mxu0 0
    %374 = vmatpush1.bf16.xpose.msra.mxu0 0
    %375 = vmatprep.subr.bf16.mxu0 0
    %376 = vmatpush1.bf16.xpose.msra.mxu0 0
    %377 = vmatprep.subr.bf16.mxu0 0
    %378 = vmatpush1.bf16.xpose.msra.mxu0 0
    %379 = vmatprep.subr.bf16.mxu0 0
    %380 = vmatpush1.bf16.xpose.msra.mxu0 0
    %381 = vmatprep.subr.bf16.mxu0 0
    %382 = vmatpush1.bf16.xpose.msra.mxu0 0
    %383 = vmatprep.subr.bf16.mxu0 0
    %384 = vmatpush1.bf16.xpose.msra.mxu0 0
    %385 = vmatprep.subr.bf16.mxu0 0
    %386 = vmatpush1.bf16.xpose.msra.mxu0 0
    %387 = vmatprep.subr.bf16.mxu0 0
    %388 = vmatpush1.bf16.xpose.msra.mxu0 0
    %389 = vmatprep.mubr.bf16.mxu0 0
    %390 = vmatmul.mubr.bf16.gmra.mrb[0].mxu0 %v352
    %v391 = vpop.f32.mrb[0].mxu0
    %v392 = vadd.f32 0.0, %v391
    %v393 = vpop.f32.mrb[0].mxu0
    %v394 = vpop.f32.mrb[0].mxu0
    %v395 = vpop.f32.mrb[0].mxu0
    %396 = vdwg.mxu0
    %v397 = vsel %vm302, %v344, -inf
    %398 = vmax.xlane.f32.xlu0 %v397
    %v399 = vpop.xlane.xlu0 %398
    %v400 = vsel %vm302, %v392, -inf
    %401 = vmax.xlane.f32.xlu0 %v400
    %v402 = vpop.xlane.xlu0 %401
    %v403 = vsub.f32 %v344, %v399
    %v404 = vsub.f32 %v392, %v402
    %v405 = vmul.f32 %v403, 1.442695
    %v406 = vpow.pop %v405
    %v407 = vmul.f32 %v404, 1.442695
    %v408 = vpow.pop %v407
    %v409 = vsel %vm302, %v406, 0.0
    %410 = vadd.xlane.f32.xlu0 %v409
    %v411 = vpop.xlane.xlu0 %410
    %v412 = vsel %vm302, %v408, 0.0
    %413 = vadd.xlane.f32.xlu0 %v412
    %v414 = vpop.xlane.xlu0 %413
    %v415 = vrcp.pop %v411
    %v416 = vrcp.pop %v414
    %v417 = vmul.f32 %v406, %v415
    %v418 = vmul.f32 %v408, %v416
    %v419 = vpack.c.bf16 %v417, %v417
    %v420 = vpack.c.bf16 %v418, %v418
    %421 = vrot.lane.b32.xlu0 %v298, 64
    %v422 = vpop.permute.xlu0 %421
    %v424 = vsel %vm302, %v419, 0
    %vm426 = vcmask 1043456
    %v428 = vsel %vm426, %v422, 0
    %430 = vmatprep.subr.bf16.mxu0 0
    %431 = vmatpush1.bf16.msra.mxu0 %v428
    %432 = vmatprep.subr.bf16.mxu0 0
    %433 = vmatpush1.bf16.msra.mxu0 0
    %434 = vmatprep.subr.bf16.mxu0 0
    %435 = vmatpush1.bf16.msra.mxu0 0
    %436 = vmatprep.subr.bf16.mxu0 0
    %437 = vmatpush1.bf16.msra.mxu0 0
    %438 = vmatprep.subr.bf16.mxu0 0
    %439 = vmatpush1.bf16.msra.mxu0 0
    %440 = vmatprep.subr.bf16.mxu0 0
    %441 = vmatpush1.bf16.msra.mxu0 0
    %442 = vmatprep.subr.bf16.mxu0 0
    %443 = vmatpush1.bf16.msra.mxu0 0
    %444 = vmatprep.subr.bf16.mxu0 0
    %445 = vmatpush1.bf16.msra.mxu0 0
    %446 = vmatprep.subr.bf16.mxu0 0
    %447 = vmatpush1.bf16.msra.mxu0 0
    %448 = vmatprep.subr.bf16.mxu0 0
    %449 = vmatpush1.bf16.msra.mxu0 0
    %450 = vmatprep.subr.bf16.mxu0 0
    %451 = vmatpush1.bf16.msra.mxu0 0
    %452 = vmatprep.subr.bf16.mxu0 0
    %453 = vmatpush1.bf16.msra.mxu0 0
    %454 = vmatprep.subr.bf16.mxu0 0
    %455 = vmatpush1.bf16.msra.mxu0 0
    %456 = vmatprep.subr.bf16.mxu0 0
    %457 = vmatpush1.bf16.msra.mxu0 0
    %458 = vmatprep.subr.bf16.mxu0 0
    %459 = vmatpush1.bf16.msra.mxu0 0
    %460 = vmatprep.subr.bf16.mxu0 0
    %461 = vmatpush1.bf16.msra.mxu0 0
    %462 = vmatprep.mubr.bf16.mxu0 0
    %463 = vmatmul.mubr.bf16.gmra.mrb[0].mxu0 %v424
    %v464 = vpop.f32.mrb[0].mxu0
    %v465 = vadd.f32 0.0, %v464
    %v466 = vpop.f32.mrb[0].mxu0
    %v467 = vpop.f32.mrb[0].mxu0
    %v468 = vpop.f32.mrb[0].mxu0
    %469 = vdwg.mxu0
    %470 = vrot.lane.b32.xlu0 %v299, 64
    %v471 = vpop.permute.xlu0 %470
    %v473 = vsel %vm302, %v420, 0
    %v476 = vsel %vm426, %v471, 0
    %478 = vmatprep.subr.bf16.mxu0 0
    %479 = vmatpush1.bf16.msra.mxu0 %v476
    %480 = vmatprep.subr.bf16.mxu0 0
    %481 = vmatpush1.bf16.msra.mxu0 0
    %482 = vmatprep.subr.bf16.mxu0 0
    %483 = vmatpush1.bf16.msra.mxu0 0
    %484 = vmatprep.subr.bf16.mxu0 0
    %485 = vmatpush1.bf16.msra.mxu0 0
    %486 = vmatprep.subr.bf16.mxu0 0
    %487 = vmatpush1.bf16.msra.mxu0 0
    %488 = vmatprep.subr.bf16.mxu0 0
    %489 = vmatpush1.bf16.msra.mxu0 0
    %490 = vmatprep.subr.bf16.mxu0 0
    %491 = vmatpush1.bf16.msra.mxu0 0
    %492 = vmatprep.subr.bf16.mxu0 0
    %493 = vmatpush1.bf16.msra.mxu0 0
    %494 = vmatprep.subr.bf16.mxu0 0
    %495 = vmatpush1.bf16.msra.mxu0 0
    %496 = vmatprep.subr.bf16.mxu0 0
    %497 = vmatpush1.bf16.msra.mxu0 0
    %498 = vmatprep.subr.bf16.mxu0 0
    %499 = vmatpush1.bf16.msra.mxu0 0
    %500 = vmatprep.subr.bf16.mxu0 0
    %501 = vmatpush1.bf16.msra.mxu0 0
    %502 = vmatprep.subr.bf16.mxu0 0
    %503 = vmatpush1.bf16.msra.mxu0 0
    %504 = vmatprep.subr.bf16.mxu0 0
    %505 = vmatpush1.bf16.msra.mxu0 0
    %506 = vmatprep.subr.bf16.mxu0 0
    %507 = vmatpush1.bf16.msra.mxu0 0
    %508 = vmatprep.subr.bf16.mxu0 0
    %509 = vmatpush1.bf16.msra.mxu0 0
    %510 = vmatprep.mubr.bf16.mxu0 0
    %511 = vmatmul.mubr.bf16.gmra.mrb[0].mxu0 %v473
    %v512 = vpop.f32.mrb[0].mxu0
    %v513 = vadd.f32 0.0, %v512
    %v514 = vpop.f32.mrb[0].mxu0
    %v515 = vpop.f32.mrb[0].mxu0
    %v516 = vpop.f32.mrb[0].mxu0
    %517 = vdwg.mxu0
    %v518 = vpack.c.bf16 %v513, %v465
    %519 = vst.msk [vmem:[#allocation3] sm:$0xff] %vm302, %v518
    %v520 = vld [vmem:[#allocation2] sm:$0xff]
    %v522 = vunpack.c.l.b16 %v520
    %v523 = vunpack.c.h.b16 %v520
    %v524 = vpack.c.b16 %v522, %v522
    %525 = vrot.lane.b32.xlu0 %v524, 120
    %v526 = vpop.permute.xlu0 %525
    %527 = vrot.lane.b32.xlu0 %v524, 88
    %v528 = vpop.permute.xlu0 %527
    %v530 = vsel %vm302, %v526, 0
    %v533 = vsel %vm302, %v528, 0
    %535 = vmatprep.subr.bf16.mxu0 0
    %536 = vmatpush1.bf16.xpose.msra.mxu0 %v533
    %537 = vmatprep.subr.bf16.mxu0 0
    %538 = vmatpush1.bf16.xpose.msra.mxu0 0
    %539 = vmatprep.subr.bf16.mxu0 0
    %540 = vmatpush1.bf16.xpose.msra.mxu0 0
    %541 = vmatprep.subr.bf16.mxu0 0
    %542 = vmatpush1.bf16.xpose.msra.mxu0 0
    %543 = vmatprep.subr.bf16.mxu0 0
    %544 = vmatpush1.bf16.xpose.msra.mxu0 0
    %545 = vmatprep.subr.bf16.mxu0 0
    %546 = vmatpush1.bf16.xpose.msra.mxu0 0
    %547 = vmatprep.subr.bf16.mxu0 0
    %548 = vmatpush1.bf16.xpose.msra.mxu0 0
    %549 = vmatprep.subr.bf16.mxu0 0
    %550 = vmatpush1.bf16.xpose.msra.mxu0 0
    %551 = vmatprep.subr.bf16.mxu0 0
    %552 = vmatpush1.bf16.xpose.msra.mxu0 0
    %553 = vmatprep.subr.bf16.mxu0 0
    %554 = vmatpush1.bf16.xpose.msra.mxu0 0
    %555 = vmatprep.subr.bf16.mxu0 0
    %556 = vmatpush1.bf16.xpose.msra.mxu0 0
    %557 = vmatprep.subr.bf16.mxu0 0
    %558 = vmatpush1.bf16.xpose.msra.mxu0 0
    %559 = vmatprep.subr.bf16.mxu0 0
    %560 = vmatpush1.bf16.xpose.msra.mxu0 0
    %561 = vmatprep.subr.bf16.mxu0 0
    %562 = vmatpush1.bf16.xpose.msra.mxu0 0
    %563 = vmatprep.subr.bf16.mxu0 0
    %564 = vmatpush1.bf16.xpose.msra.mxu0 0
    %565 = vmatprep.subr.bf16.mxu0 0
    %566 = vmatpush1.bf16.xpose.msra.mxu0 0
    %567 = vmatprep.mubr.bf16.mxu0 0
    %568 = vmatmul.mubr.bf16.gmra.mrb[0].mxu0 %v530
    %v569 = vpop.f32.mrb[0].mxu0
    %v570 = vadd.f32 0.0, %v569
    %v571 = vpop.f32.mrb[0].mxu0
    %v572 = vpop.f32.mrb[0].mxu0
    %v573 = vpop.f32.mrb[0].mxu0
    %574 = vdwg.mxu0
    %v575 = vpack.c.b16 %v523, %v523
    %576 = vrot.lane.b32.xlu0 %v575, 120
    %v577 = vpop.permute.xlu0 %576
    %578 = vrot.lane.b32.xlu0 %v575, 88
    %v579 = vpop.permute.xlu0 %578
    %v581 = vsel %vm302, %v577, 0
    %v584 = vsel %vm302, %v579, 0
    %586 = vmatprep.subr.bf16.mxu0 0
    %587 = vmatpush1.bf16.xpose.msra.mxu0 %v584
    %588 = vmatprep.subr.bf16.mxu0 0
    %589 = vmatpush1.bf16.xpose.msra.mxu0 0
    %590 = vmatprep.subr.bf16.mxu0 0
    %591 = vmatpush1.bf16.xpose.msra.mxu0 0
    %592 = vmatprep.subr.bf16.mxu0 0
    %593 = vmatpush1.bf16.xpose.msra.mxu0 0
    %594 = vmatprep.subr.bf16.mxu0 0
    %595 = vmatpush1.bf16.xpose.msra.mxu0 0
    %596 = vmatprep.subr.bf16.mxu0 0
    %597 = vmatpush1.bf16.xpose.msra.mxu0 0
    %598 = vmatprep.subr.bf16.mxu0 0
    %599 = vmatpush1.bf16.xpose.msra.mxu0 0
    %600 = vmatprep.subr.bf16.mxu0 0
    %601 = vmatpush1.bf16.xpose.msra.mxu0 0
    %602 = vmatprep.subr.bf16.mxu0 0
    %603 = vmatpush1.bf16.xpose.msra.mxu0 0
    %604 = vmatprep.subr.bf16.mxu0 0
    %605 = vmatpush1.bf16.xpose.msra.mxu0 0
    %606 = vmatprep.subr.bf16.mxu0 0
    %607 = vmatpush1.bf16.xpose.msra.mxu0 0
    %608 = vmatprep.subr.bf16.mxu0 0
    %609 = vmatpush1.bf16.xpose.msra.mxu0 0
    %610 = vmatprep.subr.bf16.mxu0 0
    %611 = vmatpush1.bf16.xpose.msra.mxu0 0
    %612 = vmatprep.subr.bf16.mxu0 0
    %613 = vmatpush1.bf16.xpose.msra.mxu0 0
    %614 = vmatprep.subr.bf16.mxu0 0
    %615 = vmatpush1.bf16.xpose.msra.mxu0 0
    %616 = vmatprep.subr.bf16.mxu0 0
    %617 = vmatpush1.bf16.xpose.msra.mxu0 0
    %618 = vmatprep.mubr.bf16.mxu0 0
    %619 = vmatmul.mubr.bf16.gmra.mrb[0].mxu0 %v581
    %v620 = vpop.f32.mrb[0].mxu0
    %v621 = vadd.f32 0.0, %v620
    %v622 = vpop.f32.mrb[0].mxu0
    %v623 = vpop.f32.mrb[0].mxu0
    %v624 = vpop.f32.mrb[0].mxu0
    %625 = vdwg.mxu0
    %v626 = vsel %vm302, %v570, -inf
    %627 = vmax.xlane.f32.xlu0 %v626
    %v628 = vpop.xlane.xlu0 %627
    %v629 = vsel %vm302, %v621, -inf
    %630 = vmax.xlane.f32.xlu0 %v629
    %v631 = vpop.xlane.xlu0 %630
    %v632 = vsub.f32 %v570, %v628
    %v633 = vsub.f32 %v621, %v631
    %v634 = vmul.f32 %v632, 1.442695
    %v635 = vpow.pop %v634
    %v636 = vmul.f32 %v633, 1.442695
    %v637 = vpow.pop %v636
    %v638 = vsel %vm302, %v635, 0.0
    %639 = vadd.xlane.f32.xlu0 %v638
    %v640 = vpop.xlane.xlu0 %639
    %v641 = vsel %vm302, %v637, 0.0
    %642 = vadd.xlane.f32.xlu0 %v641
    %v643 = vpop.xlane.xlu0 %642
    %v644 = vrcp.pop %v640
    %v645 = vrcp.pop %v643
    %v646 = vmul.f32 %v635, %v644
    %v647 = vmul.f32 %v637, %v645
    %v648 = vpack.c.bf16 %v646, %v646
    %v649 = vpack.c.bf16 %v647, %v647
    %650 = vrot.lane.b32.xlu0 %v524, 56
    %v651 = vpop.permute.xlu0 %650
    %v653 = vsel %vm302, %v648, 0
    %v656 = vsel %vm426, %v651, 0
    %658 = vmatprep.subr.bf16.mxu0 0
    %659 = vmatpush1.bf16.msra.mxu0 %v656
    %660 = vmatprep.subr.bf16.mxu0 0
    %661 = vmatpush1.bf16.msra.mxu0 0
    %662 = vmatprep.subr.bf16.mxu0 0
    %663 = vmatpush1.bf16.msra.mxu0 0
    %664 = vmatprep.subr.bf16.mxu0 0
    %665 = vmatpush1.bf16.msra.mxu0 0
    %666 = vmatprep.subr.bf16.mxu0 0
    %667 = vmatpush1.bf16.msra.mxu0 0
    %668 = vmatprep.subr.bf16.mxu0 0
    %669 = vmatpush1.bf16.msra.mxu0 0
    %670 = vmatprep.subr.bf16.mxu0 0
    %671 = vmatpush1.bf16.msra.mxu0 0
    %672 = vmatprep.subr.bf16.mxu0 0
    %673 = vmatpush1.bf16.msra.mxu0 0
    %674 = vmatprep.subr.bf16.mxu0 0
    %675 = vmatpush1.bf16.msra.mxu0 0
    %676 = vmatprep.subr.bf16.mxu0 0
    %677 = vmatpush1.bf16.msra.mxu0 0
    %678 = vmatprep.subr.bf16.mxu0 0
    %679 = vmatpush1.bf16.msra.mxu0 0
    %680 = vmatprep.subr.bf16.mxu0 0
    %681 = vmatpush1.bf16.msra.mxu0 0
    %682 = vmatprep.subr.bf16.mxu0 0
    %683 = vmatpush1.bf16.msra.mxu0 0
    %684 = vmatprep.subr.bf16.mxu0 0
    %685 = vmatpush1.bf16.msra.mxu0 0
    %686 = vmatprep.subr.bf16.mxu0 0
    %687 = vmatpush1.bf16.msra.mxu0 0
    %688 = vmatprep.subr.bf16.mxu0 0
    %689 = vmatpush1.bf16.msra.mxu0 0
    %690 = vmatprep.mubr.bf16.mxu0 0
    %691 = vmatmul.mubr.bf16.gmra.mrb[0].mxu0 %v653
    %v692 = vpop.f32.mrb[0].mxu0
    %v693 = vadd.f32 0.0, %v692
    %v694 = vpop.f32.mrb[0].mxu0
    %v695 = vpop.f32.mrb[0].mxu0
    %v696 = vpop.f32.mrb[0].mxu0
    %697 = vdwg.mxu0
    %698 = vrot.lane.b32.xlu0 %v575, 56
    %v699 = vpop.permute.xlu0 %698
    %v701 = vsel %vm302, %v649, 0
    %v704 = vsel %vm426, %v699, 0
    %706 = vmatprep.subr.bf16.mxu0 0
    %707 = vmatpush1.bf16.msra.mxu0 %v704
    %708 = vmatprep.subr.bf16.mxu0 0
    %709 = vmatpush1.bf16.msra.mxu0 0
    %710 = vmatprep.subr.bf16.mxu0 0
    %711 = vmatpush1.bf16.msra.mxu0 0
    %712 = vmatprep.subr.bf16.mxu0 0
    %713 = vmatpush1.bf16.msra.mxu0 0
    %714 = vmatprep.subr.bf16.mxu0 0
    %715 = vmatpush1.bf16.msra.mxu0 0
    %716 = vmatprep.subr.bf16.mxu0 0
    %717 = vmatpush1.bf16.msra.mxu0 0
    %718 = vmatprep.subr.bf16.mxu0 0
    %719 = vmatpush1.bf16.msra.mxu0 0
    %720 = vmatprep.subr.bf16.mxu0 0
    %721 = vmatpush1.bf16.msra.mxu0 0
    %722 = vmatprep.subr.bf16.mxu0 0
    %723 = vmatpush1.bf16.msra.mxu0 0
    %724 = vmatprep.subr.bf16.mxu0 0
    %725 = vmatpush1.bf16.msra.mxu0 0
    %726 = vmatprep.subr.bf16.mxu0 0
    %727 = vmatpush1.bf16.msra.mxu0 0
    %728 = vmatprep.subr.bf16.mxu0 0
    %729 = vmatpush1.bf16.msra.mxu0 0
    %730 = vmatprep.subr.bf16.mxu0 0
    %731 = vmatpush1.bf16.msra.mxu0 0
    %732 = vmatprep.subr.bf16.mxu0 0
    %733 = vmatpush1.bf16.msra.mxu0 0
    %734 = vmatprep.subr.bf16.mxu0 0
    %735 = vmatpush1.bf16.msra.mxu0 0
    %736 = vmatprep.subr.bf16.mxu0 0
    %737 = vmatpush1.bf16.msra.mxu0 0
    %738 = vmatprep.mubr.bf16.mxu0 0
    %739 = vmatmul.mubr.bf16.gmra.mrb[0].mxu0 %v701
    %v740 = vpop.f32.mrb[0].mxu0
    %v741 = vadd.f32 0.0, %v740
    %v742 = vpop.f32.mrb[0].mxu0
    %v743 = vpop.f32.mrb[0].mxu0
    %v744 = vpop.f32.mrb[0].mxu0
    %745 = vdwg.mxu0
    %v746 = vpack.c.bf16 %v741, %v693
    %748 = vrot.lane.b32.xlu0 %v746, 8
    %v749 = vpop.permute.xlu0 %748
    %vm751 = vcmask 130112
    %752 = vst.msk [vmem:[#allocation3] sm:$0xff] %vm751, %v749
    %v753 = vld [vmem:[#allocation2] sm:$0xff]
    %v755 = vunpack.c.l.b16 %v753
    %v756 = vunpack.c.h.b16 %v753
    %v757 = vpack.c.b16 %v755, %v755
    %758 = vrot.lane.b32.xlu0 %v757, 112
    %v759 = vpop.permute.xlu0 %758
    %760 = vrot.lane.b32.xlu0 %v757, 80
    %v761 = vpop.permute.xlu0 %760
    %v763 = vsel %vm302, %v759, 0
    %v766 = vsel %vm302, %v761, 0
    %768 = vmatprep.subr.bf16.mxu0 0
    %769 = vmatpush1.bf16.xpose.msra.mxu0 %v766
    %770 = vmatprep.subr.bf16.mxu0 0
    %771 = vmatpush1.bf16.xpose.msra.mxu0 0
    %772 = vmatprep.subr.bf16.mxu0 0
    %773 = vmatpush1.bf16.xpose.msra.mxu0 0
    %774 = vmatprep.subr.bf16.mxu0 0
    %775 = vmatpush1.bf16.xpose.msra.mxu0 0
    %776 = vmatprep.subr.bf16.mxu0 0
    %777 = vmatpush1.bf16.xpose.msra.mxu0 0
    %778 = vmatprep.subr.bf16.mxu0 0
    %779 = vmatpush1.bf16.xpose.msra.mxu0 0
    %780 = vmatprep.subr.bf16.mxu0 0
    %781 = vmatpush1.bf16.xpose.msra.mxu0 0
    %782 = vmatprep.subr.bf16.mxu0 0
    %783 = vmatpush1.bf16.xpose.msra.mxu0 0
    %784 = vmatprep.subr.bf16.mxu0 0
    %785 = vmatpush1.bf16.xpose.msra.mxu0 0
    %786 = vmatprep.subr.bf16.mxu0 0
    %787 = vmatpush1.bf16.xpose.msra.mxu0 0
    %788 = vmatprep.subr.bf16.mxu0 0
    %789 = vmatpush1.bf16.xpose.msra.mxu0 0
    %790 = vmatprep.subr.bf16.mxu0 0
    %791 = vmatpush1.bf16.xpose.msra.mxu0 0
    %792 = vmatprep.subr.bf16.mxu0 0
    %793 = vmatpush1.bf16.xpose.msra.mxu0 0
    %794 = vmatprep.subr.bf16.mxu0 0
    %795 = vmatpush1.bf16.xpose.msra.mxu0 0
    %796 = vmatprep.subr.bf16.mxu0 0
    %797 = vmatpush1.bf16.xpose.msra.mxu0 0
    %798 = vmatprep.subr.bf16.mxu0 0
    %799 = vmatpush1.bf16.xpose.msra.mxu0 0
    %800 = vmatprep.mubr.bf16.mxu0 0
    %801 = vmatmul.mubr.bf16.gmra.mrb[0].mxu0 %v763
    %v802 = vpop.f32.mrb[0].mxu0
    %v803 = vadd.f32 0.0, %v802
    %v804 = vpop.f32.mrb[0].mxu0
    %v805 = vpop.f32.mrb[0].mxu0
    %v806 = vpop.f32.mrb[0].mxu0
    %807 = vdwg.mxu0
    %v808 = vpack.c.b16 %v756, %v756
    %809 = vrot.lane.b32.xlu0 %v808, 112
    %v810 = vpop.permute.xlu0 %809
    %811 = vrot.lane.b32.xlu0 %v808, 80
    %v812 = vpop.permute.xlu0 %811
    %v814 = vsel %vm302, %v810, 0
    %v817 = vsel %vm302, %v812, 0
    %819 = vmatprep.subr.bf16.mxu0 0
    %820 = vmatpush1.bf16.xpose.msra.mxu0 %v817
    %821 = vmatprep.subr.bf16.mxu0 0
    %822 = vmatpush1.bf16.xpose.msra.mxu0 0
    %823 = vmatprep.subr.bf16.mxu0 0
    %824 = vmatpush1.bf16.xpose.msra.mxu0 0
    %825 = vmatprep.subr.bf16.mxu0 0
    %826 = vmatpush1.bf16.xpose.msra.mxu0 0
    %827 = vmatprep.subr.bf16.mxu0 0
    %828 = vmatpush1.bf16.xpose.msra.mxu0 0
    %829 = vmatprep.subr.bf16.mxu0 0
    %830 = vmatpush1.bf16.xpose.msra.mxu0 0
    %831 = vmatprep.subr.bf16.mxu0 0
    %832 = vmatpush1.bf16.xpose.msra.mxu0 0
    %833 = vmatprep.subr.bf16.mxu0 0
    %834 = vmatpush1.bf16.xpose.msra.mxu0 0
    %835 = vmatprep.subr.bf16.mxu0 0
    %836 = vmatpush1.bf16.xpose.msra.mxu0 0
    %837 = vmatprep.subr.bf16.mxu0 0
    %838 = vmatpush1.bf16.xpose.msra.mxu0 0
    %839 = vmatprep.subr.bf16.mxu0 0
    %840 = vmatpush1.bf16.xpose.msra.mxu0 0
    %841 = vmatprep.subr.bf16.mxu0 0
    %842 = vmatpush1.bf16.xpose.msra.mxu0 0
    %843 = vmatprep.subr.bf16.mxu0 0
    %844 = vmatpush1.bf16.xpose.msra.mxu0 0
    %845 = vmatprep.subr.bf16.mxu0 0
    %846 = vmatpush1.bf16.xpose.msra.mxu0 0
    %847 = vmatprep.subr.bf16.mxu0 0
    %848 = vmatpush1.bf16.xpose.msra.mxu0 0
    %849 = vmatprep.subr.bf16.mxu0 0
    %850 = vmatpush1.bf16.xpose.msra.mxu0 0
    %851 = vmatprep.mubr.bf16.mxu0 0
    %852 = vmatmul.mubr.bf16.gmra.mrb[0].mxu0 %v814
    %v853 = vpop.f32.mrb[0].mxu0
    %v854 = vadd.f32 0.0, %v853
    %v855 = vpop.f32.mrb[0].mxu0
    %v856 = vpop.f32.mrb[0].mxu0
    %v857 = vpop.f32.mrb[0].mxu0
    %858 = vdwg.mxu0
    %v859 = vsel %vm302, %v803, -inf
    %860 = vmax.xlane.f32.xlu0 %v859
    %v861 = vpop.xlane.xlu0 %860
    %v862 = vsel %vm302, %v854, -inf
    %863 = vmax.xlane.f32.xlu0 %v862
    %v864 = vpop.xlane.xlu0 %863
    %v865 = vsub.f32 %v803, %v861
    %v866 = vsub.f32 %v854, %v864
    %v867 = vmul.f32 %v865, 1.442695
    %v868 = vpow.pop %v867
    %v869 = vmul.f32 %v866, 1.442695
    %v870 = vpow.pop %v869
    %v871 = vsel %vm302, %v868, 0.0
    %872 = vadd.xlane.f32.xlu0 %v871
    %v873 = vpop.xlane.xlu0 %872
    %v874 = vsel %vm302, %v870, 0.0
    %875 = vadd.xlane.f32.xlu0 %v874
    %v876 = vpop.xlane.xlu0 %875
    %v877 = vrcp.pop %v873
    %v878 = vrcp.pop %v876
    %v879 = vmul.f32 %v868, %v877
    %v880 = vmul.f32 %v870, %v878
    %v881 = vpack.c.bf16 %v879, %v879
    %v882 = vpack.c.bf16 %v880, %v880
    %883 = vrot.lane.b32.xlu0 %v757, 48
    %v884 = vpop.permute.xlu0 %883
    %v886 = vsel %vm302, %v881, 0
    %v889 = vsel %vm426, %v884, 0
    %891 = vmatprep.subr.bf16.mxu0 0
    %892 = vmatpush1.bf16.msra.mxu0 %v889
    %893 = vmatprep.subr.bf16.mxu0 0
    %894 = vmatpush1.bf16.msra.mxu0 0
    %895 = vmatprep.subr.bf16.mxu0 0
    %896 = vmatpush1.bf16.msra.mxu0 0
    %897 = vmatprep.subr.bf16.mxu0 0
    %898 = vmatpush1.bf16.msra.mxu0 0
    %899 = vmatprep.subr.bf16.mxu0 0
    %900 = vmatpush1.bf16.msra.mxu0 0
    %901 = vmatprep.subr.bf16.mxu0 0
    %902 = vmatpush1.bf16.msra.mxu0 0
    %903 = vmatprep.subr.bf16.mxu0 0
    %904 = vmatpush1.bf16.msra.mxu0 0
    %905 = vmatprep.subr.bf16.mxu0 0
    %906 = vmatpush1.bf16.msra.mxu0 0
    %907 = vmatprep.subr.bf16.mxu0 0
    %908 = vmatpush1.bf16.msra.mxu0 0
    %909 = vmatprep.subr.bf16.mxu0 0
    %910 = vmatpush1.bf16.msra.mxu0 0
    %911 = vmatprep.subr.bf16.mxu0 0
    %912 = vmatpush1.bf16.msra.mxu0 0
    %913 = vmatprep.subr.bf16.mxu0 0
    %914 = vmatpush1.bf16.msra.mxu0 0
    %915 = vmatprep.subr.bf16.mxu0 0
    %916 = vmatpush1.bf16.msra.mxu0 0
    %917 = vmatprep.subr.bf16.mxu0 0
    %918 = vmatpush1.bf16.msra.mxu0 0
    %919 = vmatprep.subr.bf16.mxu0 0
    %920 = vmatpush1.bf16.msra.mxu0 0
    %921 = vmatprep.subr.bf16.mxu0 0
    %922 = vmatpush1.bf16.msra.mxu0 0
    %923 = vmatprep.mubr.bf16.mxu0 0
    %924 = vmatmul.mubr.bf16.gmra.mrb[0].mxu0 %v886
    %v925 = vpop.f32.mrb[0].mxu0
    %v926 = vadd.f32 0.0, %v925
    %v927 = vpop.f32.mrb[0].mxu0
    %v928 = vpop.f32.mrb[0].mxu0
    %v929 = vpop.f32.mrb[0].mxu0
    %930 = vdwg.mxu0
    %931 = vrot.lane.b32.xlu0 %v808, 48
    %v932 = vpop.permute.xlu0 %931
    %v934 = vsel %vm302, %v882, 0
    %v937 = vsel %vm426, %v932, 0
    %939 = vmatprep.subr.bf16.mxu0 0
    %940 = vmatpush1.bf16.msra.mxu0 %v937
    %941 = vmatprep.subr.bf16.mxu0 0
    %942 = vmatpush1.bf16.msra.mxu0 0
    %943 = vmatprep.subr.bf16.mxu0 0
    %944 = vmatpush1.bf16.msra.mxu0 0
    %945 = vmatprep.subr.bf16.mxu0 0
    %946 = vmatpush1.bf16.msra.mxu0 0
    %947 = vmatprep.subr.bf16.mxu0 0
    %948 = vmatpush1.bf16.msra.mxu0 0
    %949 = vmatprep.subr.bf16.mxu0 0
    %950 = vmatpush1.bf16.msra.mxu0 0
    %951 = vmatprep.subr.bf16.mxu0 0
    %952 = vmatpush1.bf16.msra.mxu0 0
    %953 = vmatprep.subr.bf16.mxu0 0
    %954 = vmatpush1.bf16.msra.mxu0 0
    %955 = vmatprep.subr.bf16.mxu0 0
    %956 = vmatpush1.bf16.msra.mxu0 0
    %957 = vmatprep.subr.bf16.mxu0 0
    %958 = vmatpush1.bf16.msra.mxu0 0
    %959 = vmatprep.subr.bf16.mxu0 0
    %960 = vmatpush1.bf16.msra.mxu0 0
    %961 = vmatprep.subr.bf16.mxu0 0
    %962 = vmatpush1.bf16.msra.mxu0 0
    %963 = vmatprep.subr.bf16.mxu0 0
    %964 = vmatpush1.bf16.msra.mxu0 0
    %965 = vmatprep.subr.bf16.mxu0 0
    %966 = vmatpush1.bf16.msra.mxu0 0
    %967 = vmatprep.subr.bf16.mxu0 0
    %968 = vmatpush1.bf16.msra.mxu0 0
    %969 = vmatprep.subr.bf16.mxu0 0
    %970 = vmatpush1.bf16.msra.mxu0 0
    %971 = vmatprep.mubr.bf16.mxu0 0
    %972 = vmatmul.mubr.bf16.gmra.mrb[0].mxu0 %v934
    %v973 = vpop.f32.mrb[0].mxu0
    %v974 = vadd.f32 0.0, %v973
    %v975 = vpop.f32.mrb[0].mxu0
    %v976 = vpop.f32.mrb[0].mxu0
    %v977 = vpop.f32.mrb[0].mxu0
    %978 = vdwg.mxu0
    %v979 = vpack.c.bf16 %v974, %v926
    %981 = vrot.lane.b32.xlu0 %v979, 16
    %v982 = vpop.permute.xlu0 %981
    %vm984 = vcmask 195712
    %985 = vst.msk [vmem:[#allocation3] sm:$0xff] %vm984, %v982
    %v986 = vld [vmem:[#allocation2] sm:$0xff]
    %v988 = vunpack.c.l.b16 %v986
    %v989 = vunpack.c.h.b16 %v986
    %v990 = vpack.c.b16 %v988, %v988
    %991 = vrot.lane.b32.xlu0 %v990, 104
    %v992 = vpop.permute.xlu0 %991
    %993 = vrot.lane.b32.xlu0 %v990, 72
    %v994 = vpop.permute.xlu0 %993
    %v996 = vsel %vm302, %v992, 0
    %v999 = vsel %vm302, %v994, 0
    %1001 = vmatprep.subr.bf16.mxu0 0
    %1002 = vmatpush1.bf16.xpose.msra.mxu0 %v999
    %1003 = vmatprep.subr.bf16.mxu0 0
    %1004 = vmatpush1.bf16.xpose.msra.mxu0 0
    %1005 = vmatprep.subr.bf16.mxu0 0
    %1006 = vmatpush1.bf16.xpose.msra.mxu0 0
    %1007 = vmatprep.subr.bf16.mxu0 0
    %1008 = vmatpush1.bf16.xpose.msra.mxu0 0
    %1009 = vmatprep.subr.bf16.mxu0 0
    %1010 = vmatpush1.bf16.xpose.msra.mxu0 0
    %1011 = vmatprep.subr.bf16.mxu0 0
    %1012 = vmatpush1.bf16.xpose.msra.mxu0 0
    %1013 = vmatprep.subr.bf16.mxu0 0
    %1014 = vmatpush1.bf16.xpose.msra.mxu0 0
    %1015 = vmatprep.subr.bf16.mxu0 0
    %1016 = vmatpush1.bf16.xpose.msra.mxu0 0
    %1017 = vmatprep.subr.bf16.mxu0 0
    %1018 = vmatpush1.bf16.xpose.msra.mxu0 0
    %1019 = vmatprep.subr.bf16.mxu0 0
    %1020 = vmatpush1.bf16.xpose.msra.mxu0 0
    %1021 = vmatprep.subr.bf16.mxu0 0
    %1022 = vmatpush1.bf16.xpose.msra.mxu0 0
    %1023 = vmatprep.subr.bf16.mxu0 0
    %1024 = vmatpush1.bf16.xpose.msra.mxu0 0
    %1025 = vmatprep.subr.bf16.mxu0 0
    %1026 = vmatpush1.bf16.xpose.msra.mxu0 0
    %1027 = vmatprep.subr.bf16.mxu0 0
    %1028 = vmatpush1.bf16.xpose.msra.mxu0 0
    %1029 = vmatprep.subr.bf16.mxu0 0
    %1030 = vmatpush1.bf16.xpose.msra.mxu0 0
    %1031 = vmatprep.subr.bf16.mxu0 0
    %1032 = vmatpush1.bf16.xpose.msra.mxu0 0
    %1033 = vmatprep.mubr.bf16.mxu0 0
    %1034 = vmatmul.mubr.bf16.gmra.mrb[0].mxu0 %v996
    %v1035 = vpop.f32.mrb[0].mxu0
    %v1036 = vadd.f32 0.0, %v1035
    %v1037 = vpop.f32.mrb[0].mxu0
    %v1038 = vpop.f32.mrb[0].mxu0
    %v1039 = vpop.f32.mrb[0].mxu0
    %1040 = vdwg.mxu0
    %v1041 = vpack.c.b16 %v989, %v989
    %1042 = vrot.lane.b32.xlu0 %v1041, 104
    %v1043 = vpop.permute.xlu0 %1042
    %1044 = vrot.lane.b32.xlu0 %v1041, 72
    %v1045 = vpop.permute.xlu0 %1044
    %v1047 = vsel %vm302, %v1043, 0
    %v1050 = vsel %vm302, %v1045, 0
    %1052 = vmatprep.subr.bf16.mxu0 0
    %1053 = vmatpush1.bf16.xpose.msra.mxu0 %v1050
    %1054 = vmatprep.subr.bf16.mxu0 0
    %1055 = vmatpush1.bf16.xpose.msra.mxu0 0
    %1056 = vmatprep.subr.bf16.mxu0 0
    %1057 = vmatpush1.bf16.xpose.msra.mxu0 0
    %1058 = vmatprep.subr.bf16.mxu0 0
    %1059 = vmatpush1.bf16.xpose.msra.mxu0 0
    %1060 = vmatprep.subr.bf16.mxu0 0
    %1061 = vmatpush1.bf16.xpose.msra.mxu0 0
    %1062 = vmatprep.subr.bf16.mxu0 0
    %1063 = vmatpush1.bf16.xpose.msra.mxu0 0
    %1064 = vmatprep.subr.bf16.mxu0 0
    %1065 = vmatpush1.bf16.xpose.msra.mxu0 0
    %1066 = vmatprep.subr.bf16.mxu0 0
    %1067 = vmatpush1.bf16.xpose.msra.mxu0 0
    %1068 = vmatprep.subr.bf16.mxu0 0
    %1069 = vmatpush1.bf16.xpose.msra.mxu0 0
    %1070 = vmatprep.subr.bf16.mxu0 0
    %1071 = vmatpush1.bf16.xpose.msra.mxu0 0
    %1072 = vmatprep.subr.bf16.mxu0 0
    %1073 = vmatpush1.bf16.xpose.msra.mxu0 0
    %1074 = vmatprep.subr.bf16.mxu0 0
    %1075 = vmatpush1.bf16.xpose.msra.mxu0 0
    %1076 = vmatprep.subr.bf16.mxu0 0
    %1077 = vmatpush1.bf16.xpose.msra.mxu0 0
    %1078 = vmatprep.subr.bf16.mxu0 0
    %1079 = vmatpush1.bf16.xpose.msra.mxu0 0
    %1080 = vmatprep.subr.bf16.mxu0 0
    %1081 = vmatpush1.bf16.xpose.msra.mxu0 0
    %1082 = vmatprep.subr.bf16.mxu0 0
    %1083 = vmatpush1.bf16.xpose.msra.mxu0 0
    %1084 = vmatprep.mubr.bf16.mxu0 0
    %1085 = vmatmul.mubr.bf16.gmra.mrb[0].mxu0 %v1047
    %v1086 = vpop.f32.mrb[0].mxu0
    %v1087 = vadd.f32 0.0, %v1086
    %v1088 = vpop.f32.mrb[0].mxu0
    %v1089 = vpop.f32.mrb[0].mxu0
    %v1090 = vpop.f32.mrb[0].mxu0
    %1091 = vdwg.mxu0
    %v1092 = vsel %vm302, %v1036, -inf
    %1093 = vmax.xlane.f32.xlu0 %v1092
    %v1094 = vpop.xlane.xlu0 %1093
    %v1095 = vsel %vm302, %v1087, -inf
    %1096 = vmax.xlane.f32.xlu0 %v1095
    %v1097 = vpop.xlane.xlu0 %1096
    %v1098 = vsub.f32 %v1036, %v1094
    %v1099 = vsub.f32 %v1087, %v1097
    %v1100 = vmul.f32 %v1098, 1.442695
    %v1101 = vpow.pop %v1100
    %v1102 = vmul.f32 %v1099, 1.442695
    %v1103 = vpow.pop %v1102
    %v1104 = vsel %vm302, %v1101, 0.0
    %1105 = vadd.xlane.f32.xlu0 %v1104
    %v1106 = vpop.xlane.xlu0 %1105
    %v1107 = vsel %vm302, %v1103, 0.0
    %1108 = vadd.xlane.f32.xlu0 %v1107
    %v1109 = vpop.xlane.xlu0 %1108
    %v1110 = vrcp.pop %v1106
    %v1111 = vrcp.pop %v1109
    %v1112 = vmul.f32 %v1101, %v1110
    %v1113 = vmul.f32 %v1103, %v1111
    %v1114 = vpack.c.bf16 %v1112, %v1112
    %v1115 = vpack.c.bf16 %v1113, %v1113
    %1116 = vrot.lane.b32.xlu0 %v990, 40
    %v1117 = vpop.permute.xlu0 %1116
    %v1119 = vsel %vm302, %v1114, 0
    %v1122 = vsel %vm426, %v1117, 0
    %1124 = vmatprep.subr.bf16.mxu0 0
    %1125 = vmatpush1.bf16.msra.mxu0 %v1122
    %1126 = vmatprep.subr.bf16.mxu0 0
    %1127 = vmatpush1.bf16.msra.mxu0 0
    %1128 = vmatprep.subr.bf16.mxu0 0
    %1129 = vmatpush1.bf16.msra.mxu0 0
    %1130 = vmatprep.subr.bf16.mxu0 0
    %1131 = vmatpush1.bf16.msra.mxu0 0
    %1132 = vmatprep.subr.bf16.mxu0 0
    %1133 = vmatpush1.bf16.msra.mxu0 0
    %1134 = vmatprep.subr.bf16.mxu0 0
    %1135 = vmatpush1.bf16.msra.mxu0 0
    %1136 = vmatprep.subr.bf16.mxu0 0
    %1137 = vmatpush1.bf16.msra.mxu0 0
    %1138 = vmatprep.subr.bf16.mxu0 0
    %1139 = vmatpush1.bf16.msra.mxu0 0
    %1140 = vmatprep.subr.bf16.mxu0 0
    %1141 = vmatpush1.bf16.msra.mxu0 0
    %1142 = vmatprep.subr.bf16.mxu0 0
    %1143 = vmatpush1.bf16.msra.mxu0 0
    %1144 = vmatprep.subr.bf16.mxu0 0
    %1145 = vmatpush1.bf16.msra.mxu0 0
    %1146 = vmatprep.subr.bf16.mxu0 0
    %1147 = vmatpush1.bf16.msra.mxu0 0
    %1148 = vmatprep.subr.bf16.mxu0 0
    %1149 = vmatpush1.bf16.msra.mxu0 0
    %1150 = vmatprep.subr.bf16.mxu0 0
    %1151 = vmatpush1.bf16.msra.mxu0 0
    %1152 = vmatprep.subr.bf16.mxu0 0
    %1153 = vmatpush1.bf16.msra.mxu0 0
    %1154 = vmatprep.subr.bf16.mxu0 0
    %1155 = vmatpush1.bf16.msra.mxu0 0
    %1156 = vmatprep.mubr.bf16.mxu0 0
    %1157 = vmatmul.mubr.bf16.gmra.mrb[0].mxu0 %v1119
    %v1158 = vpop.f32.mrb[0].mxu0
    %v1159 = vadd.f32 0.0, %v1158
    %v1160 = vpop.f32.mrb[0].mxu0
    %v1161 = vpop.f32.mrb[0].mxu0
    %v1162 = vpop.f32.mrb[0].mxu0
    %1163 = vdwg.mxu0
    %1164 = vrot.lane.b32.xlu0 %v1041, 40
    %v1165 = vpop.permute.xlu0 %1164
    %v1167 = vsel %vm302, %v1115, 0
    %v1170 = vsel %vm426, %v1165, 0
    %1172 = vmatprep.subr.bf16.mxu0 0
    %1173 = vmatpush1.bf16.msra.mxu0 %v1170
    %1174 = vmatprep.subr.bf16.mxu0 0
    %1175 = vmatpush1.bf16.msra.mxu0 0
    %1176 = vmatprep.subr.bf16.mxu0 0
    %1177 = vmatpush1.bf16.msra.mxu0 0
    %1178 = vmatprep.subr.bf16.mxu0 0
    %1179 = vmatpush1.bf16.msra.mxu0 0
    %1180 = vmatprep.subr.bf16.mxu0 0
    %1181 = vmatpush1.bf16.msra.mxu0 0
    %1182 = vmatprep.subr.bf16.mxu0 0
    %1183 = vmatpush1.bf16.msra.mxu0 0
    %1184 = vmatprep.subr.bf16.mxu0 0
    %1185 = vmatpush1.bf16.msra.mxu0 0
    %1186 = vmatprep.subr.bf16.mxu0 0
    %1187 = vmatpush1.bf16.msra.mxu0 0
    %1188 = vmatprep.subr.bf16.mxu0 0
    %1189 = vmatpush1.bf16.msra.mxu0 0
    %1190 = vmatprep.subr.bf16.mxu0 0
    %1191 = vmatpush1.bf16.msra.mxu0 0
    %1192 = vmatprep.subr.bf16.mxu0 0
    %1193 = vmatpush1.bf16.msra.mxu0 0
    %1194 = vmatprep.subr.bf16.mxu0 0
    %1195 = vmatpush1.bf16.msra.mxu0 0
    %1196 = vmatprep.subr.bf16.mxu0 0
    %1197 = vmatpush1.bf16.msra.mxu0 0
    %1198 = vmatprep.subr.bf16.mxu0 0
    %1199 = vmatpush1.bf16.msra.mxu0 0
    %1200 = vmatprep.subr.bf16.mxu0 0
    %1201 = vmatpush1.bf16.msra.mxu0 0
    %1202 = vmatprep.subr.bf16.mxu0 0
    %1203 = vmatpush1.bf16.msra.mxu0 0
    %1204 = vmatprep.mubr.bf16.mxu0 0
    %1205 = vmatmul.mubr.bf16.gmra.mrb[0].mxu0 %v1167
    %v1206 = vpop.f32.mrb[0].mxu0
    %v1207 = vadd.f32 0.0, %v1206
    %v1208 = vpop.f32.mrb[0].mxu0
    %v1209 = vpop.f32.mrb[0].mxu0
    %v1210 = vpop.f32.mrb[0].mxu0
    %1211 = vdwg.mxu0
    %v1212 = vpack.c.bf16 %v1207, %v1159
    %1214 = vrot.lane.b32.xlu0 %v1212, 24
    %v1215 = vpop.permute.xlu0 %1214
    %vm1217 = vcmask 261312
    %1218 = vst.msk [vmem:[#allocation3] sm:$0xff] %vm1217, %v1215
    %v1219 = vld [vmem:[#allocation3] sm:$0xff]
    %v1220 = vld [vmem:[%s5] sm:$0xf]
    %v1221 = vld [vmem:[%s5 + $0x4] sm:$0xf]
    %v1222 = vld [vmem:[%s5 + $0x8] sm:$0xf]
    %v1223 = vld [vmem:[%s5 + $0xc] sm:$0xf]
    %v1224 = vld [vmem:[%s6] sm:$0x1]
    %v1226 = vlaneseq
    %v1227 = vshrl.u32 %v1226, 7
    %v1228 = vsub.s32 0, %v1227
    %v1229 = vrot.slane %v1224, %v1228
    %v1235 = vunpack.c.l.b16 %v1220
    %v1236 = vunpack.c.l.b16 %v1221
    %v1237 = vunpack.c.l.b16 %v1222
    %v1238 = vunpack.c.l.b16 %v1223
    %v1239 = vpack.c.b16 %v1236, %v1235
    %v1240 = vpack.c.b16 %v1238, %v1237
    %v1244 = vsel %vm117, %v1219, 0
    %1246 = vmatprep.subr.bf16.mxu0 0
    %1247 = vmatpush1.bf16.msra.mxu0 %v1239
    %1248 = vmatprep.subr.bf16.mxu0 0
    %1249 = vmatpush1.bf16.msra.mxu0 %v1240
    %1250 = vmatprep.subr.bf16.mxu0 0
    %1251 = vmatpush1.bf16.msra.mxu0 0
    %1252 = vmatprep.subr.bf16.mxu0 0
    %1253 = vmatpush1.bf16.msra.mxu0 0
    %1254 = vmatprep.subr.bf16.mxu0 0
    %1255 = vmatpush1.bf16.msra.mxu0 0
    %1256 = vmatprep.subr.bf16.mxu0 0
    %1257 = vmatpush1.bf16.msra.mxu0 0
    %1258 = vmatprep.subr.bf16.mxu0 0
    %1259 = vmatpush1.bf16.msra.mxu0 0
    %1260 = vmatprep.subr.bf16.mxu0 0
    %1261 = vmatpush1.bf16.msra.mxu0 0
    %1262 = vmatprep.subr.bf16.mxu0 0
    %1263 = vmatpush1.bf16.msra.mxu0 0
    %1264 = vmatprep.subr.bf16.mxu0 0
    %1265 = vmatpush1.bf16.msra.mxu0 0
    %1266 = vmatprep.subr.bf16.mxu0 0
    %1267 = vmatpush1.bf16.msra.mxu0 0
    %1268 = vmatprep.subr.bf16.mxu0 0
    %1269 = vmatpush1.bf16.msra.mxu0 0
    %1270 = vmatprep.subr.bf16.mxu0 0
    %1271 = vmatpush1.bf16.msra.mxu0 0
    %1272 = vmatprep.subr.bf16.mxu0 0
    %1273 = vmatpush1.bf16.msra.mxu0 0
    %1274 = vmatprep.subr.bf16.mxu0 0
    %1275 = vmatpush1.bf16.msra.mxu0 0
    %1276 = vmatprep.subr.bf16.mxu0 0
    %1277 = vmatpush1.bf16.msra.mxu0 0
    %1278 = vmatprep.mubr.bf16.mxu0 0
    %1279 = vmatmul.mubr.bf16.gmra.mrb[0].mxu0 %v1244
    %v1280 = vpop.f32.mrb[0].mxu0
    %v1281 = vadd.f32 %v1229, %v1280
    %v1282 = vpop.f32.mrb[0].mxu0
    %v1283 = vpop.f32.mrb[0].mxu0
    %v1284 = vadd.f32 %v1229, %v1283
    %v1285 = vpop.f32.mrb[0].mxu0
    %1286 = vdwg.mxu0
    %1287 = vst.msk [vmem:[#allocation12] sm:$0xff] %vm117, %v1281
    %1288 = vst.msk [vmem:[#allocation12 + $0x8] sm:$0xff] %vm117, %v1284
    // Predicated region
    $region46: #{tpu_custom_call.1} parent=1 // pred_check
      _
    $region47: #{tpu_custom_call.1} parent=1 // pred_check_branch
      %1290 = sbr.rel (0) target = $region49
    $region48: #{tpu_custom_call.1} parent=1 // pred_region
      %s1292 = ssub.s32 256, 256
      %1293 = vsyncadd [#allocation6], %s1292
      %s1294 = sshll.u32 [#allocation12], 4
      %s1295 = int_to_ptr.vmem [resolvable:$true] %s1294
      %1300 = dma.vmem_to_hbm [thread:$0]  %s1295, 256, %s7, [#allocation6], 128, 128, 8
    $region49: #{tpu_custom_call.1} parent=1 // pred_fallthru
      _
    // Predicated region
    $region50: #{tpu_custom_call.1} parent=1 // pred_check
      _
    $region51: #{tpu_custom_call.1} parent=1 // pred_check_branch
      %1302 = sbr.rel (0) target = $region53
    $region52: #{tpu_custom_call.1} parent=1 // pred_region
      %1303 = dma.done [#allocation6], 256
    $region53: #{tpu_custom_call.1} parent=1 // pred_fallthru
      _
    %1304 = vsyncpa [#allocation5], 1
    %1305 = vsyncpa [#allocation8], 1
    %1306 = vsyncpa [#allocation11], 1
    %1307 = vsyncpa [#allocation6], 1

</llo_original>
